<compile_context>
chip_gen: v7x
topology: tpu7x:2x2x1
jax: 0.10.0
libtpu: 0.0.40
codegen_flags: <defaults>
</compile_context>

<pallas_src>
import math

import jax
import jax.numpy as jnp
from jax.experimental import pallas as pl

# ----------------------------- model config ---------------------------------
VOCAB = 100
MAX_POS = 64
HIDDEN = 32
N_HEADS = 4
HEAD_DIM = HIDDEN // N_HEADS
FFN_DIM = 64
N_LAYERS = 2
NUM_LABELS = 4          # matches logits.view(-1, 4) in the reference module
LN_EPS = 1e-12          # BERT layer-norm epsilon


# ------------------------------ fused kernel ---------------------------------
def _layernorm(x, g, b):
    mean = jnp.mean(x, axis=-1, keepdims=True)
    var = jnp.mean(jnp.square(x - mean), axis=-1, keepdims=True)
    inv = jax.lax.rsqrt(var + LN_EPS)
    return (x - mean) * inv * g + b


def _qkt(q, k):
    # q @ k.T without materializing a transpose (contract last dims).
    return jax.lax.dot_general(q, k, (((1,), (1,)), ((), ())),
                               preferred_element_type=jnp.float32)


def bert_fused_kernel(x_ref, bias_ref, onehot_ref,
                      emb_ln_g_ref, emb_ln_b_ref,
                      qkv_w_ref, qkv_b_ref, o_w_ref, o_b_ref,
                      ln1_g_ref, ln1_b_ref,
                      ff1_w_ref, ff1_b_ref, ff2_w_ref, ff2_b_ref,
                      ln2_g_ref, ln2_b_ref,
                      cls_w_ref, cls_b_ref,
                      logits_ref, loss_ref):
    H, nH, dh = HIDDEN, N_HEADS, HEAD_DIM
    N = x_ref.shape[0]                      # B * S tokens
    scale = 1.0 / math.sqrt(dh)

    # ---- embedding layer-norm ----
    x = _layernorm(x_ref[...], emb_ln_g_ref[...], emb_ln_b_ref[...])   # (N, H)

    # ---- additive attention bias: 0 if same sequence & key unmasked,
    #      -10000 otherwise (cross-sequence scores vanish after softmax) ----
    bias2d = bias_ref[...]                                              # (N, N)

    # ---- encoder layers (statically unrolled, weights indexed by layer) ----
    for l in range(N_LAYERS):
        # fused QKV projection: (N, H) @ (H, 3H)
        qkv = jnp.dot(x, qkv_w_ref[l],
                      preferred_element_type=jnp.float32) + qkv_b_ref[l]
        q = qkv[:, 0 * H:1 * H] * scale
        k = qkv[:, 1 * H:2 * H]
        v = qkv[:, 2 * H:3 * H]
        o_w_l = o_w_ref[l]                                              # (H, H)

        # multi-head attention over the whole token slab; output projection
        # folded per head, so context never hits VMEM scratch.
        attn = jnp.zeros((N, H), jnp.float32)
        for h in range(nH):
            sl = slice(h * dh, (h + 1) * dh)
            s = _qkt(q[:, sl], k[:, sl]) + bias2d                       # (N, N)
            m = jnp.max(s, axis=-1, keepdims=True)
            p = jnp.exp(s - m)
            p = p * pl.reciprocal(jnp.sum(p, axis=-1, keepdims=True),
                                  approx=True)
            ctx_h = jnp.dot(p, v[:, sl],
                            preferred_element_type=jnp.float32)        # (N, dh)
            attn = attn + jnp.dot(ctx_h, o_w_l[sl, :],
                                  preferred_element_type=jnp.float32)  # (N, H)

        # residual + layer-norm (fused)
        x = _layernorm(x + attn + o_b_ref[l], ln1_g_ref[l], ln1_b_ref[l])

        # FFN (GELU) + residual + layer-norm (fused)
        # TODO(synk): HF BERT uses exact (erf) GELU; tanh approximation used here.
        h1 = jnp.dot(x, ff1_w_ref[l],
                     preferred_element_type=jnp.float32) + ff1_b_ref[l]
        h1 = jax.nn.gelu(h1, approximate=True)
        h2 = jnp.dot(h1, ff2_w_ref[l],
                     preferred_element_type=jnp.float32) + ff2_b_ref[l]
        x = _layernorm(x + h2, ln2_g_ref[l], ln2_b_ref[l])

    # ---- dropout(0.1) = identity in eval mode; classifier + CE + mean ----
    logits = jnp.dot(x, cls_w_ref[...],
                     preferred_element_type=jnp.float32) + cls_b_ref[...]
    logits_ref[...] = logits.astype(logits_ref.dtype)                  # (N, C)

    m = jnp.max(logits, axis=-1, keepdims=True)
    shifted = logits - m
    lse = jnp.log(jnp.sum(jnp.exp(shifted), axis=-1, keepdims=True))
    logprobs = shifted - lse                                           # (N, C)
    picked = jnp.sum(logprobs * onehot_ref[...], axis=-1, keepdims=True)
    # TODO(synk): CrossEntropyLoss ignore_index=-100 / padded-token masking
    # not modeled (all example labels are valid class ids here).
    loss_ref[...] = -(jnp.sum(picked, axis=0, keepdims=True)
                      * (1.0 / float(N)))                              # (1, 1)


# ------------------------------ wrapper ---------------------------------------
def bert_for_cut_forward(params, input_ids, attention_mask, labels=None):
    B, S = input_ids.shape
    N = B * S
    H, C = HIDDEN, NUM_LABELS

    # Embeddings (gather + adds in glue; everything after is one Pallas call).
    we = jnp.take(params["word_emb"], input_ids, axis=0)               # (B, S, H)
    pe = params["pos_emb"][:S][None, :, :]
    te = params["type_emb"][0][None, None, :]                          # token_type_ids = 0
    x = (we + pe + te).reshape(N, H).astype(jnp.float32)

    # Block-diagonal attention bias: allow attention only within the same
    # sequence and to unmasked key positions (BERT extended attention mask).
    keymask = attention_mask.reshape(1, N).astype(jnp.float32)         # (1, N)
    batch_id = jnp.repeat(jnp.arange(B, dtype=jnp.int32), S)           # (N,)
    same_seq = (batch_id[:, None] == batch_id[None, :]).astype(jnp.float32)
    attn_bias = (1.0 - same_seq * keymask) * -10000.0                  # (N, N)

    if labels is not None:
        onehot = jax.nn.one_hot(labels.reshape(-1), C, dtype=jnp.float32)
    else:
        onehot = jnp.zeros((N, C), jnp.float32)

    inputs = (x, attn_bias, onehot,
              params["emb_ln_g"], params["emb_ln_b"],
              params["qkv_w"], params["qkv_b"],
              params["o_w"], params["o_b"],
              params["ln1_g"], params["ln1_b"],
              params["ff1_w"], params["ff1_b"],
              params["ff2_w"], params["ff2_b"],
              params["ln2_g"], params["ln2_b"],
              params["cls_w"], params["cls_b"])

    logits, loss = pl.pallas_call(
        bert_fused_kernel,
        out_shape=(jax.ShapeDtypeStruct((N, C), jnp.float32),
                   jax.ShapeDtypeStruct((1, 1), jnp.float32)),
    )(*inputs)

    logits = logits.reshape(B, S, C)
    if labels is None:
        return None, logits
    return loss[0, 0], logits


# ------------------------------ parameter init -------------------------------
def init_params(key):
    keys = iter(jax.random.split(key, 64))

    def nrm(shape, scale=0.02):
        return jax.random.normal(next(keys), shape, jnp.float32) * scale

    L, H, F, C = N_LAYERS, HIDDEN, FFN_DIM, NUM_LABELS
    return dict(
        word_emb=nrm((VOCAB, H)),
        pos_emb=nrm((MAX_POS, H)),
        type_emb=nrm((2, H)),
        emb_ln_g=jnp.ones((1, H), jnp.float32),
        emb_ln_b=jnp.zeros((1, H), jnp.float32),
        # fused QKV weights: (L, H, 3H)
        qkv_w=nrm((L, H, 3 * H)),
        qkv_b=jnp.zeros((L, 1, 3 * H), jnp.float32),
        o_w=nrm((L, H, H)),
        o_b=jnp.zeros((L, 1, H), jnp.float32),
        ln1_g=jnp.ones((L, 1, H), jnp.float32),
        ln1_b=jnp.zeros((L, 1, H), jnp.float32),
        ff1_w=nrm((L, H, F)),
        ff1_b=jnp.zeros((L, 1, F), jnp.float32),
        ff2_w=nrm((L, F, H)),
        ff2_b=jnp.zeros((L, 1, H), jnp.float32),
        ln2_g=jnp.ones((L, 1, H), jnp.float32),
        ln2_b=jnp.zeros((L, 1, H), jnp.float32),
        cls_w=nrm((H, C)),
        cls_b=jnp.zeros((1, C), jnp.float32),
    )


# ----------------------------------- main ------------------------------------
if __name__ == "__main__":
    B, S = 2, 8
    key = jax.random.PRNGKey(0)
    kp, ki, kl = jax.random.split(key, 3)

    params = init_params(kp)
    input_ids = jax.random.randint(ki, (B, S), 0, VOCAB, dtype=jnp.int32)
    attention_mask = jnp.ones((B, S), jnp.int32).at[1, 6:].set(0)   # some padding
    labels = jax.random.randint(kl, (B, S), 0, NUM_LABELS, dtype=jnp.int32)

    fwd = jax.jit(bert_for_cut_forward)
    loss, logits = fwd(params, input_ids, attention_mask, labels)
    loss = jax.block_until_ready(loss)
    logits = jax.block_until_ready(logits)

    assert logits.shape == (B, S, NUM_LABELS)
    assert loss.shape == ()
    print("KERNEL_OK")
</pallas_src>

<mosaic_0001>
module attributes {stable_mosaic.version = 11 : i64} {
  func.func @bert_fused_kernel(%arg0: memref<16x32xf32, #tpu.memory_space<vmem>>, %arg1: memref<16x16xf32, #tpu.memory_space<vmem>>, %arg2: memref<16x4xf32, #tpu.memory_space<vmem>>, %arg3: memref<1x32xf32, #tpu.memory_space<vmem>>, %arg4: memref<1x32xf32, #tpu.memory_space<vmem>>, %arg5: memref<2x32x96xf32, #tpu.memory_space<vmem>>, %arg6: memref<2x1x96xf32, #tpu.memory_space<vmem>>, %arg7: memref<2x32x32xf32, #tpu.memory_space<vmem>>, %arg8: memref<2x1x32xf32, #tpu.memory_space<vmem>>, %arg9: memref<2x1x32xf32, #tpu.memory_space<vmem>>, %arg10: memref<2x1x32xf32, #tpu.memory_space<vmem>>, %arg11: memref<2x32x64xf32, #tpu.memory_space<vmem>>, %arg12: memref<2x1x64xf32, #tpu.memory_space<vmem>>, %arg13: memref<2x64x32xf32, #tpu.memory_space<vmem>>, %arg14: memref<2x1x32xf32, #tpu.memory_space<vmem>>, %arg15: memref<2x1x32xf32, #tpu.memory_space<vmem>>, %arg16: memref<2x1x32xf32, #tpu.memory_space<vmem>>, %arg17: memref<32x4xf32, #tpu.memory_space<vmem>>, %arg18: memref<1x4xf32, #tpu.memory_space<vmem>>, %arg19: memref<16x4xf32, #tpu.memory_space<vmem>>, %arg20: memref<1x1xf32, #tpu.memory_space<vmem>>) attributes {dimension_semantics = [], scalar_prefetch = 0 : i64, scratch_operands = 0 : i64, tpu.core_type = #tpu.core_type<tc>} {
    %c0 = arith.constant 0 : index
    %c0_0 = arith.constant 0 : index
    %0 = vector.load %arg0[%c0, %c0_0] : memref<16x32xf32, #tpu.memory_space<vmem>>, vector<16x32xf32>
    %c0_1 = arith.constant 0 : index
    %c0_2 = arith.constant 0 : index
    %1 = vector.load %arg3[%c0_1, %c0_2] : memref<1x32xf32, #tpu.memory_space<vmem>>, vector<1x32xf32>
    %c0_3 = arith.constant 0 : index
    %c0_4 = arith.constant 0 : index
    %2 = vector.load %arg4[%c0_3, %c0_4] : memref<1x32xf32, #tpu.memory_space<vmem>>, vector<1x32xf32>
    %cst = arith.constant dense<0.000000e+00> : vector<16xf32>
    %3 = vector.multi_reduction <add>, %0, %cst [1] : vector<16x32xf32> to vector<16xf32>
    %4 = vector.shape_cast %3 : vector<16xf32> to vector<16x1xf32>
    %cst_5 = arith.constant 3.200000e+01 : f32
    %5 = vector.broadcast %cst_5 : f32 to vector<16x1xf32>
    %6 = arith.divf %4, %5 : vector<16x1xf32>
    %7 = vector.broadcast %6 : vector<16x1xf32> to vector<16x32xf32>
    %8 = arith.subf %0, %7 : vector<16x32xf32>
    %9 = arith.mulf %8, %8 : vector<16x32xf32>
    %cst_6 = arith.constant dense<0.000000e+00> : vector<16xf32>
    %10 = vector.multi_reduction <add>, %9, %cst_6 [1] : vector<16x32xf32> to vector<16xf32>
    %11 = vector.shape_cast %10 : vector<16xf32> to vector<16x1xf32>
    %cst_7 = arith.constant 3.200000e+01 : f32
    %12 = vector.broadcast %cst_7 : f32 to vector<16x1xf32>
    %13 = arith.divf %11, %12 : vector<16x1xf32>
    %cst_8 = arith.constant 9.99999996E-13 : f32
    %14 = vector.broadcast %cst_8 : f32 to vector<16x1xf32>
    %15 = arith.addf %13, %14 : vector<16x1xf32>
    %16 = math.rsqrt %15 : vector<16x1xf32>
    %17 = vector.broadcast %6 : vector<16x1xf32> to vector<16x32xf32>
    %18 = arith.subf %0, %17 : vector<16x32xf32>
    %19 = vector.broadcast %16 : vector<16x1xf32> to vector<16x32xf32>
    %20 = arith.mulf %18, %19 : vector<16x32xf32>
    %21 = vector.broadcast %1 : vector<1x32xf32> to vector<16x32xf32>
    %22 = arith.mulf %20, %21 : vector<16x32xf32>
    %23 = vector.broadcast %2 : vector<1x32xf32> to vector<16x32xf32>
    %24 = arith.addf %22, %23 : vector<16x32xf32>
    %c0_9 = arith.constant 0 : index
    %c0_10 = arith.constant 0 : index
    %25 = vector.load %arg1[%c0_9, %c0_10] : memref<16x16xf32, #tpu.memory_space<vmem>>, vector<16x16xf32>
    %c0_11 = arith.constant 0 : index
    %c0_12 = arith.constant 0 : index
    %c0_13 = arith.constant 0 : index
    %26 = vector.load %arg5[%c0_11, %c0_12, %c0_13] : memref<2x32x96xf32, #tpu.memory_space<vmem>>, vector<1x32x96xf32>
    %27 = vector.shape_cast %26 : vector<1x32x96xf32> to vector<32x96xf32>
    %cst_14 = arith.constant dense<0.000000e+00> : vector<16x96xf32>
    %28 = tpu.matmul %24, %27, %cst_14 {dimension_numbers = #tpu.dot_dimension_numbers<[1], [0], [0], [1], [0, 0, 1, 1], [], []>} : vector<16x32xf32>, vector<32x96xf32>, vector<16x96xf32> -> vector<16x96xf32>
    %c0_15 = arith.constant 0 : index
    %c0_16 = arith.constant 0 : index
    %c0_17 = arith.constant 0 : index
    %29 = vector.load %arg6[%c0_15, %c0_16, %c0_17] : memref<2x1x96xf32, #tpu.memory_space<vmem>>, vector<1x1x96xf32>
    %30 = vector.shape_cast %29 : vector<1x1x96xf32> to vector<1x96xf32>
    %31 = vector.broadcast %30 : vector<1x96xf32> to vector<16x96xf32>
    %32 = arith.addf %28, %31 : vector<16x96xf32>
    %33 = vector.extract_strided_slice %32 {offsets = [0, 0], sizes = [16, 32], strides = [1, 1]} : vector<16x96xf32> to vector<16x32xf32>
    %cst_18 = arith.constant 0.353553385 : f32
    %34 = vector.broadcast %cst_18 : f32 to vector<16x32xf32>
    %35 = arith.mulf %33, %34 : vector<16x32xf32>
    %36 = vector.extract_strided_slice %32 {offsets = [0, 32], sizes = [16, 32], strides = [1, 1]} : vector<16x96xf32> to vector<16x32xf32>
    %37 = vector.extract_strided_slice %32 {offsets = [0, 64], sizes = [16, 32], strides = [1, 1]} : vector<16x96xf32> to vector<16x32xf32>
    %c0_19 = arith.constant 0 : index
    %c0_20 = arith.constant 0 : index
    %c0_21 = arith.constant 0 : index
    %38 = vector.load %arg7[%c0_19, %c0_20, %c0_21] : memref<2x32x32xf32, #tpu.memory_space<vmem>>, vector<1x32x32xf32>
    %39 = vector.shape_cast %38 : vector<1x32x32xf32> to vector<32x32xf32>
    %cst_22 = arith.constant 0.000000e+00 : f32
    %40 = vector.broadcast %cst_22 : f32 to vector<16x32xf32>
    %41 = vector.extract_strided_slice %35 {offsets = [0, 0], sizes = [16, 8], strides = [1, 1]} : vector<16x32xf32> to vector<16x8xf32>
    %42 = vector.extract_strided_slice %36 {offsets = [0, 0], sizes = [16, 8], strides = [1, 1]} : vector<16x32xf32> to vector<16x8xf32>
    %cst_23 = arith.constant dense<0.000000e+00> : vector<16x16xf32>
    %43 = tpu.matmul %41, %42, %cst_23 {dimension_numbers = #tpu.dot_dimension_numbers<[1], [1], [0], [0], [0, 0, 1, 0], [], []>} : vector<16x8xf32>, vector<16x8xf32>, vector<16x16xf32> -> vector<16x16xf32>
    %44 = arith.addf %43, %25 : vector<16x16xf32>
    %cst_24 = arith.constant dense<0xFF800000> : vector<16xf32>
    %45 = vector.multi_reduction <maximumf>, %44, %cst_24 [1] : vector<16x16xf32> to vector<16xf32>
    %46 = vector.shape_cast %45 : vector<16xf32> to vector<16x1xf32>
    %47 = vector.broadcast %46 : vector<16x1xf32> to vector<16x16xf32>
    %48 = arith.subf %44, %47 : vector<16x16xf32>
    %49 = math.exp %48 : vector<16x16xf32>
    %cst_25 = arith.constant dense<0.000000e+00> : vector<16xf32>
    %50 = vector.multi_reduction <add>, %49, %cst_25 [1] : vector<16x16xf32> to vector<16xf32>
    %51 = vector.shape_cast %50 : vector<16xf32> to vector<16x1xf32>
    %52 = tpu.reciprocal %51 {approx = true} : vector<16x1xf32> -> vector<16x1xf32>
    %53 = vector.broadcast %52 : vector<16x1xf32> to vector<16x16xf32>
    %54 = arith.mulf %49, %53 : vector<16x16xf32>
    %55 = vector.extract_strided_slice %37 {offsets = [0, 0], sizes = [16, 8], strides = [1, 1]} : vector<16x32xf32> to vector<16x8xf32>
    %cst_26 = arith.constant dense<0.000000e+00> : vector<16x8xf32>
    %56 = tpu.matmul %54, %55, %cst_26 {dimension_numbers = #tpu.dot_dimension_numbers<[1], [0], [0], [1], [0, 0, 1, 1], [], []>} : vector<16x16xf32>, vector<16x8xf32>, vector<16x8xf32> -> vector<16x8xf32>
    %57 = vector.extract_strided_slice %39 {offsets = [0, 0], sizes = [8, 32], strides = [1, 1]} : vector<32x32xf32> to vector<8x32xf32>
    %cst_27 = arith.constant dense<0.000000e+00> : vector<16x32xf32>
    %58 = tpu.matmul %56, %57, %cst_27 {dimension_numbers = #tpu.dot_dimension_numbers<[1], [0], [0], [1], [0, 0, 1, 1], [], []>} : vector<16x8xf32>, vector<8x32xf32>, vector<16x32xf32> -> vector<16x32xf32>
    %59 = arith.addf %40, %58 : vector<16x32xf32>
    %60 = vector.extract_strided_slice %35 {offsets = [0, 8], sizes = [16, 8], strides = [1, 1]} : vector<16x32xf32> to vector<16x8xf32>
    %61 = vector.extract_strided_slice %36 {offsets = [0, 8], sizes = [16, 8], strides = [1, 1]} : vector<16x32xf32> to vector<16x8xf32>
    %cst_28 = arith.constant dense<0.000000e+00> : vector<16x16xf32>
    %62 = tpu.matmul %60, %61, %cst_28 {dimension_numbers = #tpu.dot_dimension_numbers<[1], [1], [0], [0], [0, 0, 1, 0], [], []>} : vector<16x8xf32>, vector<16x8xf32>, vector<16x16xf32> -> vector<16x16xf32>
    %63 = arith.addf %62, %25 : vector<16x16xf32>
    %cst_29 = arith.constant dense<0xFF800000> : vector<16xf32>
    %64 = vector.multi_reduction <maximumf>, %63, %cst_29 [1] : vector<16x16xf32> to vector<16xf32>
    %65 = vector.shape_cast %64 : vector<16xf32> to vector<16x1xf32>
    %66 = vector.broadcast %65 : vector<16x1xf32> to vector<16x16xf32>
    %67 = arith.subf %63, %66 : vector<16x16xf32>
    %68 = math.exp %67 : vector<16x16xf32>
    %cst_30 = arith.constant dense<0.000000e+00> : vector<16xf32>
    %69 = vector.multi_reduction <add>, %68, %cst_30 [1] : vector<16x16xf32> to vector<16xf32>
    %70 = vector.shape_cast %69 : vector<16xf32> to vector<16x1xf32>
    %71 = tpu.reciprocal %70 {approx = true} : vector<16x1xf32> -> vector<16x1xf32>
    %72 = vector.broadcast %71 : vector<16x1xf32> to vector<16x16xf32>
    %73 = arith.mulf %68, %72 : vector<16x16xf32>
    %74 = vector.extract_strided_slice %37 {offsets = [0, 8], sizes = [16, 8], strides = [1, 1]} : vector<16x32xf32> to vector<16x8xf32>
    %cst_31 = arith.constant dense<0.000000e+00> : vector<16x8xf32>
    %75 = tpu.matmul %73, %74, %cst_31 {dimension_numbers = #tpu.dot_dimension_numbers<[1], [0], [0], [1], [0, 0, 1, 1], [], []>} : vector<16x16xf32>, vector<16x8xf32>, vector<16x8xf32> -> vector<16x8xf32>
    %76 = vector.extract_strided_slice %39 {offsets = [8, 0], sizes = [8, 32], strides = [1, 1]} : vector<32x32xf32> to vector<8x32xf32>
    %cst_32 = arith.constant dense<0.000000e+00> : vector<16x32xf32>
    %77 = tpu.matmul %75, %76, %cst_32 {dimension_numbers = #tpu.dot_dimension_numbers<[1], [0], [0], [1], [0, 0, 1, 1], [], []>} : vector<16x8xf32>, vector<8x32xf32>, vector<16x32xf32> -> vector<16x32xf32>
    %78 = arith.addf %59, %77 : vector<16x32xf32>
    %79 = vector.extract_strided_slice %35 {offsets = [0, 16], sizes = [16, 8], strides = [1, 1]} : vector<16x32xf32> to vector<16x8xf32>
    %80 = vector.extract_strided_slice %36 {offsets = [0, 16], sizes = [16, 8], strides = [1, 1]} : vector<16x32xf32> to vector<16x8xf32>
    %cst_33 = arith.constant dense<0.000000e+00> : vector<16x16xf32>
    %81 = tpu.matmul %79, %80, %cst_33 {dimension_numbers = #tpu.dot_dimension_numbers<[1], [1], [0], [0], [0, 0, 1, 0], [], []>} : vector<16x8xf32>, vector<16x8xf32>, vector<16x16xf32> -> vector<16x16xf32>
    %82 = arith.addf %81, %25 : vector<16x16xf32>
    %cst_34 = arith.constant dense<0xFF800000> : vector<16xf32>
    %83 = vector.multi_reduction <maximumf>, %82, %cst_34 [1] : vector<16x16xf32> to vector<16xf32>
    %84 = vector.shape_cast %83 : vector<16xf32> to vector<16x1xf32>
    %85 = vector.broadcast %84 : vector<16x1xf32> to vector<16x16xf32>
    %86 = arith.subf %82, %85 : vector<16x16xf32>
    %87 = math.exp %86 : vector<16x16xf32>
    %cst_35 = arith.constant dense<0.000000e+00> : vector<16xf32>
    %88 = vector.multi_reduction <add>, %87, %cst_35 [1] : vector<16x16xf32> to vector<16xf32>
    %89 = vector.shape_cast %88 : vector<16xf32> to vector<16x1xf32>
    %90 = tpu.reciprocal %89 {approx = true} : vector<16x1xf32> -> vector<16x1xf32>
    %91 = vector.broadcast %90 : vector<16x1xf32> to vector<16x16xf32>
    %92 = arith.mulf %87, %91 : vector<16x16xf32>
    %93 = vector.extract_strided_slice %37 {offsets = [0, 16], sizes = [16, 8], strides = [1, 1]} : vector<16x32xf32> to vector<16x8xf32>
    %cst_36 = arith.constant dense<0.000000e+00> : vector<16x8xf32>
    %94 = tpu.matmul %92, %93, %cst_36 {dimension_numbers = #tpu.dot_dimension_numbers<[1], [0], [0], [1], [0, 0, 1, 1], [], []>} : vector<16x16xf32>, vector<16x8xf32>, vector<16x8xf32> -> vector<16x8xf32>
    %95 = vector.extract_strided_slice %39 {offsets = [16, 0], sizes = [8, 32], strides = [1, 1]} : vector<32x32xf32> to vector<8x32xf32>
    %cst_37 = arith.constant dense<0.000000e+00> : vector<16x32xf32>
    %96 = tpu.matmul %94, %95, %cst_37 {dimension_numbers = #tpu.dot_dimension_numbers<[1], [0], [0], [1], [0, 0, 1, 1], [], []>} : vector<16x8xf32>, vector<8x32xf32>, vector<16x32xf32> -> vector<16x32xf32>
    %97 = arith.addf %78, %96 : vector<16x32xf32>
    %98 = vector.extract_strided_slice %35 {offsets = [0, 24], sizes = [16, 8], strides = [1, 1]} : vector<16x32xf32> to vector<16x8xf32>
    %99 = vector.extract_strided_slice %36 {offsets = [0, 24], sizes = [16, 8], strides = [1, 1]} : vector<16x32xf32> to vector<16x8xf32>
    %cst_38 = arith.constant dense<0.000000e+00> : vector<16x16xf32>
    %100 = tpu.matmul %98, %99, %cst_38 {dimension_numbers = #tpu.dot_dimension_numbers<[1], [1], [0], [0], [0, 0, 1, 0], [], []>} : vector<16x8xf32>, vector<16x8xf32>, vector<16x16xf32> -> vector<16x16xf32>
    %101 = arith.addf %100, %25 : vector<16x16xf32>
    %cst_39 = arith.constant dense<0xFF800000> : vector<16xf32>
    %102 = vector.multi_reduction <maximumf>, %101, %cst_39 [1] : vector<16x16xf32> to vector<16xf32>
    %103 = vector.shape_cast %102 : vector<16xf32> to vector<16x1xf32>
    %104 = vector.broadcast %103 : vector<16x1xf32> to vector<16x16xf32>
    %105 = arith.subf %101, %104 : vector<16x16xf32>
    %106 = math.exp %105 : vector<16x16xf32>
    %cst_40 = arith.constant dense<0.000000e+00> : vector<16xf32>
    %107 = vector.multi_reduction <add>, %106, %cst_40 [1] : vector<16x16xf32> to vector<16xf32>
    %108 = vector.shape_cast %107 : vector<16xf32> to vector<16x1xf32>
    %109 = tpu.reciprocal %108 {approx = true} : vector<16x1xf32> -> vector<16x1xf32>
    %110 = vector.broadcast %109 : vector<16x1xf32> to vector<16x16xf32>
    %111 = arith.mulf %106, %110 : vector<16x16xf32>
    %112 = vector.extract_strided_slice %37 {offsets = [0, 24], sizes = [16, 8], strides = [1, 1]} : vector<16x32xf32> to vector<16x8xf32>
    %cst_41 = arith.constant dense<0.000000e+00> : vector<16x8xf32>
    %113 = tpu.matmul %111, %112, %cst_41 {dimension_numbers = #tpu.dot_dimension_numbers<[1], [0], [0], [1], [0, 0, 1, 1], [], []>} : vector<16x16xf32>, vector<16x8xf32>, vector<16x8xf32> -> vector<16x8xf32>
    %114 = vector.extract_strided_slice %39 {offsets = [24, 0], sizes = [8, 32], strides = [1, 1]} : vector<32x32xf32> to vector<8x32xf32>
    %cst_42 = arith.constant dense<0.000000e+00> : vector<16x32xf32>
    %115 = tpu.matmul %113, %114, %cst_42 {dimension_numbers = #tpu.dot_dimension_numbers<[1], [0], [0], [1], [0, 0, 1, 1], [], []>} : vector<16x8xf32>, vector<8x32xf32>, vector<16x32xf32> -> vector<16x32xf32>
    %116 = arith.addf %97, %115 : vector<16x32xf32>
    %117 = arith.addf %24, %116 : vector<16x32xf32>
    %c0_43 = arith.constant 0 : index
    %c0_44 = arith.constant 0 : index
    %c0_45 = arith.constant 0 : index
    %118 = vector.load %arg8[%c0_43, %c0_44, %c0_45] : memref<2x1x32xf32, #tpu.memory_space<vmem>>, vector<1x1x32xf32>
    %119 = vector.shape_cast %118 : vector<1x1x32xf32> to vector<1x32xf32>
    %120 = vector.broadcast %119 : vector<1x32xf32> to vector<16x32xf32>
    %121 = arith.addf %117, %120 : vector<16x32xf32>
    %c0_46 = arith.constant 0 : index
    %c0_47 = arith.constant 0 : index
    %c0_48 = arith.constant 0 : index
    %122 = vector.load %arg9[%c0_46, %c0_47, %c0_48] : memref<2x1x32xf32, #tpu.memory_space<vmem>>, vector<1x1x32xf32>
    %123 = vector.shape_cast %122 : vector<1x1x32xf32> to vector<1x32xf32>
    %c0_49 = arith.constant 0 : index
    %c0_50 = arith.constant 0 : index
    %c0_51 = arith.constant 0 : index
    %124 = vector.load %arg10[%c0_49, %c0_50, %c0_51] : memref<2x1x32xf32, #tpu.memory_space<vmem>>, vector<1x1x32xf32>
    %125 = vector.shape_cast %124 : vector<1x1x32xf32> to vector<1x32xf32>
    %cst_52 = arith.constant dense<0.000000e+00> : vector<16xf32>
    %126 = vector.multi_reduction <add>, %121, %cst_52 [1] : vector<16x32xf32> to vector<16xf32>
    %127 = vector.shape_cast %126 : vector<16xf32> to vector<16x1xf32>
    %cst_53 = arith.constant 3.200000e+01 : f32
    %128 = vector.broadcast %cst_53 : f32 to vector<16x1xf32>
    %129 = arith.divf %127, %128 : vector<16x1xf32>
    %130 = vector.broadcast %129 : vector<16x1xf32> to vector<16x32xf32>
    %131 = arith.subf %121, %130 : vector<16x32xf32>
    %132 = arith.mulf %131, %131 : vector<16x32xf32>
    %cst_54 = arith.constant dense<0.000000e+00> : vector<16xf32>
    %133 = vector.multi_reduction <add>, %132, %cst_54 [1] : vector<16x32xf32> to vector<16xf32>
    %134 = vector.shape_cast %133 : vector<16xf32> to vector<16x1xf32>
    %cst_55 = arith.constant 3.200000e+01 : f32
    %135 = vector.broadcast %cst_55 : f32 to vector<16x1xf32>
    %136 = arith.divf %134, %135 : vector<16x1xf32>
    %cst_56 = arith.constant 9.99999996E-13 : f32
    %137 = vector.broadcast %cst_56 : f32 to vector<16x1xf32>
    %138 = arith.addf %136, %137 : vector<16x1xf32>
    %139 = math.rsqrt %138 : vector<16x1xf32>
    %140 = vector.broadcast %129 : vector<16x1xf32> to vector<16x32xf32>
    %141 = arith.subf %121, %140 : vector<16x32xf32>
    %142 = vector.broadcast %139 : vector<16x1xf32> to vector<16x32xf32>
    %143 = arith.mulf %141, %142 : vector<16x32xf32>
    %144 = vector.broadcast %123 : vector<1x32xf32> to vector<16x32xf32>
    %145 = arith.mulf %143, %144 : vector<16x32xf32>
    %146 = vector.broadcast %125 : vector<1x32xf32> to vector<16x32xf32>
    %147 = arith.addf %145, %146 : vector<16x32xf32>
    %c0_57 = arith.constant 0 : index
    %c0_58 = arith.constant 0 : index
    %c0_59 = arith.constant 0 : index
    %148 = vector.load %arg11[%c0_57, %c0_58, %c0_59] : memref<2x32x64xf32, #tpu.memory_space<vmem>>, vector<1x32x64xf32>
    %149 = vector.shape_cast %148 : vector<1x32x64xf32> to vector<32x64xf32>
    %cst_60 = arith.constant dense<0.000000e+00> : vector<16x64xf32>
    %150 = tpu.matmul %147, %149, %cst_60 {dimension_numbers = #tpu.dot_dimension_numbers<[1], [0], [0], [1], [0, 0, 1, 1], [], []>} : vector<16x32xf32>, vector<32x64xf32>, vector<16x64xf32> -> vector<16x64xf32>
    %c0_61 = arith.constant 0 : index
    %c0_62 = arith.constant 0 : index
    %c0_63 = arith.constant 0 : index
    %151 = vector.load %arg12[%c0_61, %c0_62, %c0_63] : memref<2x1x64xf32, #tpu.memory_space<vmem>>, vector<1x1x64xf32>
    %152 = vector.shape_cast %151 : vector<1x1x64xf32> to vector<1x64xf32>
    %153 = vector.broadcast %152 : vector<1x64xf32> to vector<16x64xf32>
    %154 = arith.addf %150, %153 : vector<16x64xf32>
    %155 = arith.mulf %154, %154 : vector<16x64xf32>
    %156 = arith.mulf %154, %155 : vector<16x64xf32>
    %cst_64 = arith.constant 4.471500e-02 : f32
    %157 = vector.broadcast %cst_64 : f32 to vector<16x64xf32>
    %158 = arith.mulf %157, %156 : vector<16x64xf32>
    %159 = arith.addf %154, %158 : vector<16x64xf32>
    %cst_65 = arith.constant 0.797884583 : f32
    %160 = vector.broadcast %cst_65 : f32 to vector<16x64xf32>
    %161 = arith.mulf %160, %159 : vector<16x64xf32>
    %162 = math.tanh %161 : vector<16x64xf32>
    %cst_66 = arith.constant 1.000000e+00 : f32
    %163 = vector.broadcast %cst_66 : f32 to vector<16x64xf32>
    %164 = arith.addf %163, %162 : vector<16x64xf32>
    %cst_67 = arith.constant 5.000000e-01 : f32
    %165 = vector.broadcast %cst_67 : f32 to vector<16x64xf32>
    %166 = arith.mulf %165, %164 : vector<16x64xf32>
    %167 = arith.mulf %154, %166 : vector<16x64xf32>
    %c0_68 = arith.constant 0 : index
    %c0_69 = arith.constant 0 : index
    %c0_70 = arith.constant 0 : index
    %168 = vector.load %arg13[%c0_68, %c0_69, %c0_70] : memref<2x64x32xf32, #tpu.memory_space<vmem>>, vector<1x64x32xf32>
    %169 = vector.shape_cast %168 : vector<1x64x32xf32> to vector<64x32xf32>
    %cst_71 = arith.constant dense<0.000000e+00> : vector<16x32xf32>
    %170 = tpu.matmul %167, %169, %cst_71 {dimension_numbers = #tpu.dot_dimension_numbers<[1], [0], [0], [1], [0, 0, 1, 1], [], []>} : vector<16x64xf32>, vector<64x32xf32>, vector<16x32xf32> -> vector<16x32xf32>
    %c0_72 = arith.constant 0 : index
    %c0_73 = arith.constant 0 : index
    %c0_74 = arith.constant 0 : index
    %171 = vector.load %arg14[%c0_72, %c0_73, %c0_74] : memref<2x1x32xf32, #tpu.memory_space<vmem>>, vector<1x1x32xf32>
    %172 = vector.shape_cast %171 : vector<1x1x32xf32> to vector<1x32xf32>
    %173 = vector.broadcast %172 : vector<1x32xf32> to vector<16x32xf32>
    %174 = arith.addf %170, %173 : vector<16x32xf32>
    %175 = arith.addf %147, %174 : vector<16x32xf32>
    %c0_75 = arith.constant 0 : index
    %c0_76 = arith.constant 0 : index
    %c0_77 = arith.constant 0 : index
    %176 = vector.load %arg15[%c0_75, %c0_76, %c0_77] : memref<2x1x32xf32, #tpu.memory_space<vmem>>, vector<1x1x32xf32>
    %177 = vector.shape_cast %176 : vector<1x1x32xf32> to vector<1x32xf32>
    %c0_78 = arith.constant 0 : index
    %c0_79 = arith.constant 0 : index
    %c0_80 = arith.constant 0 : index
    %178 = vector.load %arg16[%c0_78, %c0_79, %c0_80] : memref<2x1x32xf32, #tpu.memory_space<vmem>>, vector<1x1x32xf32>
    %179 = vector.shape_cast %178 : vector<1x1x32xf32> to vector<1x32xf32>
    %cst_81 = arith.constant dense<0.000000e+00> : vector<16xf32>
    %180 = vector.multi_reduction <add>, %175, %cst_81 [1] : vector<16x32xf32> to vector<16xf32>
    %181 = vector.shape_cast %180 : vector<16xf32> to vector<16x1xf32>
    %cst_82 = arith.constant 3.200000e+01 : f32
    %182 = vector.broadcast %cst_82 : f32 to vector<16x1xf32>
    %183 = arith.divf %181, %182 : vector<16x1xf32>
    %184 = vector.broadcast %183 : vector<16x1xf32> to vector<16x32xf32>
    %185 = arith.subf %175, %184 : vector<16x32xf32>
    %186 = arith.mulf %185, %185 : vector<16x32xf32>
    %cst_83 = arith.constant dense<0.000000e+00> : vector<16xf32>
    %187 = vector.multi_reduction <add>, %186, %cst_83 [1] : vector<16x32xf32> to vector<16xf32>
    %188 = vector.shape_cast %187 : vector<16xf32> to vector<16x1xf32>
    %cst_84 = arith.constant 3.200000e+01 : f32
    %189 = vector.broadcast %cst_84 : f32 to vector<16x1xf32>
    %190 = arith.divf %188, %189 : vector<16x1xf32>
    %cst_85 = arith.constant 9.99999996E-13 : f32
    %191 = vector.broadcast %cst_85 : f32 to vector<16x1xf32>
    %192 = arith.addf %190, %191 : vector<16x1xf32>
    %193 = math.rsqrt %192 : vector<16x1xf32>
    %194 = vector.broadcast %183 : vector<16x1xf32> to vector<16x32xf32>
    %195 = arith.subf %175, %194 : vector<16x32xf32>
    %196 = vector.broadcast %193 : vector<16x1xf32> to vector<16x32xf32>
    %197 = arith.mulf %195, %196 : vector<16x32xf32>
    %198 = vector.broadcast %177 : vector<1x32xf32> to vector<16x32xf32>
    %199 = arith.mulf %197, %198 : vector<16x32xf32>
    %200 = vector.broadcast %179 : vector<1x32xf32> to vector<16x32xf32>
    %201 = arith.addf %199, %200 : vector<16x32xf32>
    %c1 = arith.constant 1 : index
    %c0_86 = arith.constant 0 : index
    %c0_87 = arith.constant 0 : index
    %202 = vector.load %arg5[%c1, %c0_86, %c0_87] : memref<2x32x96xf32, #tpu.memory_space<vmem>>, vector<1x32x96xf32>
    %203 = vector.shape_cast %202 : vector<1x32x96xf32> to vector<32x96xf32>
    %cst_88 = arith.constant dense<0.000000e+00> : vector<16x96xf32>
    %204 = tpu.matmul %201, %203, %cst_88 {dimension_numbers = #tpu.dot_dimension_numbers<[1], [0], [0], [1], [0, 0, 1, 1], [], []>} : vector<16x32xf32>, vector<32x96xf32>, vector<16x96xf32> -> vector<16x96xf32>
    %c1_89 = arith.constant 1 : index
    %c0_90 = arith.constant 0 : index
    %c0_91 = arith.constant 0 : index
    %205 = vector.load %arg6[%c1_89, %c0_90, %c0_91] : memref<2x1x96xf32, #tpu.memory_space<vmem>>, vector<1x1x96xf32>
    %206 = vector.shape_cast %205 : vector<1x1x96xf32> to vector<1x96xf32>
    %207 = vector.broadcast %206 : vector<1x96xf32> to vector<16x96xf32>
    %208 = arith.addf %204, %207 : vector<16x96xf32>
    %209 = vector.extract_strided_slice %208 {offsets = [0, 0], sizes = [16, 32], strides = [1, 1]} : vector<16x96xf32> to vector<16x32xf32>
    %cst_92 = arith.constant 0.353553385 : f32
    %210 = vector.broadcast %cst_92 : f32 to vector<16x32xf32>
    %211 = arith.mulf %209, %210 : vector<16x32xf32>
    %212 = vector.extract_strided_slice %208 {offsets = [0, 32], sizes = [16, 32], strides = [1, 1]} : vector<16x96xf32> to vector<16x32xf32>
    %213 = vector.extract_strided_slice %208 {offsets = [0, 64], sizes = [16, 32], strides = [1, 1]} : vector<16x96xf32> to vector<16x32xf32>
    %c1_93 = arith.constant 1 : index
    %c0_94 = arith.constant 0 : index
    %c0_95 = arith.constant 0 : index
    %214 = vector.load %arg7[%c1_93, %c0_94, %c0_95] : memref<2x32x32xf32, #tpu.memory_space<vmem>>, vector<1x32x32xf32>
    %215 = vector.shape_cast %214 : vector<1x32x32xf32> to vector<32x32xf32>
    %cst_96 = arith.constant 0.000000e+00 : f32
    %216 = vector.broadcast %cst_96 : f32 to vector<16x32xf32>
    %217 = vector.extract_strided_slice %211 {offsets = [0, 0], sizes = [16, 8], strides = [1, 1]} : vector<16x32xf32> to vector<16x8xf32>
    %218 = vector.extract_strided_slice %212 {offsets = [0, 0], sizes = [16, 8], strides = [1, 1]} : vector<16x32xf32> to vector<16x8xf32>
    %cst_97 = arith.constant dense<0.000000e+00> : vector<16x16xf32>
    %219 = tpu.matmul %217, %218, %cst_97 {dimension_numbers = #tpu.dot_dimension_numbers<[1], [1], [0], [0], [0, 0, 1, 0], [], []>} : vector<16x8xf32>, vector<16x8xf32>, vector<16x16xf32> -> vector<16x16xf32>
    %220 = arith.addf %219, %25 : vector<16x16xf32>
    %cst_98 = arith.constant dense<0xFF800000> : vector<16xf32>
    %221 = vector.multi_reduction <maximumf>, %220, %cst_98 [1] : vector<16x16xf32> to vector<16xf32>
    %222 = vector.shape_cast %221 : vector<16xf32> to vector<16x1xf32>
    %223 = vector.broadcast %222 : vector<16x1xf32> to vector<16x16xf32>
    %224 = arith.subf %220, %223 : vector<16x16xf32>
    %225 = math.exp %224 : vector<16x16xf32>
    %cst_99 = arith.constant dense<0.000000e+00> : vector<16xf32>
    %226 = vector.multi_reduction <add>, %225, %cst_99 [1] : vector<16x16xf32> to vector<16xf32>
    %227 = vector.shape_cast %226 : vector<16xf32> to vector<16x1xf32>
    %228 = tpu.reciprocal %227 {approx = true} : vector<16x1xf32> -> vector<16x1xf32>
    %229 = vector.broadcast %228 : vector<16x1xf32> to vector<16x16xf32>
    %230 = arith.mulf %225, %229 : vector<16x16xf32>
    %231 = vector.extract_strided_slice %213 {offsets = [0, 0], sizes = [16, 8], strides = [1, 1]} : vector<16x32xf32> to vector<16x8xf32>
    %cst_100 = arith.constant dense<0.000000e+00> : vector<16x8xf32>
    %232 = tpu.matmul %230, %231, %cst_100 {dimension_numbers = #tpu.dot_dimension_numbers<[1], [0], [0], [1], [0, 0, 1, 1], [], []>} : vector<16x16xf32>, vector<16x8xf32>, vector<16x8xf32> -> vector<16x8xf32>
    %233 = vector.extract_strided_slice %215 {offsets = [0, 0], sizes = [8, 32], strides = [1, 1]} : vector<32x32xf32> to vector<8x32xf32>
    %cst_101 = arith.constant dense<0.000000e+00> : vector<16x32xf32>
    %234 = tpu.matmul %232, %233, %cst_101 {dimension_numbers = #tpu.dot_dimension_numbers<[1], [0], [0], [1], [0, 0, 1, 1], [], []>} : vector<16x8xf32>, vector<8x32xf32>, vector<16x32xf32> -> vector<16x32xf32>
    %235 = arith.addf %216, %234 : vector<16x32xf32>
    %236 = vector.extract_strided_slice %211 {offsets = [0, 8], sizes = [16, 8], strides = [1, 1]} : vector<16x32xf32> to vector<16x8xf32>
    %237 = vector.extract_strided_slice %212 {offsets = [0, 8], sizes = [16, 8], strides = [1, 1]} : vector<16x32xf32> to vector<16x8xf32>
    %cst_102 = arith.constant dense<0.000000e+00> : vector<16x16xf32>
    %238 = tpu.matmul %236, %237, %cst_102 {dimension_numbers = #tpu.dot_dimension_numbers<[1], [1], [0], [0], [0, 0, 1, 0], [], []>} : vector<16x8xf32>, vector<16x8xf32>, vector<16x16xf32> -> vector<16x16xf32>
    %239 = arith.addf %238, %25 : vector<16x16xf32>
    %cst_103 = arith.constant dense<0xFF800000> : vector<16xf32>
    %240 = vector.multi_reduction <maximumf>, %239, %cst_103 [1] : vector<16x16xf32> to vector<16xf32>
    %241 = vector.shape_cast %240 : vector<16xf32> to vector<16x1xf32>
    %242 = vector.broadcast %241 : vector<16x1xf32> to vector<16x16xf32>
    %243 = arith.subf %239, %242 : vector<16x16xf32>
    %244 = math.exp %243 : vector<16x16xf32>
    %cst_104 = arith.constant dense<0.000000e+00> : vector<16xf32>
    %245 = vector.multi_reduction <add>, %244, %cst_104 [1] : vector<16x16xf32> to vector<16xf32>
    %246 = vector.shape_cast %245 : vector<16xf32> to vector<16x1xf32>
    %247 = tpu.reciprocal %246 {approx = true} : vector<16x1xf32> -> vector<16x1xf32>
    %248 = vector.broadcast %247 : vector<16x1xf32> to vector<16x16xf32>
    %249 = arith.mulf %244, %248 : vector<16x16xf32>
    %250 = vector.extract_strided_slice %213 {offsets = [0, 8], sizes = [16, 8], strides = [1, 1]} : vector<16x32xf32> to vector<16x8xf32>
    %cst_105 = arith.constant dense<0.000000e+00> : vector<16x8xf32>
    %251 = tpu.matmul %249, %250, %cst_105 {dimension_numbers = #tpu.dot_dimension_numbers<[1], [0], [0], [1], [0, 0, 1, 1], [], []>} : vector<16x16xf32>, vector<16x8xf32>, vector<16x8xf32> -> vector<16x8xf32>
    %252 = vector.extract_strided_slice %215 {offsets = [8, 0], sizes = [8, 32], strides = [1, 1]} : vector<32x32xf32> to vector<8x32xf32>
    %cst_106 = arith.constant dense<0.000000e+00> : vector<16x32xf32>
    %253 = tpu.matmul %251, %252, %cst_106 {dimension_numbers = #tpu.dot_dimension_numbers<[1], [0], [0], [1], [0, 0, 1, 1], [], []>} : vector<16x8xf32>, vector<8x32xf32>, vector<16x32xf32> -> vector<16x32xf32>
    %254 = arith.addf %235, %253 : vector<16x32xf32>
    %255 = vector.extract_strided_slice %211 {offsets = [0, 16], sizes = [16, 8], strides = [1, 1]} : vector<16x32xf32> to vector<16x8xf32>
    %256 = vector.extract_strided_slice %212 {offsets = [0, 16], sizes = [16, 8], strides = [1, 1]} : vector<16x32xf32> to vector<16x8xf32>
    %cst_107 = arith.constant dense<0.000000e+00> : vector<16x16xf32>
    %257 = tpu.matmul %255, %256, %cst_107 {dimension_numbers = #tpu.dot_dimension_numbers<[1], [1], [0], [0], [0, 0, 1, 0], [], []>} : vector<16x8xf32>, vector<16x8xf32>, vector<16x16xf32> -> vector<16x16xf32>
    %258 = arith.addf %257, %25 : vector<16x16xf32>
    %cst_108 = arith.constant dense<0xFF800000> : vector<16xf32>
    %259 = vector.multi_reduction <maximumf>, %258, %cst_108 [1] : vector<16x16xf32> to vector<16xf32>
    %260 = vector.shape_cast %259 : vector<16xf32> to vector<16x1xf32>
    %261 = vector.broadcast %260 : vector<16x1xf32> to vector<16x16xf32>
    %262 = arith.subf %258, %261 : vector<16x16xf32>
    %263 = math.exp %262 : vector<16x16xf32>
    %cst_109 = arith.constant dense<0.000000e+00> : vector<16xf32>
    %264 = vector.multi_reduction <add>, %263, %cst_109 [1] : vector<16x16xf32> to vector<16xf32>
    %265 = vector.shape_cast %264 : vector<16xf32> to vector<16x1xf32>
    %266 = tpu.reciprocal %265 {approx = true} : vector<16x1xf32> -> vector<16x1xf32>
    %267 = vector.broadcast %266 : vector<16x1xf32> to vector<16x16xf32>
    %268 = arith.mulf %263, %267 : vector<16x16xf32>
    %269 = vector.extract_strided_slice %213 {offsets = [0, 16], sizes = [16, 8], strides = [1, 1]} : vector<16x32xf32> to vector<16x8xf32>
    %cst_110 = arith.constant dense<0.000000e+00> : vector<16x8xf32>
    %270 = tpu.matmul %268, %269, %cst_110 {dimension_numbers = #tpu.dot_dimension_numbers<[1], [0], [0], [1], [0, 0, 1, 1], [], []>} : vector<16x16xf32>, vector<16x8xf32>, vector<16x8xf32> -> vector<16x8xf32>
    %271 = vector.extract_strided_slice %215 {offsets = [16, 0], sizes = [8, 32], strides = [1, 1]} : vector<32x32xf32> to vector<8x32xf32>
    %cst_111 = arith.constant dense<0.000000e+00> : vector<16x32xf32>
    %272 = tpu.matmul %270, %271, %cst_111 {dimension_numbers = #tpu.dot_dimension_numbers<[1], [0], [0], [1], [0, 0, 1, 1], [], []>} : vector<16x8xf32>, vector<8x32xf32>, vector<16x32xf32> -> vector<16x32xf32>
    %273 = arith.addf %254, %272 : vector<16x32xf32>
    %274 = vector.extract_strided_slice %211 {offsets = [0, 24], sizes = [16, 8], strides = [1, 1]} : vector<16x32xf32> to vector<16x8xf32>
    %275 = vector.extract_strided_slice %212 {offsets = [0, 24], sizes = [16, 8], strides = [1, 1]} : vector<16x32xf32> to vector<16x8xf32>
    %cst_112 = arith.constant dense<0.000000e+00> : vector<16x16xf32>
    %276 = tpu.matmul %274, %275, %cst_112 {dimension_numbers = #tpu.dot_dimension_numbers<[1], [1], [0], [0], [0, 0, 1, 0], [], []>} : vector<16x8xf32>, vector<16x8xf32>, vector<16x16xf32> -> vector<16x16xf32>
    %277 = arith.addf %276, %25 : vector<16x16xf32>
    %cst_113 = arith.constant dense<0xFF800000> : vector<16xf32>
    %278 = vector.multi_reduction <maximumf>, %277, %cst_113 [1] : vector<16x16xf32> to vector<16xf32>
    %279 = vector.shape_cast %278 : vector<16xf32> to vector<16x1xf32>
    %280 = vector.broadcast %279 : vector<16x1xf32> to vector<16x16xf32>
    %281 = arith.subf %277, %280 : vector<16x16xf32>
    %282 = math.exp %281 : vector<16x16xf32>
    %cst_114 = arith.constant dense<0.000000e+00> : vector<16xf32>
    %283 = vector.multi_reduction <add>, %282, %cst_114 [1] : vector<16x16xf32> to vector<16xf32>
    %284 = vector.shape_cast %283 : vector<16xf32> to vector<16x1xf32>
    %285 = tpu.reciprocal %284 {approx = true} : vector<16x1xf32> -> vector<16x1xf32>
    %286 = vector.broadcast %285 : vector<16x1xf32> to vector<16x16xf32>
    %287 = arith.mulf %282, %286 : vector<16x16xf32>
    %288 = vector.extract_strided_slice %213 {offsets = [0, 24], sizes = [16, 8], strides = [1, 1]} : vector<16x32xf32> to vector<16x8xf32>
    %cst_115 = arith.constant dense<0.000000e+00> : vector<16x8xf32>
    %289 = tpu.matmul %287, %288, %cst_115 {dimension_numbers = #tpu.dot_dimension_numbers<[1], [0], [0], [1], [0, 0, 1, 1], [], []>} : vector<16x16xf32>, vector<16x8xf32>, vector<16x8xf32> -> vector<16x8xf32>
    %290 = vector.extract_strided_slice %215 {offsets = [24, 0], sizes = [8, 32], strides = [1, 1]} : vector<32x32xf32> to vector<8x32xf32>
    %cst_116 = arith.constant dense<0.000000e+00> : vector<16x32xf32>
    %291 = tpu.matmul %289, %290, %cst_116 {dimension_numbers = #tpu.dot_dimension_numbers<[1], [0], [0], [1], [0, 0, 1, 1], [], []>} : vector<16x8xf32>, vector<8x32xf32>, vector<16x32xf32> -> vector<16x32xf32>
    %292 = arith.addf %273, %291 : vector<16x32xf32>
    %293 = arith.addf %201, %292 : vector<16x32xf32>
    %c1_117 = arith.constant 1 : index
    %c0_118 = arith.constant 0 : index
    %c0_119 = arith.constant 0 : index
    %294 = vector.load %arg8[%c1_117, %c0_118, %c0_119] : memref<2x1x32xf32, #tpu.memory_space<vmem>>, vector<1x1x32xf32>
    %295 = vector.shape_cast %294 : vector<1x1x32xf32> to vector<1x32xf32>
    %296 = vector.broadcast %295 : vector<1x32xf32> to vector<16x32xf32>
    %297 = arith.addf %293, %296 : vector<16x32xf32>
    %c1_120 = arith.constant 1 : index
    %c0_121 = arith.constant 0 : index
    %c0_122 = arith.constant 0 : index
    %298 = vector.load %arg9[%c1_120, %c0_121, %c0_122] : memref<2x1x32xf32, #tpu.memory_space<vmem>>, vector<1x1x32xf32>
    %299 = vector.shape_cast %298 : vector<1x1x32xf32> to vector<1x32xf32>
    %c1_123 = arith.constant 1 : index
    %c0_124 = arith.constant 0 : index
    %c0_125 = arith.constant 0 : index
    %300 = vector.load %arg10[%c1_123, %c0_124, %c0_125] : memref<2x1x32xf32, #tpu.memory_space<vmem>>, vector<1x1x32xf32>
    %301 = vector.shape_cast %300 : vector<1x1x32xf32> to vector<1x32xf32>
    %cst_126 = arith.constant dense<0.000000e+00> : vector<16xf32>
    %302 = vector.multi_reduction <add>, %297, %cst_126 [1] : vector<16x32xf32> to vector<16xf32>
    %303 = vector.shape_cast %302 : vector<16xf32> to vector<16x1xf32>
    %cst_127 = arith.constant 3.200000e+01 : f32
    %304 = vector.broadcast %cst_127 : f32 to vector<16x1xf32>
    %305 = arith.divf %303, %304 : vector<16x1xf32>
    %306 = vector.broadcast %305 : vector<16x1xf32> to vector<16x32xf32>
    %307 = arith.subf %297, %306 : vector<16x32xf32>
    %308 = arith.mulf %307, %307 : vector<16x32xf32>
    %cst_128 = arith.constant dense<0.000000e+00> : vector<16xf32>
    %309 = vector.multi_reduction <add>, %308, %cst_128 [1] : vector<16x32xf32> to vector<16xf32>
    %310 = vector.shape_cast %309 : vector<16xf32> to vector<16x1xf32>
    %cst_129 = arith.constant 3.200000e+01 : f32
    %311 = vector.broadcast %cst_129 : f32 to vector<16x1xf32>
    %312 = arith.divf %310, %311 : vector<16x1xf32>
    %cst_130 = arith.constant 9.99999996E-13 : f32
    %313 = vector.broadcast %cst_130 : f32 to vector<16x1xf32>
    %314 = arith.addf %312, %313 : vector<16x1xf32>
    %315 = math.rsqrt %314 : vector<16x1xf32>
    %316 = vector.broadcast %305 : vector<16x1xf32> to vector<16x32xf32>
    %317 = arith.subf %297, %316 : vector<16x32xf32>
    %318 = vector.broadcast %315 : vector<16x1xf32> to vector<16x32xf32>
    %319 = arith.mulf %317, %318 : vector<16x32xf32>
    %320 = vector.broadcast %299 : vector<1x32xf32> to vector<16x32xf32>
    %321 = arith.mulf %319, %320 : vector<16x32xf32>
    %322 = vector.broadcast %301 : vector<1x32xf32> to vector<16x32xf32>
    %323 = arith.addf %321, %322 : vector<16x32xf32>
    %c1_131 = arith.constant 1 : index
    %c0_132 = arith.constant 0 : index
    %c0_133 = arith.constant 0 : index
    %324 = vector.load %arg11[%c1_131, %c0_132, %c0_133] : memref<2x32x64xf32, #tpu.memory_space<vmem>>, vector<1x32x64xf32>
    %325 = vector.shape_cast %324 : vector<1x32x64xf32> to vector<32x64xf32>
    %cst_134 = arith.constant dense<0.000000e+00> : vector<16x64xf32>
    %326 = tpu.matmul %323, %325, %cst_134 {dimension_numbers = #tpu.dot_dimension_numbers<[1], [0], [0], [1], [0, 0, 1, 1], [], []>} : vector<16x32xf32>, vector<32x64xf32>, vector<16x64xf32> -> vector<16x64xf32>
    %c1_135 = arith.constant 1 : index
    %c0_136 = arith.constant 0 : index
    %c0_137 = arith.constant 0 : index
    %327 = vector.load %arg12[%c1_135, %c0_136, %c0_137] : memref<2x1x64xf32, #tpu.memory_space<vmem>>, vector<1x1x64xf32>
    %328 = vector.shape_cast %327 : vector<1x1x64xf32> to vector<1x64xf32>
    %329 = vector.broadcast %328 : vector<1x64xf32> to vector<16x64xf32>
    %330 = arith.addf %326, %329 : vector<16x64xf32>
    %331 = arith.mulf %330, %330 : vector<16x64xf32>
    %332 = arith.mulf %330, %331 : vector<16x64xf32>
    %cst_138 = arith.constant 4.471500e-02 : f32
    %333 = vector.broadcast %cst_138 : f32 to vector<16x64xf32>
    %334 = arith.mulf %333, %332 : vector<16x64xf32>
    %335 = arith.addf %330, %334 : vector<16x64xf32>
    %cst_139 = arith.constant 0.797884583 : f32
    %336 = vector.broadcast %cst_139 : f32 to vector<16x64xf32>
    %337 = arith.mulf %336, %335 : vector<16x64xf32>
    %338 = math.tanh %337 : vector<16x64xf32>
    %cst_140 = arith.constant 1.000000e+00 : f32
    %339 = vector.broadcast %cst_140 : f32 to vector<16x64xf32>
    %340 = arith.addf %339, %338 : vector<16x64xf32>
    %cst_141 = arith.constant 5.000000e-01 : f32
    %341 = vector.broadcast %cst_141 : f32 to vector<16x64xf32>
    %342 = arith.mulf %341, %340 : vector<16x64xf32>
    %343 = arith.mulf %330, %342 : vector<16x64xf32>
    %c1_142 = arith.constant 1 : index
    %c0_143 = arith.constant 0 : index
    %c0_144 = arith.constant 0 : index
    %344 = vector.load %arg13[%c1_142, %c0_143, %c0_144] : memref<2x64x32xf32, #tpu.memory_space<vmem>>, vector<1x64x32xf32>
    %345 = vector.shape_cast %344 : vector<1x64x32xf32> to vector<64x32xf32>
    %cst_145 = arith.constant dense<0.000000e+00> : vector<16x32xf32>
    %346 = tpu.matmul %343, %345, %cst_145 {dimension_numbers = #tpu.dot_dimension_numbers<[1], [0], [0], [1], [0, 0, 1, 1], [], []>} : vector<16x64xf32>, vector<64x32xf32>, vector<16x32xf32> -> vector<16x32xf32>
    %c1_146 = arith.constant 1 : index
    %c0_147 = arith.constant 0 : index
    %c0_148 = arith.constant 0 : index
    %347 = vector.load %arg14[%c1_146, %c0_147, %c0_148] : memref<2x1x32xf32, #tpu.memory_space<vmem>>, vector<1x1x32xf32>
    %348 = vector.shape_cast %347 : vector<1x1x32xf32> to vector<1x32xf32>
    %349 = vector.broadcast %348 : vector<1x32xf32> to vector<16x32xf32>
    %350 = arith.addf %346, %349 : vector<16x32xf32>
    %351 = arith.addf %323, %350 : vector<16x32xf32>
    %c1_149 = arith.constant 1 : index
    %c0_150 = arith.constant 0 : index
    %c0_151 = arith.constant 0 : index
    %352 = vector.load %arg15[%c1_149, %c0_150, %c0_151] : memref<2x1x32xf32, #tpu.memory_space<vmem>>, vector<1x1x32xf32>
    %353 = vector.shape_cast %352 : vector<1x1x32xf32> to vector<1x32xf32>
    %c1_152 = arith.constant 1 : index
    %c0_153 = arith.constant 0 : index
    %c0_154 = arith.constant 0 : index
    %354 = vector.load %arg16[%c1_152, %c0_153, %c0_154] : memref<2x1x32xf32, #tpu.memory_space<vmem>>, vector<1x1x32xf32>
    %355 = vector.shape_cast %354 : vector<1x1x32xf32> to vector<1x32xf32>
    %cst_155 = arith.constant dense<0.000000e+00> : vector<16xf32>
    %356 = vector.multi_reduction <add>, %351, %cst_155 [1] : vector<16x32xf32> to vector<16xf32>
    %357 = vector.shape_cast %356 : vector<16xf32> to vector<16x1xf32>
    %cst_156 = arith.constant 3.200000e+01 : f32
    %358 = vector.broadcast %cst_156 : f32 to vector<16x1xf32>
    %359 = arith.divf %357, %358 : vector<16x1xf32>
    %360 = vector.broadcast %359 : vector<16x1xf32> to vector<16x32xf32>
    %361 = arith.subf %351, %360 : vector<16x32xf32>
    %362 = arith.mulf %361, %361 : vector<16x32xf32>
    %cst_157 = arith.constant dense<0.000000e+00> : vector<16xf32>
    %363 = vector.multi_reduction <add>, %362, %cst_157 [1] : vector<16x32xf32> to vector<16xf32>
    %364 = vector.shape_cast %363 : vector<16xf32> to vector<16x1xf32>
    %cst_158 = arith.constant 3.200000e+01 : f32
    %365 = vector.broadcast %cst_158 : f32 to vector<16x1xf32>
    %366 = arith.divf %364, %365 : vector<16x1xf32>
    %cst_159 = arith.constant 9.99999996E-13 : f32
    %367 = vector.broadcast %cst_159 : f32 to vector<16x1xf32>
    %368 = arith.addf %366, %367 : vector<16x1xf32>
    %369 = math.rsqrt %368 : vector<16x1xf32>
    %370 = vector.broadcast %359 : vector<16x1xf32> to vector<16x32xf32>
    %371 = arith.subf %351, %370 : vector<16x32xf32>
    %372 = vector.broadcast %369 : vector<16x1xf32> to vector<16x32xf32>
    %373 = arith.mulf %371, %372 : vector<16x32xf32>
    %374 = vector.broadcast %353 : vector<1x32xf32> to vector<16x32xf32>
    %375 = arith.mulf %373, %374 : vector<16x32xf32>
    %376 = vector.broadcast %355 : vector<1x32xf32> to vector<16x32xf32>
    %377 = arith.addf %375, %376 : vector<16x32xf32>
    %c0_160 = arith.constant 0 : index
    %c0_161 = arith.constant 0 : index
    %378 = vector.load %arg17[%c0_160, %c0_161] : memref<32x4xf32, #tpu.memory_space<vmem>>, vector<32x4xf32>
    %cst_162 = arith.constant dense<0.000000e+00> : vector<16x4xf32>
    %379 = tpu.matmul %377, %378, %cst_162 {dimension_numbers = #tpu.dot_dimension_numbers<[1], [0], [0], [1], [0, 0, 1, 1], [], []>} : vector<16x32xf32>, vector<32x4xf32>, vector<16x4xf32> -> vector<16x4xf32>
    %c0_163 = arith.constant 0 : index
    %c0_164 = arith.constant 0 : index
    %380 = vector.load %arg18[%c0_163, %c0_164] : memref<1x4xf32, #tpu.memory_space<vmem>>, vector<1x4xf32>
    %381 = vector.broadcast %380 : vector<1x4xf32> to vector<16x4xf32>
    %382 = arith.addf %379, %381 : vector<16x4xf32>
    %c0_165 = arith.constant 0 : index
    %c0_166 = arith.constant 0 : index
    %383 = vector.load %arg19[%c0_165, %c0_166] : memref<16x4xf32, #tpu.memory_space<vmem>>, vector<16x4xf32>
    tpu.vector_store %arg19[%c0_165, %c0_166], %382 {strides = array<i32>} : memref<16x4xf32, #tpu.memory_space<vmem>>, vector<16x4xf32>,
    %cst_167 = arith.constant dense<0xFF800000> : vector<16xf32>
    %384 = vector.multi_reduction <maximumf>, %382, %cst_167 [1] : vector<16x4xf32> to vector<16xf32>
    %385 = vector.shape_cast %384 : vector<16xf32> to vector<16x1xf32>
    %386 = vector.broadcast %385 : vector<16x1xf32> to vector<16x4xf32>
    %387 = arith.subf %382, %386 : vector<16x4xf32>
    %388 = math.exp %387 : vector<16x4xf32>
    %cst_168 = arith.constant dense<0.000000e+00> : vector<16xf32>
    %389 = vector.multi_reduction <add>, %388, %cst_168 [1] : vector<16x4xf32> to vector<16xf32>
    %390 = vector.shape_cast %389 : vector<16xf32> to vector<16x1xf32>
    %391 = math.log %390 : vector<16x1xf32>
    %392 = vector.broadcast %391 : vector<16x1xf32> to vector<16x4xf32>
    %393 = arith.subf %387, %392 : vector<16x4xf32>
    %c0_169 = arith.constant 0 : index
    %c0_170 = arith.constant 0 : index
    %394 = vector.load %arg2[%c0_169, %c0_170] : memref<16x4xf32, #tpu.memory_space<vmem>>, vector<16x4xf32>
    %395 = arith.mulf %393, %394 : vector<16x4xf32>
    %cst_171 = arith.constant dense<0.000000e+00> : vector<16xf32>
    %396 = vector.multi_reduction <add>, %395, %cst_171 [1] : vector<16x4xf32> to vector<16xf32>
    %397 = vector.shape_cast %396 : vector<16xf32> to vector<16x1xf32>
    %cst_172 = arith.constant dense<0.000000e+00> : vector<1xf32>
    %398 = vector.multi_reduction <add>, %397, %cst_172 [0] : vector<16x1xf32> to vector<1xf32>
    %399 = vector.shape_cast %398 : vector<1xf32> to vector<1x1xf32>
    %cst_173 = arith.constant 6.250000e-02 : f32
    %400 = vector.broadcast %cst_173 : f32 to vector<1x1xf32>
    %401 = arith.mulf %399, %400 : vector<1x1xf32>
    %cst_174 = arith.constant 0.000000e+00 : f32
    %402 = vector.broadcast %cst_174 : f32 to vector<1x1xf32>
    %403 = arith.subf %402, %401 : vector<1x1xf32>
    %c0_175 = arith.constant 0 : index
    %c0_176 = arith.constant 0 : index
    %404 = vector.load %arg20[%c0_175, %c0_176] : memref<1x1xf32, #tpu.memory_space<vmem>>, vector<1x1xf32>
    tpu.vector_store %arg20[%c0_175, %c0_176], %403 {strides = array<i32>} : memref<1x1xf32, #tpu.memory_space<vmem>>, vector<1x1xf32>,
    return
  }
}

</mosaic_0001>

<llo_original>
// kernel: eq.1
$region0: #{eq.1}
  %s0 = inlined_call_operand.vmem [shape: s32[2,8], index: 0, kind: input, shape index: {}]
  %s1 = inlined_call_operand.vmem [shape: s32[16], index: 1, kind: output, shape index: {}]
  $region1: #{eq.1} parent=0
    #allocation0 [shape = 'u8[4096]{0}', space=vmem, size = 0x1000, scoped, tag = 'scoped mem for output reshape']
    #allocation1 [shape = 'u8[4096]{0}', space=vmem, size = 0x1000, scoped, tag = 'scoped mem for input reshape']
    %s3 = sshllo.u32 0, 2
    %v4 = vld [vmem:[%s0] sm:%s3]
    %5 = vst [vmem:[#allocation1] sm:%s3] %v4
    %v6 = vld [vmem:[#allocation1] sm:$0x1]
    %vm7 = vcmask 64512
    %8 = vst.msk [vmem:[#allocation0] sm:$0x1] %vm7, %v6
    %s9 = scalar_lea.vmem [#allocation1], 1
    %v10 = vld [vmem:[%s9] sm:$0x1]
    %11 = vrot.lane.b32.xlu0 %v10, 8
    %v12 = vpop.permute.xlu0 %11
    %vm13 = vcmask 130112
    %14 = vst.msk [vmem:[#allocation0] sm:$0x1] %vm13, %v12
    %s16 = sshllo.u32 0, 1
    %v18 = vld [vmem:[#allocation0] sm:%s16]
    %s19 = sshllo.u32 0, 1
    %20 = vst [vmem:[%s1] sm:%s19] %v18

// kernel: bert_for_cut_forward.1
$region0: #{bert_for_cut_forward.1}
  #allocation0 [shape = 'u32[]', space=smem, size = 0x4, offset = 0x4, fixed_abs, tag = 'smem constant byte address 0x4 - core index']
  #allocation1 [shape = 'u32[144,128]{1,0:T(1,128)}', space=vmem, size = 0x12000, scoped, tag = 'internal scratch']
  %s0 = inlined_call_operand.vmem [shape: f32[16,32], index: 0, kind: input, shape index: {}]
  %s1 = inlined_call_operand.vmem [shape: f32[16,16], index: 1, kind: input, shape index: {}]
  %s2 = inlined_call_operand.vmem [shape: f32[16,4], index: 2, kind: input, shape index: {}]
  %s3 = inlined_call_operand.vmem [shape: f32[1,32], index: 3, kind: input, shape index: {}]
  %s4 = inlined_call_operand.vmem [shape: f32[1,32], index: 4, kind: input, shape index: {}]
  %s5 = inlined_call_operand.vmem [shape: f32[2,32,96], index: 5, kind: input, shape index: {}]
  %s6 = inlined_call_operand.vmem [shape: f32[2,1,96], index: 6, kind: input, shape index: {}]
  %s7 = inlined_call_operand.vmem [shape: f32[2,32,32], index: 7, kind: input, shape index: {}]
  %s8 = inlined_call_operand.vmem [shape: f32[2,1,32], index: 8, kind: input, shape index: {}]
  %s9 = inlined_call_operand.vmem [shape: f32[2,1,32], index: 9, kind: input, shape index: {}]
  %s10 = inlined_call_operand.vmem [shape: f32[2,1,32], index: 10, kind: input, shape index: {}]
  %s11 = inlined_call_operand.vmem [shape: f32[2,32,64], index: 11, kind: input, shape index: {}]
  %s12 = inlined_call_operand.vmem [shape: f32[2,1,64], index: 12, kind: input, shape index: {}]
  %s13 = inlined_call_operand.vmem [shape: f32[2,64,32], index: 13, kind: input, shape index: {}]
  %s14 = inlined_call_operand.vmem [shape: f32[2,1,32], index: 14, kind: input, shape index: {}]
  %s15 = inlined_call_operand.vmem [shape: f32[2,1,32], index: 15, kind: input, shape index: {}]
  %s16 = inlined_call_operand.vmem [shape: f32[2,1,32], index: 16, kind: input, shape index: {}]
  %s17 = inlined_call_operand.vmem [shape: f32[32,4], index: 17, kind: input, shape index: {}]
  %s18 = inlined_call_operand.vmem [shape: f32[1,4], index: 18, kind: input, shape index: {}]
  %s19 = inlined_call_operand.vmem [shape: f32[16,4], index: 19, kind: output, shape index: {0}]
  %s20 = inlined_call_operand.hbm [shape: f32[1,1], index: 20, kind: output, shape index: {1}]
  %21 = xla_tuple %s19, %s20
  %s22 = sld [smem:[#allocation0]]
  $region94: #{bert_for_cut_forward.1} parent=0
    _
  %s24 = ssub.s32 1, %s22
  %s25 = scalar_select 0, %s24, %s22
  $region1: #{bert_for_cut_forward.1} parent=0
    #allocation2 [shape = 'u8[512]{0}', space=vmem, size = 0x400, scoped, tag = 'output window, operand 1, single buffered']
    #allocation3 [shape = 's32[1]{0}', space=sflag, size = 0x4, scoped, tag = 'scoped memory for bert_for_cut_forward.1']
    %26 = vsyncpa [#allocation3], 0
    // Predicated region
    $region2: #{bert_for_cut_forward.1} parent=1 // pred_check
      _
    $region3: #{bert_for_cut_forward.1} parent=1 // pred_check_branch
      %28 = sbr.rel (0) target = $region5
    $region4: #{bert_for_cut_forward.1} parent=1 // pred_region
      _
    $region5: #{bert_for_cut_forward.1} parent=1 // pred_fallthru
      _
    // Predicated region
    $region6: #{bert_for_cut_forward.1} parent=1 // pred_check
      _
    $region7: #{bert_for_cut_forward.1} parent=1 // pred_check_branch
      %30 = sbr.rel (0) target = $region9
    $region8: #{bert_for_cut_forward.1} parent=1 // pred_region
      _
    $region9: #{bert_for_cut_forward.1} parent=1 // pred_fallthru
      _
    // Predicated region
    $region10: #{bert_for_cut_forward.1} parent=1 // pred_check
      _
    $region11: #{bert_for_cut_forward.1} parent=1 // pred_check_branch
      %32 = sbr.rel (0) target = $region13
    $region12: #{bert_for_cut_forward.1} parent=1 // pred_region
      _
    $region13: #{bert_for_cut_forward.1} parent=1 // pred_fallthru
      _
    // Predicated region
    $region14: #{bert_for_cut_forward.1} parent=1 // pred_check
      _
    $region15: #{bert_for_cut_forward.1} parent=1 // pred_check_branch
      %34 = sbr.rel (0) target = $region17
    $region16: #{bert_for_cut_forward.1} parent=1 // pred_region
      _
    $region17: #{bert_for_cut_forward.1} parent=1 // pred_fallthru
      _
    // Predicated region
    $region18: #{bert_for_cut_forward.1} parent=1 // pred_check
      _
    $region19: #{bert_for_cut_forward.1} parent=1 // pred_check_branch
      %36 = sbr.rel (0) target = $region21
    $region20: #{bert_for_cut_forward.1} parent=1 // pred_region
      _
    $region21: #{bert_for_cut_forward.1} parent=1 // pred_fallthru
      _
    // Predicated region
    $region22: #{bert_for_cut_forward.1} parent=1 // pred_check
      _
    $region23: #{bert_for_cut_forward.1} parent=1 // pred_check_branch
      %38 = sbr.rel (0) target = $region25
    $region24: #{bert_for_cut_forward.1} parent=1 // pred_region
      _
    $region25: #{bert_for_cut_forward.1} parent=1 // pred_fallthru
      _
    // Predicated region
    $region26: #{bert_for_cut_forward.1} parent=1 // pred_check
      _
    $region27: #{bert_for_cut_forward.1} parent=1 // pred_check_branch
      %40 = sbr.rel (0) target = $region29
    $region28: #{bert_for_cut_forward.1} parent=1 // pred_region
      _
    $region29: #{bert_for_cut_forward.1} parent=1 // pred_fallthru
      _
    // Predicated region
    $region30: #{bert_for_cut_forward.1} parent=1 // pred_check
      _
    $region31: #{bert_for_cut_forward.1} parent=1 // pred_check_branch
      %42 = sbr.rel (0) target = $region33
    $region32: #{bert_for_cut_forward.1} parent=1 // pred_region
      _
    $region33: #{bert_for_cut_forward.1} parent=1 // pred_fallthru
      _
    // Predicated region
    $region34: #{bert_for_cut_forward.1} parent=1 // pred_check
      _
    $region35: #{bert_for_cut_forward.1} parent=1 // pred_check_branch
      %44 = sbr.rel (0) target = $region37
    $region36: #{bert_for_cut_forward.1} parent=1 // pred_region
      _
    $region37: #{bert_for_cut_forward.1} parent=1 // pred_fallthru
      _
    // Predicated region
    $region38: #{bert_for_cut_forward.1} parent=1 // pred_check
      _
    $region39: #{bert_for_cut_forward.1} parent=1 // pred_check_branch
      %46 = sbr.rel (0) target = $region41
    $region40: #{bert_for_cut_forward.1} parent=1 // pred_region
      _
    $region41: #{bert_for_cut_forward.1} parent=1 // pred_fallthru
      _
    // Predicated region
    $region42: #{bert_for_cut_forward.1} parent=1 // pred_check
      _
    $region43: #{bert_for_cut_forward.1} parent=1 // pred_check_branch
      %48 = sbr.rel (0) target = $region45
    $region44: #{bert_for_cut_forward.1} parent=1 // pred_region
      _
    $region45: #{bert_for_cut_forward.1} parent=1 // pred_fallthru
      _
    // Predicated region
    $region46: #{bert_for_cut_forward.1} parent=1 // pred_check
      _
    $region47: #{bert_for_cut_forward.1} parent=1 // pred_check_branch
      %50 = sbr.rel (0) target = $region49
    $region48: #{bert_for_cut_forward.1} parent=1 // pred_region
      _
    $region49: #{bert_for_cut_forward.1} parent=1 // pred_fallthru
      _
    // Predicated region
    $region50: #{bert_for_cut_forward.1} parent=1 // pred_check
      _
    $region51: #{bert_for_cut_forward.1} parent=1 // pred_check_branch
      %52 = sbr.rel (0) target = $region53
    $region52: #{bert_for_cut_forward.1} parent=1 // pred_region
      _
    $region53: #{bert_for_cut_forward.1} parent=1 // pred_fallthru
      _
    // Predicated region
    $region54: #{bert_for_cut_forward.1} parent=1 // pred_check
      _
    $region55: #{bert_for_cut_forward.1} parent=1 // pred_check_branch
      %54 = sbr.rel (0) target = $region57
    $region56: #{bert_for_cut_forward.1} parent=1 // pred_region
      _
    $region57: #{bert_for_cut_forward.1} parent=1 // pred_fallthru
      _
    // Predicated region
    $region58: #{bert_for_cut_forward.1} parent=1 // pred_check
      _
    $region59: #{bert_for_cut_forward.1} parent=1 // pred_check_branch
      %56 = sbr.rel (0) target = $region61
    $region60: #{bert_for_cut_forward.1} parent=1 // pred_region
      _
    $region61: #{bert_for_cut_forward.1} parent=1 // pred_fallthru
      _
    // Predicated region
    $region62: #{bert_for_cut_forward.1} parent=1 // pred_check
      _
    $region63: #{bert_for_cut_forward.1} parent=1 // pred_check_branch
      %58 = sbr.rel (0) target = $region65
    $region64: #{bert_for_cut_forward.1} parent=1 // pred_region
      _
    $region65: #{bert_for_cut_forward.1} parent=1 // pred_fallthru
      _
    // Predicated region
    $region66: #{bert_for_cut_forward.1} parent=1 // pred_check
      _
    $region67: #{bert_for_cut_forward.1} parent=1 // pred_check_branch
      %60 = sbr.rel (0) target = $region69
    $region68: #{bert_for_cut_forward.1} parent=1 // pred_region
      _
    $region69: #{bert_for_cut_forward.1} parent=1 // pred_fallthru
      _
    // Predicated region
    $region70: #{bert_for_cut_forward.1} parent=1 // pred_check
      _
    $region71: #{bert_for_cut_forward.1} parent=1 // pred_check_branch
      %62 = sbr.rel (0) target = $region73
    $region72: #{bert_for_cut_forward.1} parent=1 // pred_region
      _
    $region73: #{bert_for_cut_forward.1} parent=1 // pred_fallthru
      _
    // Predicated region
    $region74: #{bert_for_cut_forward.1} parent=1 // pred_check
      _
    $region75: #{bert_for_cut_forward.1} parent=1 // pred_check_branch
      %64 = sbr.rel (0) target = $region77
    $region76: #{bert_for_cut_forward.1} parent=1 // pred_region
      _
    $region77: #{bert_for_cut_forward.1} parent=1 // pred_fallthru
      _
    %v65 = vld [vmem:[%s0] sm:$0xff]
    %v66 = vld [vmem:[%s0 + $0x8] sm:$0xff]
    %v67 = vld [vmem:[%s3] sm:$0x1]
    %v68 = vld [vmem:[%s4] sm:$0x1]
    %vm69 = vcmask 261120
    %v70 = vsel %vm69, %v65, 0.0
    %71 = vadd.xlane.f32.xlu0 %v70
    %v72 = vpop.xlane.xlu0 %71
    %v73 = vsel %vm69, %v66, 0.0
    %74 = vadd.xlane.f32.xlu0 %v73
    %v75 = vpop.xlane.xlu0 %74
    %v76 = vrcp.pop 32.0
    %v77 = vmul.f32 %v72, %v76
    %v78 = vmul.f32 %v75, %v76
    %v79 = vsub.f32 %v65, %v77
    %v80 = vsub.f32 %v66, %v78
    %v81 = vmul.f32 %v79, %v79
    %v82 = vmul.f32 %v80, %v80
    %v83 = vsel %vm69, %v81, 0.0
    %84 = vadd.xlane.f32.xlu0 %v83
    %v85 = vpop.xlane.xlu0 %84
    %v86 = vsel %vm69, %v82, 0.0
    %87 = vadd.xlane.f32.xlu0 %v86
    %v88 = vpop.xlane.xlu0 %87
    %v89 = vmul.f32 %v85, %v76
    %v90 = vmul.f32 %v88, %v76
    %v91 = vadd.f32 %v89, 1e-12
    %v92 = vadd.f32 %v90, 1e-12
    %v93 = vrsqrt.pop %v91
    %v94 = vrsqrt.pop %v92
    %v95 = vmul.f32 %v79, %v93
    %v96 = vmul.f32 %v80, %v94
    %v98 = vlaneseq
    %v99 = vshrl.u32 %v98, 7
    %v100 = vsub.s32 0, %v99
    %v101 = vrot.slane %v67, %v100
    %v103 = vmul.f32 %v95, %v101
    %v104 = vmul.f32 %v96, %v101
    %v106 = vlaneseq
    %v107 = vshrl.u32 %v106, 7
    %v108 = vsub.s32 0, %v107
    %v109 = vrot.slane %v68, %v108
    %v111 = vadd.f32 %v103, %v109
    %v112 = vadd.f32 %v104, %v109
    %v113 = vld [vmem:[%s1] sm:$0xff]
    %v114 = vld [vmem:[%s1 + $0x8] sm:$0xff]
    %v115 = vld [vmem:[%s5] sm:$0xff]
    %v116 = vld [vmem:[%s5 + $0x8] sm:$0xff]
    %v117 = vld [vmem:[%s5 + $0x10] sm:$0xff]
    %v118 = vld [vmem:[%s5 + $0x18] sm:$0xff]
    %v119 = vld [vmem:[%s6] sm:$0x1]
    %v121 = vlaneseq
    %v122 = vshrl.u32 %v121, 7
    %v123 = vsub.s32 0, %v122
    %v124 = vrot.slane %v119, %v123
    %v127 = vsel %vm69, %v111, 0
    %v130 = vsel %vm69, %v112, 0
    %132 = vmatprep.subr.mxu0 0.0
    %133 = vmatpush1.msra.mxu0 %v115
    %134 = vmatprep.subr.mxu0 0.0
    %135 = vmatpush1.msra.mxu0 %v116
    %136 = vmatprep.subr.mxu0 0.0
    %137 = vmatpush1.msra.mxu0 %v117
    %138 = vmatprep.subr.mxu0 0.0
    %139 = vmatpush1.msra.mxu0 %v118
    %140 = vmatprep.subr.mxu0 0.0
    %141 = vmatpush1.msra.mxu0 0.0
    %142 = vmatprep.subr.mxu0 0.0
    %143 = vmatpush1.msra.mxu0 0.0
    %144 = vmatprep.subr.mxu0 0.0
    %145 = vmatpush1.msra.mxu0 0.0
    %146 = vmatprep.subr.mxu0 0.0
    %147 = vmatpush1.msra.mxu0 0.0
    %148 = vmatprep.subr.mxu0 0.0
    %149 = vmatpush1.msra.mxu0 0.0
    %150 = vmatprep.subr.mxu0 0.0
    %151 = vmatpush1.msra.mxu0 0.0
    %152 = vmatprep.subr.mxu0 0.0
    %153 = vmatpush1.msra.mxu0 0.0
    %154 = vmatprep.subr.mxu0 0.0
    %155 = vmatpush1.msra.mxu0 0.0
    %156 = vmatprep.subr.mxu0 0.0
    %157 = vmatpush1.msra.mxu0 0.0
    %158 = vmatprep.subr.mxu0 0.0
    %159 = vmatpush1.msra.mxu0 0.0
    %160 = vmatprep.subr.mxu0 0.0
    %161 = vmatpush1.msra.mxu0 0.0
    %162 = vmatprep.subr.mxu0 0.0
    %163 = vmatpush1.msra.mxu0 0.0
    %164 = vmatprep.subr.mxu0 0.0
    %165 = vmatpush1.msra.mxu0 0.0
    %166 = vmatprep.subr.mxu0 0.0
    %167 = vmatpush1.msra.mxu0 0.0
    %168 = vmatprep.subr.mxu0 0.0
    %169 = vmatpush1.msra.mxu0 0.0
    %170 = vmatprep.subr.mxu0 0.0
    %171 = vmatpush1.msra.mxu0 0.0
    %172 = vmatprep.subr.mxu0 0.0
    %173 = vmatpush1.msra.mxu0 0.0
    %174 = vmatprep.subr.mxu0 0.0
    %175 = vmatpush1.msra.mxu0 0.0
    %176 = vmatprep.subr.mxu0 0.0
    %177 = vmatpush1.msra.mxu0 0.0
    %178 = vmatprep.subr.mxu0 0.0
    %179 = vmatpush1.msra.mxu0 0.0
    %180 = vmatprep.subr.mxu0 0.0
    %181 = vmatpush1.msra.mxu0 0.0
    %182 = vmatprep.subr.mxu0 0.0
    %183 = vmatpush1.msra.mxu0 0.0
    %184 = vmatprep.subr.mxu0 0.0
    %185 = vmatpush1.msra.mxu0 0.0
    %186 = vmatprep.subr.mxu0 0.0
    %187 = vmatpush1.msra.mxu0 0.0
    %188 = vmatprep.subr.mxu0 0.0
    %189 = vmatpush1.msra.mxu0 0.0
    %190 = vmatprep.subr.mxu0 0.0
    %191 = vmatpush1.msra.mxu0 0.0
    %192 = vmatprep.subr.mxu0 0.0
    %193 = vmatpush1.msra.mxu0 0.0
    %194 = vmatprep.subr.mxu0 0.0
    %195 = vmatpush1.msra.mxu0 0.0
    %196 = vmatprep.mubr.f32.mxu0 0.0
    %197 = vmatmul.mubr.f32.gmra.mrb[0].mxu0 %v127
    %v198 = vpop.f32.mrb[0].mxu0
    %v199 = vadd.f32 %v124, %v198
    %v200 = vpop.f32.mrb[0].mxu0
    %201 = vmatprep.mubr.f32.mxu0 0.0
    %202 = vmatmul.mubr.f32.gmra.mrb[0].mxu0 %v130
    %v203 = vpop.f32.mrb[0].mxu0
    %v204 = vadd.f32 %v124, %v203
    %v205 = vpop.f32.mrb[0].mxu0
    %206 = vdwg.mxu0
    %v207 = vmul.f32 %v199, 0.35355338
    %v208 = vmul.f32 %v204, 0.35355338
    %v209 = vld [vmem:[%s7] sm:$0xff]
    %v210 = vld [vmem:[%s7 + $0x8] sm:$0xff]
    %v211 = vld [vmem:[%s7 + $0x10] sm:$0xff]
    %v212 = vld [vmem:[%s7 + $0x18] sm:$0xff]
    %215 = vrot.lane.b32.xlu0 %v199, 96
    %v216 = vpop.permute.xlu0 %215
    %217 = vrot.lane.b32.xlu0 %v204, 96
    %v218 = vpop.permute.xlu0 %217
    %vm219 = vcmask 64512
    %v221 = vsel %vm219, %v207, 0
    %v224 = vsel %vm219, %v208, 0
    %v226 = vsel %vm219, %v216, 0
    %v228 = vsel %vm219, %v218, 0
    %230 = vmatprep.subr.mxu0 0.0
    %231 = vmatpush1.xpose.msra.mxu0 %v226
    %232 = vmatprep.subr.mxu0 0.0
    %233 = vmatpush1.xpose.msra.mxu0 %v228
    %234 = vmatprep.subr.mxu0 0.0
    %235 = vmatpush1.xpose.msra.mxu0 0.0
    %236 = vmatprep.subr.mxu0 0.0
    %237 = vmatpush1.xpose.msra.mxu0 0.0
    %238 = vmatprep.subr.mxu0 0.0
    %239 = vmatpush1.xpose.msra.mxu0 0.0
    %240 = vmatprep.subr.mxu0 0.0
    %241 = vmatpush1.xpose.msra.mxu0 0.0
    %242 = vmatprep.subr.mxu0 0.0
    %243 = vmatpush1.xpose.msra.mxu0 0.0
    %244 = vmatprep.subr.mxu0 0.0
    %245 = vmatpush1.xpose.msra.mxu0 0.0
    %246 = vmatprep.subr.mxu0 0.0
    %247 = vmatpush1.xpose.msra.mxu0 0.0
    %248 = vmatprep.subr.mxu0 0.0
    %249 = vmatpush1.xpose.msra.mxu0 0.0
    %250 = vmatprep.subr.mxu0 0.0
    %251 = vmatpush1.xpose.msra.mxu0 0.0
    %252 = vmatprep.subr.mxu0 0.0
    %253 = vmatpush1.xpose.msra.mxu0 0.0
    %254 = vmatprep.subr.mxu0 0.0
    %255 = vmatpush1.xpose.msra.mxu0 0.0
    %256 = vmatprep.subr.mxu0 0.0
    %257 = vmatpush1.xpose.msra.mxu0 0.0
    %258 = vmatprep.subr.mxu0 0.0
    %259 = vmatpush1.xpose.msra.mxu0 0.0
    %260 = vmatprep.subr.mxu0 0.0
    %261 = vmatpush1.xpose.msra.mxu0 0.0
    %262 = vmatprep.subr.mxu0 0.0
    %263 = vmatpush1.xpose.msra.mxu0 0.0
    %264 = vmatprep.subr.mxu0 0.0
    %265 = vmatpush1.xpose.msra.mxu0 0.0
    %266 = vmatprep.subr.mxu0 0.0
    %267 = vmatpush1.xpose.msra.mxu0 0.0
    %268 = vmatprep.subr.mxu0 0.0
    %269 = vmatpush1.xpose.msra.mxu0 0.0
    %270 = vmatprep.subr.mxu0 0.0
    %271 = vmatpush1.xpose.msra.mxu0 0.0
    %272 = vmatprep.subr.mxu0 0.0
    %273 = vmatpush1.xpose.msra.mxu0 0.0
    %274 = vmatprep.subr.mxu0 0.0
    %275 = vmatpush1.xpose.msra.mxu0 0.0
    %276 = vmatprep.subr.mxu0 0.0
    %277 = vmatpush1.xpose.msra.mxu0 0.0
    %278 = vmatprep.subr.mxu0 0.0
    %279 = vmatpush1.xpose.msra.mxu0 0.0
    %280 = vmatprep.subr.mxu0 0.0
    %281 = vmatpush1.xpose.msra.mxu0 0.0
    %282 = vmatprep.subr.mxu0 0.0
    %283 = vmatpush1.xpose.msra.mxu0 0.0
    %284 = vmatprep.subr.mxu0 0.0
    %285 = vmatpush1.xpose.msra.mxu0 0.0
    %286 = vmatprep.subr.mxu0 0.0
    %287 = vmatpush1.xpose.msra.mxu0 0.0
    %288 = vmatprep.subr.mxu0 0.0
    %289 = vmatpush1.xpose.msra.mxu0 0.0
    %290 = vmatprep.subr.mxu0 0.0
    %291 = vmatpush1.xpose.msra.mxu0 0.0
    %292 = vmatprep.subr.mxu0 0.0
    %293 = vmatpush1.xpose.msra.mxu0 0.0
    %294 = vmatprep.mubr.f32.mxu0 0.0
    %295 = vmatmul.mubr.f32.gmra.mrb[0].mxu0 %v221
    %v296 = vpop.f32.mrb[0].mxu0
    %v297 = vadd.f32 %v113, %v296
    %v298 = vpop.f32.mrb[0].mxu0
    %299 = vmatprep.mubr.f32.mxu0 0.0
    %300 = vmatmul.mubr.f32.gmra.mrb[0].mxu0 %v224
    %v301 = vpop.f32.mrb[0].mxu0
    %v302 = vadd.f32 %v114, %v301
    %v303 = vpop.f32.mrb[0].mxu0
    %304 = vdwg.mxu0
    %vm305 = vcmask 130048
    %v306 = vsel %vm305, %v297, -inf
    %307 = vmax.xlane.f32.xlu0 %v306
    %v308 = vpop.xlane.xlu0 %307
    %v309 = vsel %vm305, %v302, -inf
    %310 = vmax.xlane.f32.xlu0 %v309
    %v311 = vpop.xlane.xlu0 %310
    %v312 = vsub.f32 %v297, %v308
    %v313 = vsub.f32 %v302, %v311
    %v314 = vmul.f32 %v312, 1.442695
    %v315 = vpow.pop %v314
    %v316 = vmul.f32 %v313, 1.442695
    %v317 = vpow.pop %v316
    %v318 = vsel %vm305, %v315, 0.0
    %319 = vadd.xlane.f32.xlu0 %v318
    %v320 = vpop.xlane.xlu0 %319
    %v321 = vsel %vm305, %v317, 0.0
    %322 = vadd.xlane.f32.xlu0 %v321
    %v323 = vpop.xlane.xlu0 %322
    %v324 = vrcp.pop %v320
    %v325 = vrcp.pop %v323
    %v326 = vmul.f32 %v315, %v324
    %v327 = vmul.f32 %v317, %v325
    %328 = vrot.lane.b32.xlu0 %v199, 64
    %v329 = vpop.permute.xlu0 %328
    %330 = vrot.lane.b32.xlu0 %v204, 64
    %v331 = vpop.permute.xlu0 %330
    %v335 = vsel %vm305, %v326, 0
    %v338 = vsel %vm305, %v327, 0
    %340 = vmatprep.subr.mxu0 0.0
    %341 = vmatpush1.msra.mxu0 %v329
    %342 = vmatprep.subr.mxu0 0.0
    %343 = vmatpush1.msra.mxu0 %v331
    %344 = vmatprep.subr.mxu0 0.0
    %345 = vmatpush1.msra.mxu0 0.0
    %346 = vmatprep.subr.mxu0 0.0
    %347 = vmatpush1.msra.mxu0 0.0
    %348 = vmatprep.subr.mxu0 0.0
    %349 = vmatpush1.msra.mxu0 0.0
    %350 = vmatprep.subr.mxu0 0.0
    %351 = vmatpush1.msra.mxu0 0.0
    %352 = vmatprep.subr.mxu0 0.0
    %353 = vmatpush1.msra.mxu0 0.0
    %354 = vmatprep.subr.mxu0 0.0
    %355 = vmatpush1.msra.mxu0 0.0
    %356 = vmatprep.subr.mxu0 0.0
    %357 = vmatpush1.msra.mxu0 0.0
    %358 = vmatprep.subr.mxu0 0.0
    %359 = vmatpush1.msra.mxu0 0.0
    %360 = vmatprep.subr.mxu0 0.0
    %361 = vmatpush1.msra.mxu0 0.0
    %362 = vmatprep.subr.mxu0 0.0
    %363 = vmatpush1.msra.mxu0 0.0
    %364 = vmatprep.subr.mxu0 0.0
    %365 = vmatpush1.msra.mxu0 0.0
    %366 = vmatprep.subr.mxu0 0.0
    %367 = vmatpush1.msra.mxu0 0.0
    %368 = vmatprep.subr.mxu0 0.0
    %369 = vmatpush1.msra.mxu0 0.0
    %370 = vmatprep.subr.mxu0 0.0
    %371 = vmatpush1.msra.mxu0 0.0
    %372 = vmatprep.subr.mxu0 0.0
    %373 = vmatpush1.msra.mxu0 0.0
    %374 = vmatprep.subr.mxu0 0.0
    %375 = vmatpush1.msra.mxu0 0.0
    %376 = vmatprep.subr.mxu0 0.0
    %377 = vmatpush1.msra.mxu0 0.0
    %378 = vmatprep.subr.mxu0 0.0
    %379 = vmatpush1.msra.mxu0 0.0
    %380 = vmatprep.subr.mxu0 0.0
    %381 = vmatpush1.msra.mxu0 0.0
    %382 = vmatprep.subr.mxu0 0.0
    %383 = vmatpush1.msra.mxu0 0.0
    %384 = vmatprep.subr.mxu0 0.0
    %385 = vmatpush1.msra.mxu0 0.0
    %386 = vmatprep.subr.mxu0 0.0
    %387 = vmatpush1.msra.mxu0 0.0
    %388 = vmatprep.subr.mxu0 0.0
    %389 = vmatpush1.msra.mxu0 0.0
    %390 = vmatprep.subr.mxu0 0.0
    %391 = vmatpush1.msra.mxu0 0.0
    %392 = vmatprep.subr.mxu0 0.0
    %393 = vmatpush1.msra.mxu0 0.0
    %394 = vmatprep.subr.mxu0 0.0
    %395 = vmatpush1.msra.mxu0 0.0
    %396 = vmatprep.subr.mxu0 0.0
    %397 = vmatpush1.msra.mxu0 0.0
    %398 = vmatprep.subr.mxu0 0.0
    %399 = vmatpush1.msra.mxu0 0.0
    %400 = vmatprep.subr.mxu0 0.0
    %401 = vmatpush1.msra.mxu0 0.0
    %402 = vmatprep.subr.mxu0 0.0
    %403 = vmatpush1.msra.mxu0 0.0
    %404 = vmatprep.mubr.f32.mxu0 0.0
    %405 = vmatmul.mubr.f32.gmra.mrb[0].mxu0 %v335
    %v406 = vpop.f32.mrb[0].mxu0
    %v407 = vadd.f32 0.0, %v406
    %v408 = vpop.f32.mrb[0].mxu0
    %409 = vmatprep.mubr.f32.mxu0 0.0
    %410 = vmatmul.mubr.f32.gmra.mrb[0].mxu0 %v338
    %v411 = vpop.f32.mrb[0].mxu0
    %v412 = vadd.f32 0.0, %v411
    %v413 = vpop.f32.mrb[0].mxu0
    %414 = vdwg.mxu0
    %415 = vrot.lane.b32.xlu0 %v207, 120
    %v416 = vpop.permute.xlu0 %415
    %417 = vrot.lane.b32.xlu0 %v208, 120
    %v418 = vpop.permute.xlu0 %417
    %419 = vrot.lane.b32.xlu0 %v199, 88
    %v420 = vpop.permute.xlu0 %419
    %421 = vrot.lane.b32.xlu0 %v204, 88
    %v422 = vpop.permute.xlu0 %421
    %v423 = vsel %vm219, %v416, 0
    %v425 = vsel %vm219, %v418, 0
    %v427 = vsel %vm219, %v420, 0
    %v429 = vsel %vm219, %v422, 0
    %431 = vmatprep.subr.mxu0 0.0
    %432 = vmatpush1.xpose.msra.mxu0 %v427
    %433 = vmatprep.subr.mxu0 0.0
    %434 = vmatpush1.xpose.msra.mxu0 %v429
    %435 = vmatprep.subr.mxu0 0.0
    %436 = vmatpush1.xpose.msra.mxu0 0.0
    %437 = vmatprep.subr.mxu0 0.0
    %438 = vmatpush1.xpose.msra.mxu0 0.0
    %439 = vmatprep.subr.mxu0 0.0
    %440 = vmatpush1.xpose.msra.mxu0 0.0
    %441 = vmatprep.subr.mxu0 0.0
    %442 = vmatpush1.xpose.msra.mxu0 0.0
    %443 = vmatprep.subr.mxu0 0.0
    %444 = vmatpush1.xpose.msra.mxu0 0.0
    %445 = vmatprep.subr.mxu0 0.0
    %446 = vmatpush1.xpose.msra.mxu0 0.0
    %447 = vmatprep.subr.mxu0 0.0
    %448 = vmatpush1.xpose.msra.mxu0 0.0
    %449 = vmatprep.subr.mxu0 0.0
    %450 = vmatpush1.xpose.msra.mxu0 0.0
    %451 = vmatprep.subr.mxu0 0.0
    %452 = vmatpush1.xpose.msra.mxu0 0.0
    %453 = vmatprep.subr.mxu0 0.0
    %454 = vmatpush1.xpose.msra.mxu0 0.0
    %455 = vmatprep.subr.mxu0 0.0
    %456 = vmatpush1.xpose.msra.mxu0 0.0
    %457 = vmatprep.subr.mxu0 0.0
    %458 = vmatpush1.xpose.msra.mxu0 0.0
    %459 = vmatprep.subr.mxu0 0.0
    %460 = vmatpush1.xpose.msra.mxu0 0.0
    %461 = vmatprep.subr.mxu0 0.0
    %462 = vmatpush1.xpose.msra.mxu0 0.0
    %463 = vmatprep.subr.mxu0 0.0
    %464 = vmatpush1.xpose.msra.mxu0 0.0
    %465 = vmatprep.subr.mxu0 0.0
    %466 = vmatpush1.xpose.msra.mxu0 0.0
    %467 = vmatprep.subr.mxu0 0.0
    %468 = vmatpush1.xpose.msra.mxu0 0.0
    %469 = vmatprep.subr.mxu0 0.0
    %470 = vmatpush1.xpose.msra.mxu0 0.0
    %471 = vmatprep.subr.mxu0 0.0
    %472 = vmatpush1.xpose.msra.mxu0 0.0
    %473 = vmatprep.subr.mxu0 0.0
    %474 = vmatpush1.xpose.msra.mxu0 0.0
    %475 = vmatprep.subr.mxu0 0.0
    %476 = vmatpush1.xpose.msra.mxu0 0.0
    %477 = vmatprep.subr.mxu0 0.0
    %478 = vmatpush1.xpose.msra.mxu0 0.0
    %479 = vmatprep.subr.mxu0 0.0
    %480 = vmatpush1.xpose.msra.mxu0 0.0
    %481 = vmatprep.subr.mxu0 0.0
    %482 = vmatpush1.xpose.msra.mxu0 0.0
    %483 = vmatprep.subr.mxu0 0.0
    %484 = vmatpush1.xpose.msra.mxu0 0.0
    %485 = vmatprep.subr.mxu0 0.0
    %486 = vmatpush1.xpose.msra.mxu0 0.0
    %487 = vmatprep.subr.mxu0 0.0
    %488 = vmatpush1.xpose.msra.mxu0 0.0
    %489 = vmatprep.subr.mxu0 0.0
    %490 = vmatpush1.xpose.msra.mxu0 0.0
    %491 = vmatprep.subr.mxu0 0.0
    %492 = vmatpush1.xpose.msra.mxu0 0.0
    %493 = vmatprep.subr.mxu0 0.0
    %494 = vmatpush1.xpose.msra.mxu0 0.0
    %495 = vmatprep.mubr.f32.mxu0 0.0
    %496 = vmatmul.mubr.f32.gmra.mrb[0].mxu0 %v423
    %v497 = vpop.f32.mrb[0].mxu0
    %v498 = vadd.f32 %v113, %v497
    %v499 = vpop.f32.mrb[0].mxu0
    %500 = vmatprep.mubr.f32.mxu0 0.0
    %501 = vmatmul.mubr.f32.gmra.mrb[0].mxu0 %v425
    %v502 = vpop.f32.mrb[0].mxu0
    %v503 = vadd.f32 %v114, %v502
    %v504 = vpop.f32.mrb[0].mxu0
    %505 = vdwg.mxu0
    %v506 = vsel %vm305, %v498, -inf
    %507 = vmax.xlane.f32.xlu0 %v506
    %v508 = vpop.xlane.xlu0 %507
    %v509 = vsel %vm305, %v503, -inf
    %510 = vmax.xlane.f32.xlu0 %v509
    %v511 = vpop.xlane.xlu0 %510
    %v512 = vsub.f32 %v498, %v508
    %v513 = vsub.f32 %v503, %v511
    %v514 = vmul.f32 %v512, 1.442695
    %v515 = vpow.pop %v514
    %v516 = vmul.f32 %v513, 1.442695
    %v517 = vpow.pop %v516
    %v518 = vsel %vm305, %v515, 0.0
    %519 = vadd.xlane.f32.xlu0 %v518
    %v520 = vpop.xlane.xlu0 %519
    %v521 = vsel %vm305, %v517, 0.0
    %522 = vadd.xlane.f32.xlu0 %v521
    %v523 = vpop.xlane.xlu0 %522
    %v524 = vrcp.pop %v520
    %v525 = vrcp.pop %v523
    %v526 = vmul.f32 %v515, %v524
    %v527 = vmul.f32 %v517, %v525
    %528 = vrot.lane.b32.xlu0 %v199, 56
    %v529 = vpop.permute.xlu0 %528
    %530 = vrot.lane.b32.xlu0 %v204, 56
    %v531 = vpop.permute.xlu0 %530
    %v535 = vsel %vm305, %v526, 0
    %v538 = vsel %vm305, %v527, 0
    %540 = vmatprep.subr.mxu0 0.0
    %541 = vmatpush1.msra.mxu0 %v529
    %542 = vmatprep.subr.mxu0 0.0
    %543 = vmatpush1.msra.mxu0 %v531
    %544 = vmatprep.subr.mxu0 0.0
    %545 = vmatpush1.msra.mxu0 0.0
    %546 = vmatprep.subr.mxu0 0.0
    %547 = vmatpush1.msra.mxu0 0.0
    %548 = vmatprep.subr.mxu0 0.0
    %549 = vmatpush1.msra.mxu0 0.0
    %550 = vmatprep.subr.mxu0 0.0
    %551 = vmatpush1.msra.mxu0 0.0
    %552 = vmatprep.subr.mxu0 0.0
    %553 = vmatpush1.msra.mxu0 0.0
    %554 = vmatprep.subr.mxu0 0.0
    %555 = vmatpush1.msra.mxu0 0.0
    %556 = vmatprep.subr.mxu0 0.0
    %557 = vmatpush1.msra.mxu0 0.0
    %558 = vmatprep.subr.mxu0 0.0
    %559 = vmatpush1.msra.mxu0 0.0
    %560 = vmatprep.subr.mxu0 0.0
    %561 = vmatpush1.msra.mxu0 0.0
    %562 = vmatprep.subr.mxu0 0.0
    %563 = vmatpush1.msra.mxu0 0.0
    %564 = vmatprep.subr.mxu0 0.0
    %565 = vmatpush1.msra.mxu0 0.0
    %566 = vmatprep.subr.mxu0 0.0
    %567 = vmatpush1.msra.mxu0 0.0
    %568 = vmatprep.subr.mxu0 0.0
    %569 = vmatpush1.msra.mxu0 0.0
    %570 = vmatprep.subr.mxu0 0.0
    %571 = vmatpush1.msra.mxu0 0.0
    %572 = vmatprep.subr.mxu0 0.0
    %573 = vmatpush1.msra.mxu0 0.0
    %574 = vmatprep.subr.mxu0 0.0
    %575 = vmatpush1.msra.mxu0 0.0
    %576 = vmatprep.subr.mxu0 0.0
    %577 = vmatpush1.msra.mxu0 0.0
    %578 = vmatprep.subr.mxu0 0.0
    %579 = vmatpush1.msra.mxu0 0.0
    %580 = vmatprep.subr.mxu0 0.0
    %581 = vmatpush1.msra.mxu0 0.0
    %582 = vmatprep.subr.mxu0 0.0
    %583 = vmatpush1.msra.mxu0 0.0
    %584 = vmatprep.subr.mxu0 0.0
    %585 = vmatpush1.msra.mxu0 0.0
    %586 = vmatprep.subr.mxu0 0.0
    %587 = vmatpush1.msra.mxu0 0.0
    %588 = vmatprep.subr.mxu0 0.0
    %589 = vmatpush1.msra.mxu0 0.0
    %590 = vmatprep.subr.mxu0 0.0
    %591 = vmatpush1.msra.mxu0 0.0
    %592 = vmatprep.subr.mxu0 0.0
    %593 = vmatpush1.msra.mxu0 0.0
    %594 = vmatprep.subr.mxu0 0.0
    %595 = vmatpush1.msra.mxu0 0.0
    %596 = vmatprep.subr.mxu0 0.0
    %597 = vmatpush1.msra.mxu0 0.0
    %598 = vmatprep.subr.mxu0 0.0
    %599 = vmatpush1.msra.mxu0 0.0
    %600 = vmatprep.subr.mxu0 0.0
    %601 = vmatpush1.msra.mxu0 0.0
    %602 = vmatprep.subr.mxu0 0.0
    %603 = vmatpush1.msra.mxu0 0.0
    %604 = vmatprep.mubr.f32.mxu0 0.0
    %605 = vmatmul.mubr.f32.gmra.mrb[0].mxu0 %v535
    %v606 = vpop.f32.mrb[0].mxu0
    %v607 = vadd.f32 0.0, %v606
    %v608 = vpop.f32.mrb[0].mxu0
    %609 = vmatprep.mubr.f32.mxu0 0.0
    %610 = vmatmul.mubr.f32.gmra.mrb[0].mxu0 %v538
    %v611 = vpop.f32.mrb[0].mxu0
    %v612 = vadd.f32 0.0, %v611
    %v613 = vpop.f32.mrb[0].mxu0
    %614 = vdwg.mxu0
    %v616 = vsel %vm219, %v607, 0
    %v619 = vsel %vm219, %v612, 0
    %621 = vmatprep.subr.mxu0 0.0
    %622 = vmatpush1.msra.mxu0 %v210
    %623 = vmatprep.subr.mxu0 0.0
    %624 = vmatpush1.msra.mxu0 0.0
    %625 = vmatprep.subr.mxu0 0.0
    %626 = vmatpush1.msra.mxu0 0.0
    %627 = vmatprep.subr.mxu0 0.0
    %628 = vmatpush1.msra.mxu0 0.0
    %629 = vmatprep.subr.mxu0 0.0
    %630 = vmatpush1.msra.mxu0 0.0
    %631 = vmatprep.subr.mxu0 0.0
    %632 = vmatpush1.msra.mxu0 0.0
    %633 = vmatprep.subr.mxu0 0.0
    %634 = vmatpush1.msra.mxu0 0.0
    %635 = vmatprep.subr.mxu0 0.0
    %636 = vmatpush1.msra.mxu0 0.0
    %637 = vmatprep.subr.mxu0 0.0
    %638 = vmatpush1.msra.mxu0 0.0
    %639 = vmatprep.subr.mxu0 0.0
    %640 = vmatpush1.msra.mxu0 0.0
    %641 = vmatprep.subr.mxu0 0.0
    %642 = vmatpush1.msra.mxu0 0.0
    %643 = vmatprep.subr.mxu0 0.0
    %644 = vmatpush1.msra.mxu0 0.0
    %645 = vmatprep.subr.mxu0 0.0
    %646 = vmatpush1.msra.mxu0 0.0
    %647 = vmatprep.subr.mxu0 0.0
    %648 = vmatpush1.msra.mxu0 0.0
    %649 = vmatprep.subr.mxu0 0.0
    %650 = vmatpush1.msra.mxu0 0.0
    %651 = vmatprep.subr.mxu0 0.0
    %652 = vmatpush1.msra.mxu0 0.0
    %653 = vmatprep.subr.mxu0 0.0
    %654 = vmatpush1.msra.mxu0 0.0
    %655 = vmatprep.subr.mxu0 0.0
    %656 = vmatpush1.msra.mxu0 0.0
    %657 = vmatprep.subr.mxu0 0.0
    %658 = vmatpush1.msra.mxu0 0.0
    %659 = vmatprep.subr.mxu0 0.0
    %660 = vmatpush1.msra.mxu0 0.0
    %661 = vmatprep.subr.mxu0 0.0
    %662 = vmatpush1.msra.mxu0 0.0
    %663 = vmatprep.subr.mxu0 0.0
    %664 = vmatpush1.msra.mxu0 0.0
    %665 = vmatprep.subr.mxu0 0.0
    %666 = vmatpush1.msra.mxu0 0.0
    %667 = vmatprep.subr.mxu0 0.0
    %668 = vmatpush1.msra.mxu0 0.0
    %669 = vmatprep.subr.mxu0 0.0
    %670 = vmatpush1.msra.mxu0 0.0
    %671 = vmatprep.subr.mxu0 0.0
    %672 = vmatpush1.msra.mxu0 0.0
    %673 = vmatprep.subr.mxu0 0.0
    %674 = vmatpush1.msra.mxu0 0.0
    %675 = vmatprep.subr.mxu0 0.0
    %676 = vmatpush1.msra.mxu0 0.0
    %677 = vmatprep.subr.mxu0 0.0
    %678 = vmatpush1.msra.mxu0 0.0
    %679 = vmatprep.subr.mxu0 0.0
    %680 = vmatpush1.msra.mxu0 0.0
    %681 = vmatprep.subr.mxu0 0.0
    %682 = vmatpush1.msra.mxu0 0.0
    %683 = vmatprep.subr.mxu0 0.0
    %684 = vmatpush1.msra.mxu0 0.0
    %685 = vmatprep.mubr.f32.mxu0 0.0
    %686 = vmatmul.mubr.f32.gmra.mrb[0].mxu0 %v616
    %v687 = vpop.f32.mrb[0].mxu0
    %v688 = vadd.f32 0.0, %v687
    %v689 = vpop.f32.mrb[0].mxu0
    %690 = vmatprep.mubr.f32.mxu0 0.0
    %691 = vmatmul.mubr.f32.gmra.mrb[0].mxu0 %v619
    %v692 = vpop.f32.mrb[0].mxu0
    %v693 = vadd.f32 0.0, %v692
    %v694 = vpop.f32.mrb[0].mxu0
    %695 = vdwg.mxu0
    %v697 = vsel %vm219, %v407, 0
    %v700 = vsel %vm219, %v412, 0
    %702 = vmatprep.subr.mxu0 0.0
    %703 = vmatpush1.msra.mxu0 %v209
    %704 = vmatprep.subr.mxu0 0.0
    %705 = vmatpush1.msra.mxu0 0.0
    %706 = vmatprep.subr.mxu0 0.0
    %707 = vmatpush1.msra.mxu0 0.0
    %708 = vmatprep.subr.mxu0 0.0
    %709 = vmatpush1.msra.mxu0 0.0
    %710 = vmatprep.subr.mxu0 0.0
    %711 = vmatpush1.msra.mxu0 0.0
    %712 = vmatprep.subr.mxu0 0.0
    %713 = vmatpush1.msra.mxu0 0.0
    %714 = vmatprep.subr.mxu0 0.0
    %715 = vmatpush1.msra.mxu0 0.0
    %716 = vmatprep.subr.mxu0 0.0
    %717 = vmatpush1.msra.mxu0 0.0
    %718 = vmatprep.subr.mxu0 0.0
    %719 = vmatpush1.msra.mxu0 0.0
    %720 = vmatprep.subr.mxu0 0.0
    %721 = vmatpush1.msra.mxu0 0.0
    %722 = vmatprep.subr.mxu0 0.0
    %723 = vmatpush1.msra.mxu0 0.0
    %724 = vmatprep.subr.mxu0 0.0
    %725 = vmatpush1.msra.mxu0 0.0
    %726 = vmatprep.subr.mxu0 0.0
    %727 = vmatpush1.msra.mxu0 0.0
    %728 = vmatprep.subr.mxu0 0.0
    %729 = vmatpush1.msra.mxu0 0.0
    %730 = vmatprep.subr.mxu0 0.0
    %731 = vmatpush1.msra.mxu0 0.0
    %732 = vmatprep.subr.mxu0 0.0
    %733 = vmatpush1.msra.mxu0 0.0
    %734 = vmatprep.subr.mxu0 0.0
    %735 = vmatpush1.msra.mxu0 0.0
    %736 = vmatprep.subr.mxu0 0.0
    %737 = vmatpush1.msra.mxu0 0.0
    %738 = vmatprep.subr.mxu0 0.0
    %739 = vmatpush1.msra.mxu0 0.0
    %740 = vmatprep.subr.mxu0 0.0
    %741 = vmatpush1.msra.mxu0 0.0
    %742 = vmatprep.subr.mxu0 0.0
    %743 = vmatpush1.msra.mxu0 0.0
    %744 = vmatprep.subr.mxu0 0.0
    %745 = vmatpush1.msra.mxu0 0.0
    %746 = vmatprep.subr.mxu0 0.0
    %747 = vmatpush1.msra.mxu0 0.0
    %748 = vmatprep.subr.mxu0 0.0
    %749 = vmatpush1.msra.mxu0 0.0
    %750 = vmatprep.subr.mxu0 0.0
    %751 = vmatpush1.msra.mxu0 0.0
    %752 = vmatprep.subr.mxu0 0.0
    %753 = vmatpush1.msra.mxu0 0.0
    %754 = vmatprep.subr.mxu0 0.0
    %755 = vmatpush1.msra.mxu0 0.0
    %756 = vmatprep.subr.mxu0 0.0
    %757 = vmatpush1.msra.mxu0 0.0
    %758 = vmatprep.subr.mxu0 0.0
    %759 = vmatpush1.msra.mxu0 0.0
    %760 = vmatprep.subr.mxu0 0.0
    %761 = vmatpush1.msra.mxu0 0.0
    %762 = vmatprep.subr.mxu0 0.0
    %763 = vmatpush1.msra.mxu0 0.0
    %764 = vmatprep.subr.mxu0 0.0
    %765 = vmatpush1.msra.mxu0 0.0
    %766 = vmatprep.mubr.f32.mxu0 0.0
    %767 = vmatmul.mubr.f32.gmra.mrb[0].mxu0 %v697
    %v768 = vpop.f32.mrb[0].mxu0
    %v769 = vadd.f32 %v688, %v768
    %v770 = vpop.f32.mrb[0].mxu0
    %771 = vmatprep.mubr.f32.mxu0 0.0
    %772 = vmatmul.mubr.f32.gmra.mrb[0].mxu0 %v700
    %v773 = vpop.f32.mrb[0].mxu0
    %v774 = vadd.f32 %v693, %v773
    %v775 = vpop.f32.mrb[0].mxu0
    %776 = vdwg.mxu0
    %777 = vrot.lane.b32.xlu0 %v207, 112
    %v778 = vpop.permute.xlu0 %777
    %779 = vrot.lane.b32.xlu0 %v208, 112
    %v780 = vpop.permute.xlu0 %779
    %781 = vrot.lane.b32.xlu0 %v199, 80
    %v782 = vpop.permute.xlu0 %781
    %783 = vrot.lane.b32.xlu0 %v204, 80
    %v784 = vpop.permute.xlu0 %783
    %v785 = vsel %vm219, %v778, 0
    %v787 = vsel %vm219, %v780, 0
    %v789 = vsel %vm219, %v782, 0
    %v791 = vsel %vm219, %v784, 0
    %793 = vmatprep.subr.mxu0 0.0
    %794 = vmatpush1.xpose.msra.mxu0 %v789
    %795 = vmatprep.subr.mxu0 0.0
    %796 = vmatpush1.xpose.msra.mxu0 %v791
    %797 = vmatprep.subr.mxu0 0.0
    %798 = vmatpush1.xpose.msra.mxu0 0.0
    %799 = vmatprep.subr.mxu0 0.0
    %800 = vmatpush1.xpose.msra.mxu0 0.0
    %801 = vmatprep.subr.mxu0 0.0
    %802 = vmatpush1.xpose.msra.mxu0 0.0
    %803 = vmatprep.subr.mxu0 0.0
    %804 = vmatpush1.xpose.msra.mxu0 0.0
    %805 = vmatprep.subr.mxu0 0.0
    %806 = vmatpush1.xpose.msra.mxu0 0.0
    %807 = vmatprep.subr.mxu0 0.0
    %808 = vmatpush1.xpose.msra.mxu0 0.0
    %809 = vmatprep.subr.mxu0 0.0
    %810 = vmatpush1.xpose.msra.mxu0 0.0
    %811 = vmatprep.subr.mxu0 0.0
    %812 = vmatpush1.xpose.msra.mxu0 0.0
    %813 = vmatprep.subr.mxu0 0.0
    %814 = vmatpush1.xpose.msra.mxu0 0.0
    %815 = vmatprep.subr.mxu0 0.0
    %816 = vmatpush1.xpose.msra.mxu0 0.0
    %817 = vmatprep.subr.mxu0 0.0
    %818 = vmatpush1.xpose.msra.mxu0 0.0
    %819 = vmatprep.subr.mxu0 0.0
    %820 = vmatpush1.xpose.msra.mxu0 0.0
    %821 = vmatprep.subr.mxu0 0.0
    %822 = vmatpush1.xpose.msra.mxu0 0.0
    %823 = vmatprep.subr.mxu0 0.0
    %824 = vmatpush1.xpose.msra.mxu0 0.0
    %825 = vmatprep.subr.mxu0 0.0
    %826 = vmatpush1.xpose.msra.mxu0 0.0
    %827 = vmatprep.subr.mxu0 0.0
    %828 = vmatpush1.xpose.msra.mxu0 0.0
    %829 = vmatprep.subr.mxu0 0.0
    %830 = vmatpush1.xpose.msra.mxu0 0.0
    %831 = vmatprep.subr.mxu0 0.0
    %832 = vmatpush1.xpose.msra.mxu0 0.0
    %833 = vmatprep.subr.mxu0 0.0
    %834 = vmatpush1.xpose.msra.mxu0 0.0
    %835 = vmatprep.subr.mxu0 0.0
    %836 = vmatpush1.xpose.msra.mxu0 0.0
    %837 = vmatprep.subr.mxu0 0.0
    %838 = vmatpush1.xpose.msra.mxu0 0.0
    %839 = vmatprep.subr.mxu0 0.0
    %840 = vmatpush1.xpose.msra.mxu0 0.0
    %841 = vmatprep.subr.mxu0 0.0
    %842 = vmatpush1.xpose.msra.mxu0 0.0
    %843 = vmatprep.subr.mxu0 0.0
    %844 = vmatpush1.xpose.msra.mxu0 0.0
    %845 = vmatprep.subr.mxu0 0.0
    %846 = vmatpush1.xpose.msra.mxu0 0.0
    %847 = vmatprep.subr.mxu0 0.0
    %848 = vmatpush1.xpose.msra.mxu0 0.0
    %849 = vmatprep.subr.mxu0 0.0
    %850 = vmatpush1.xpose.msra.mxu0 0.0
    %851 = vmatprep.subr.mxu0 0.0
    %852 = vmatpush1.xpose.msra.mxu0 0.0
    %853 = vmatprep.subr.mxu0 0.0
    %854 = vmatpush1.xpose.msra.mxu0 0.0
    %855 = vmatprep.subr.mxu0 0.0
    %856 = vmatpush1.xpose.msra.mxu0 0.0
    %857 = vmatprep.mubr.f32.mxu0 0.0
    %858 = vmatmul.mubr.f32.gmra.mrb[0].mxu0 %v785
    %v859 = vpop.f32.mrb[0].mxu0
    %v860 = vadd.f32 %v113, %v859
    %v861 = vpop.f32.mrb[0].mxu0
    %862 = vmatprep.mubr.f32.mxu0 0.0
    %863 = vmatmul.mubr.f32.gmra.mrb[0].mxu0 %v787
    %v864 = vpop.f32.mrb[0].mxu0
    %v865 = vadd.f32 %v114, %v864
    %v866 = vpop.f32.mrb[0].mxu0
    %867 = vdwg.mxu0
    %v868 = vsel %vm305, %v860, -inf
    %869 = vmax.xlane.f32.xlu0 %v868
    %v870 = vpop.xlane.xlu0 %869
    %v871 = vsel %vm305, %v865, -inf
    %872 = vmax.xlane.f32.xlu0 %v871
    %v873 = vpop.xlane.xlu0 %872
    %v874 = vsub.f32 %v860, %v870
    %v875 = vsub.f32 %v865, %v873
    %v876 = vmul.f32 %v874, 1.442695
    %v877 = vpow.pop %v876
    %v878 = vmul.f32 %v875, 1.442695
    %v879 = vpow.pop %v878
    %v880 = vsel %vm305, %v877, 0.0
    %881 = vadd.xlane.f32.xlu0 %v880
    %v882 = vpop.xlane.xlu0 %881
    %v883 = vsel %vm305, %v879, 0.0
    %884 = vadd.xlane.f32.xlu0 %v883
    %v885 = vpop.xlane.xlu0 %884
    %v886 = vrcp.pop %v882
    %v887 = vrcp.pop %v885
    %v888 = vmul.f32 %v877, %v886
    %v889 = vmul.f32 %v879, %v887
    %890 = vrot.lane.b32.xlu0 %v199, 48
    %v891 = vpop.permute.xlu0 %890
    %892 = vrot.lane.b32.xlu0 %v204, 48
    %v893 = vpop.permute.xlu0 %892
    %v897 = vsel %vm305, %v888, 0
    %v900 = vsel %vm305, %v889, 0
    %902 = vmatprep.subr.mxu0 0.0
    %903 = vmatpush1.msra.mxu0 %v891
    %904 = vmatprep.subr.mxu0 0.0
    %905 = vmatpush1.msra.mxu0 %v893
    %906 = vmatprep.subr.mxu0 0.0
    %907 = vmatpush1.msra.mxu0 0.0
    %908 = vmatprep.subr.mxu0 0.0
    %909 = vmatpush1.msra.mxu0 0.0
    %910 = vmatprep.subr.mxu0 0.0
    %911 = vmatpush1.msra.mxu0 0.0
    %912 = vmatprep.subr.mxu0 0.0
    %913 = vmatpush1.msra.mxu0 0.0
    %914 = vmatprep.subr.mxu0 0.0
    %915 = vmatpush1.msra.mxu0 0.0
    %916 = vmatprep.subr.mxu0 0.0
    %917 = vmatpush1.msra.mxu0 0.0
    %918 = vmatprep.subr.mxu0 0.0
    %919 = vmatpush1.msra.mxu0 0.0
    %920 = vmatprep.subr.mxu0 0.0
    %921 = vmatpush1.msra.mxu0 0.0
    %922 = vmatprep.subr.mxu0 0.0
    %923 = vmatpush1.msra.mxu0 0.0
    %924 = vmatprep.subr.mxu0 0.0
    %925 = vmatpush1.msra.mxu0 0.0
    %926 = vmatprep.subr.mxu0 0.0
    %927 = vmatpush1.msra.mxu0 0.0
    %928 = vmatprep.subr.mxu0 0.0
    %929 = vmatpush1.msra.mxu0 0.0
    %930 = vmatprep.subr.mxu0 0.0
    %931 = vmatpush1.msra.mxu0 0.0
    %932 = vmatprep.subr.mxu0 0.0
    %933 = vmatpush1.msra.mxu0 0.0
    %934 = vmatprep.subr.mxu0 0.0
    %935 = vmatpush1.msra.mxu0 0.0
    %936 = vmatprep.subr.mxu0 0.0
    %937 = vmatpush1.msra.mxu0 0.0
    %938 = vmatprep.subr.mxu0 0.0
    %939 = vmatpush1.msra.mxu0 0.0
    %940 = vmatprep.subr.mxu0 0.0
    %941 = vmatpush1.msra.mxu0 0.0
    %942 = vmatprep.subr.mxu0 0.0
    %943 = vmatpush1.msra.mxu0 0.0
    %944 = vmatprep.subr.mxu0 0.0
    %945 = vmatpush1.msra.mxu0 0.0
    %946 = vmatprep.subr.mxu0 0.0
    %947 = vmatpush1.msra.mxu0 0.0
    %948 = vmatprep.subr.mxu0 0.0
    %949 = vmatpush1.msra.mxu0 0.0
    %950 = vmatprep.subr.mxu0 0.0
    %951 = vmatpush1.msra.mxu0 0.0
    %952 = vmatprep.subr.mxu0 0.0
    %953 = vmatpush1.msra.mxu0 0.0
    %954 = vmatprep.subr.mxu0 0.0
    %955 = vmatpush1.msra.mxu0 0.0
    %956 = vmatprep.subr.mxu0 0.0
    %957 = vmatpush1.msra.mxu0 0.0
    %958 = vmatprep.subr.mxu0 0.0
    %959 = vmatpush1.msra.mxu0 0.0
    %960 = vmatprep.subr.mxu0 0.0
    %961 = vmatpush1.msra.mxu0 0.0
    %962 = vmatprep.subr.mxu0 0.0
    %963 = vmatpush1.msra.mxu0 0.0
    %964 = vmatprep.subr.mxu0 0.0
    %965 = vmatpush1.msra.mxu0 0.0
    %966 = vmatprep.mubr.f32.mxu0 0.0
    %967 = vmatmul.mubr.f32.gmra.mrb[0].mxu0 %v897
    %v968 = vpop.f32.mrb[0].mxu0
    %v969 = vadd.f32 0.0, %v968
    %v970 = vpop.f32.mrb[0].mxu0
    %971 = vmatprep.mubr.f32.mxu0 0.0
    %972 = vmatmul.mubr.f32.gmra.mrb[0].mxu0 %v900
    %v973 = vpop.f32.mrb[0].mxu0
    %v974 = vadd.f32 0.0, %v973
    %v975 = vpop.f32.mrb[0].mxu0
    %976 = vdwg.mxu0
    %v978 = vsel %vm219, %v969, 0
    %v981 = vsel %vm219, %v974, 0
    %983 = vmatprep.subr.mxu0 0.0
    %984 = vmatpush1.msra.mxu0 %v211
    %985 = vmatprep.subr.mxu0 0.0
    %986 = vmatpush1.msra.mxu0 0.0
    %987 = vmatprep.subr.mxu0 0.0
    %988 = vmatpush1.msra.mxu0 0.0
    %989 = vmatprep.subr.mxu0 0.0
    %990 = vmatpush1.msra.mxu0 0.0
    %991 = vmatprep.subr.mxu0 0.0
    %992 = vmatpush1.msra.mxu0 0.0
    %993 = vmatprep.subr.mxu0 0.0
    %994 = vmatpush1.msra.mxu0 0.0
    %995 = vmatprep.subr.mxu0 0.0
    %996 = vmatpush1.msra.mxu0 0.0
    %997 = vmatprep.subr.mxu0 0.0
    %998 = vmatpush1.msra.mxu0 0.0
    %999 = vmatprep.subr.mxu0 0.0
    %1000 = vmatpush1.msra.mxu0 0.0
    %1001 = vmatprep.subr.mxu0 0.0
    %1002 = vmatpush1.msra.mxu0 0.0
    %1003 = vmatprep.subr.mxu0 0.0
    %1004 = vmatpush1.msra.mxu0 0.0
    %1005 = vmatprep.subr.mxu0 0.0
    %1006 = vmatpush1.msra.mxu0 0.0
    %1007 = vmatprep.subr.mxu0 0.0
    %1008 = vmatpush1.msra.mxu0 0.0
    %1009 = vmatprep.subr.mxu0 0.0
    %1010 = vmatpush1.msra.mxu0 0.0
    %1011 = vmatprep.subr.mxu0 0.0
    %1012 = vmatpush1.msra.mxu0 0.0
    %1013 = vmatprep.subr.mxu0 0.0
    %1014 = vmatpush1.msra.mxu0 0.0
    %1015 = vmatprep.subr.mxu0 0.0
    %1016 = vmatpush1.msra.mxu0 0.0
    %1017 = vmatprep.subr.mxu0 0.0
    %1018 = vmatpush1.msra.mxu0 0.0
    %1019 = vmatprep.subr.mxu0 0.0
    %1020 = vmatpush1.msra.mxu0 0.0
    %1021 = vmatprep.subr.mxu0 0.0
    %1022 = vmatpush1.msra.mxu0 0.0
    %1023 = vmatprep.subr.mxu0 0.0
    %1024 = vmatpush1.msra.mxu0 0.0
    %1025 = vmatprep.subr.mxu0 0.0
    %1026 = vmatpush1.msra.mxu0 0.0
    %1027 = vmatprep.subr.mxu0 0.0
    %1028 = vmatpush1.msra.mxu0 0.0
    %1029 = vmatprep.subr.mxu0 0.0
    %1030 = vmatpush1.msra.mxu0 0.0
    %1031 = vmatprep.subr.mxu0 0.0
    %1032 = vmatpush1.msra.mxu0 0.0
    %1033 = vmatprep.subr.mxu0 0.0
    %1034 = vmatpush1.msra.mxu0 0.0
    %1035 = vmatprep.subr.mxu0 0.0
    %1036 = vmatpush1.msra.mxu0 0.0
    %1037 = vmatprep.subr.mxu0 0.0
    %1038 = vmatpush1.msra.mxu0 0.0
    %1039 = vmatprep.subr.mxu0 0.0
    %1040 = vmatpush1.msra.mxu0 0.0
    %1041 = vmatprep.subr.mxu0 0.0
    %1042 = vmatpush1.msra.mxu0 0.0
    %1043 = vmatprep.subr.mxu0 0.0
    %1044 = vmatpush1.msra.mxu0 0.0
    %1045 = vmatprep.subr.mxu0 0.0
    %1046 = vmatpush1.msra.mxu0 0.0
    %1047 = vmatprep.mubr.f32.mxu0 0.0
    %1048 = vmatmul.mubr.f32.gmra.mrb[0].mxu0 %v978
    %v1049 = vpop.f32.mrb[0].mxu0
    %v1050 = vadd.f32 0.0, %v1049
    %v1051 = vpop.f32.mrb[0].mxu0
    %1052 = vmatprep.mubr.f32.mxu0 0.0
    %1053 = vmatmul.mubr.f32.gmra.mrb[0].mxu0 %v981
    %v1054 = vpop.f32.mrb[0].mxu0
    %v1055 = vadd.f32 0.0, %v1054
    %v1056 = vpop.f32.mrb[0].mxu0
    %1057 = vdwg.mxu0
    %v1058 = vadd.f32 %v769, %v1050
    %v1059 = vadd.f32 %v774, %v1055
    %1060 = vrot.lane.b32.xlu0 %v207, 104
    %v1061 = vpop.permute.xlu0 %1060
    %1062 = vrot.lane.b32.xlu0 %v208, 104
    %v1063 = vpop.permute.xlu0 %1062
    %1064 = vrot.lane.b32.xlu0 %v199, 72
    %v1065 = vpop.permute.xlu0 %1064
    %1066 = vrot.lane.b32.xlu0 %v204, 72
    %v1067 = vpop.permute.xlu0 %1066
    %v1068 = vsel %vm219, %v1061, 0
    %v1070 = vsel %vm219, %v1063, 0
    %v1072 = vsel %vm219, %v1065, 0
    %v1074 = vsel %vm219, %v1067, 0
    %1076 = vmatprep.subr.mxu0 0.0
    %1077 = vmatpush1.xpose.msra.mxu0 %v1072
    %1078 = vmatprep.subr.mxu0 0.0
    %1079 = vmatpush1.xpose.msra.mxu0 %v1074
    %1080 = vmatprep.subr.mxu0 0.0
    %1081 = vmatpush1.xpose.msra.mxu0 0.0
    %1082 = vmatprep.subr.mxu0 0.0
    %1083 = vmatpush1.xpose.msra.mxu0 0.0
    %1084 = vmatprep.subr.mxu0 0.0
    %1085 = vmatpush1.xpose.msra.mxu0 0.0
    %1086 = vmatprep.subr.mxu0 0.0
    %1087 = vmatpush1.xpose.msra.mxu0 0.0
    %1088 = vmatprep.subr.mxu0 0.0
    %1089 = vmatpush1.xpose.msra.mxu0 0.0
    %1090 = vmatprep.subr.mxu0 0.0
    %1091 = vmatpush1.xpose.msra.mxu0 0.0
    %1092 = vmatprep.subr.mxu0 0.0
    %1093 = vmatpush1.xpose.msra.mxu0 0.0
    %1094 = vmatprep.subr.mxu0 0.0
    %1095 = vmatpush1.xpose.msra.mxu0 0.0
    %1096 = vmatprep.subr.mxu0 0.0
    %1097 = vmatpush1.xpose.msra.mxu0 0.0
    %1098 = vmatprep.subr.mxu0 0.0
    %1099 = vmatpush1.xpose.msra.mxu0 0.0
    %1100 = vmatprep.subr.mxu0 0.0
    %1101 = vmatpush1.xpose.msra.mxu0 0.0
    %1102 = vmatprep.subr.mxu0 0.0
    %1103 = vmatpush1.xpose.msra.mxu0 0.0
    %1104 = vmatprep.subr.mxu0 0.0
    %1105 = vmatpush1.xpose.msra.mxu0 0.0
    %1106 = vmatprep.subr.mxu0 0.0
    %1107 = vmatpush1.xpose.msra.mxu0 0.0
    %1108 = vmatprep.subr.mxu0 0.0
    %1109 = vmatpush1.xpose.msra.mxu0 0.0
    %1110 = vmatprep.subr.mxu0 0.0
    %1111 = vmatpush1.xpose.msra.mxu0 0.0
    %1112 = vmatprep.subr.mxu0 0.0
    %1113 = vmatpush1.xpose.msra.mxu0 0.0
    %1114 = vmatprep.subr.mxu0 0.0
    %1115 = vmatpush1.xpose.msra.mxu0 0.0
    %1116 = vmatprep.subr.mxu0 0.0
    %1117 = vmatpush1.xpose.msra.mxu0 0.0
    %1118 = vmatprep.subr.mxu0 0.0
    %1119 = vmatpush1.xpose.msra.mxu0 0.0
    %1120 = vmatprep.subr.mxu0 0.0
    %1121 = vmatpush1.xpose.msra.mxu0 0.0
    %1122 = vmatprep.subr.mxu0 0.0
    %1123 = vmatpush1.xpose.msra.mxu0 0.0
    %1124 = vmatprep.subr.mxu0 0.0
    %1125 = vmatpush1.xpose.msra.mxu0 0.0
    %1126 = vmatprep.subr.mxu0 0.0
    %1127 = vmatpush1.xpose.msra.mxu0 0.0
    %1128 = vmatprep.subr.mxu0 0.0
    %1129 = vmatpush1.xpose.msra.mxu0 0.0
    %1130 = vmatprep.subr.mxu0 0.0
    %1131 = vmatpush1.xpose.msra.mxu0 0.0
    %1132 = vmatprep.subr.mxu0 0.0
    %1133 = vmatpush1.xpose.msra.mxu0 0.0
    %1134 = vmatprep.subr.mxu0 0.0
    %1135 = vmatpush1.xpose.msra.mxu0 0.0
    %1136 = vmatprep.subr.mxu0 0.0
    %1137 = vmatpush1.xpose.msra.mxu0 0.0
    %1138 = vmatprep.subr.mxu0 0.0
    %1139 = vmatpush1.xpose.msra.mxu0 0.0
    %1140 = vmatprep.mubr.f32.mxu0 0.0
    %1141 = vmatmul.mubr.f32.gmra.mrb[0].mxu0 %v1068
    %v1142 = vpop.f32.mrb[0].mxu0
    %v1143 = vadd.f32 %v113, %v1142
    %v1144 = vpop.f32.mrb[0].mxu0
    %1145 = vmatprep.mubr.f32.mxu0 0.0
    %1146 = vmatmul.mubr.f32.gmra.mrb[0].mxu0 %v1070
    %v1147 = vpop.f32.mrb[0].mxu0
    %v1148 = vadd.f32 %v114, %v1147
    %v1149 = vpop.f32.mrb[0].mxu0
    %1150 = vdwg.mxu0
    %v1151 = vsel %vm305, %v1143, -inf
    %1152 = vmax.xlane.f32.xlu0 %v1151
    %v1153 = vpop.xlane.xlu0 %1152
    %v1154 = vsel %vm305, %v1148, -inf
    %1155 = vmax.xlane.f32.xlu0 %v1154
    %v1156 = vpop.xlane.xlu0 %1155
    %v1157 = vsub.f32 %v1143, %v1153
    %v1158 = vsub.f32 %v1148, %v1156
    %v1159 = vmul.f32 %v1157, 1.442695
    %v1160 = vpow.pop %v1159
    %v1161 = vmul.f32 %v1158, 1.442695
    %v1162 = vpow.pop %v1161
    %v1163 = vsel %vm305, %v1160, 0.0
    %1164 = vadd.xlane.f32.xlu0 %v1163
    %v1165 = vpop.xlane.xlu0 %1164
    %v1166 = vsel %vm305, %v1162, 0.0
    %1167 = vadd.xlane.f32.xlu0 %v1166
    %v1168 = vpop.xlane.xlu0 %1167
    %v1169 = vrcp.pop %v1165
    %v1170 = vrcp.pop %v1168
    %v1171 = vmul.f32 %v1160, %v1169
    %v1172 = vmul.f32 %v1162, %v1170
    %1173 = vrot.lane.b32.xlu0 %v199, 40
    %v1174 = vpop.permute.xlu0 %1173
    %1175 = vrot.lane.b32.xlu0 %v204, 40
    %v1176 = vpop.permute.xlu0 %1175
    %v1180 = vsel %vm305, %v1171, 0
    %v1183 = vsel %vm305, %v1172, 0
    %1185 = vmatprep.subr.mxu0 0.0
    %1186 = vmatpush1.msra.mxu0 %v1174
    %1187 = vmatprep.subr.mxu0 0.0
    %1188 = vmatpush1.msra.mxu0 %v1176
    %1189 = vmatprep.subr.mxu0 0.0
    %1190 = vmatpush1.msra.mxu0 0.0
    %1191 = vmatprep.subr.mxu0 0.0
    %1192 = vmatpush1.msra.mxu0 0.0
    %1193 = vmatprep.subr.mxu0 0.0
    %1194 = vmatpush1.msra.mxu0 0.0
    %1195 = vmatprep.subr.mxu0 0.0
    %1196 = vmatpush1.msra.mxu0 0.0
    %1197 = vmatprep.subr.mxu0 0.0
    %1198 = vmatpush1.msra.mxu0 0.0
    %1199 = vmatprep.subr.mxu0 0.0
    %1200 = vmatpush1.msra.mxu0 0.0
    %1201 = vmatprep.subr.mxu0 0.0
    %1202 = vmatpush1.msra.mxu0 0.0
    %1203 = vmatprep.subr.mxu0 0.0
    %1204 = vmatpush1.msra.mxu0 0.0
    %1205 = vmatprep.subr.mxu0 0.0
    %1206 = vmatpush1.msra.mxu0 0.0
    %1207 = vmatprep.subr.mxu0 0.0
    %1208 = vmatpush1.msra.mxu0 0.0
    %1209 = vmatprep.subr.mxu0 0.0
    %1210 = vmatpush1.msra.mxu0 0.0
    %1211 = vmatprep.subr.mxu0 0.0
    %1212 = vmatpush1.msra.mxu0 0.0
    %1213 = vmatprep.subr.mxu0 0.0
    %1214 = vmatpush1.msra.mxu0 0.0
    %1215 = vmatprep.subr.mxu0 0.0
    %1216 = vmatpush1.msra.mxu0 0.0
    %1217 = vmatprep.subr.mxu0 0.0
    %1218 = vmatpush1.msra.mxu0 0.0
    %1219 = vmatprep.subr.mxu0 0.0
    %1220 = vmatpush1.msra.mxu0 0.0
    %1221 = vmatprep.subr.mxu0 0.0
    %1222 = vmatpush1.msra.mxu0 0.0
    %1223 = vmatprep.subr.mxu0 0.0
    %1224 = vmatpush1.msra.mxu0 0.0
    %1225 = vmatprep.subr.mxu0 0.0
    %1226 = vmatpush1.msra.mxu0 0.0
    %1227 = vmatprep.subr.mxu0 0.0
    %1228 = vmatpush1.msra.mxu0 0.0
    %1229 = vmatprep.subr.mxu0 0.0
    %1230 = vmatpush1.msra.mxu0 0.0
    %1231 = vmatprep.subr.mxu0 0.0
    %1232 = vmatpush1.msra.mxu0 0.0
    %1233 = vmatprep.subr.mxu0 0.0
    %1234 = vmatpush1.msra.mxu0 0.0
    %1235 = vmatprep.subr.mxu0 0.0
    %1236 = vmatpush1.msra.mxu0 0.0
    %1237 = vmatprep.subr.mxu0 0.0
    %1238 = vmatpush1.msra.mxu0 0.0
    %1239 = vmatprep.subr.mxu0 0.0
    %1240 = vmatpush1.msra.mxu0 0.0
    %1241 = vmatprep.subr.mxu0 0.0
    %1242 = vmatpush1.msra.mxu0 0.0
    %1243 = vmatprep.subr.mxu0 0.0
    %1244 = vmatpush1.msra.mxu0 0.0
    %1245 = vmatprep.subr.mxu0 0.0
    %1246 = vmatpush1.msra.mxu0 0.0
    %1247 = vmatprep.subr.mxu0 0.0
    %1248 = vmatpush1.msra.mxu0 0.0
    %1249 = vmatprep.mubr.f32.mxu0 0.0
    %1250 = vmatmul.mubr.f32.gmra.mrb[0].mxu0 %v1180
    %v1251 = vpop.f32.mrb[0].mxu0
    %v1252 = vadd.f32 0.0, %v1251
    %v1253 = vpop.f32.mrb[0].mxu0
    %1254 = vmatprep.mubr.f32.mxu0 0.0
    %1255 = vmatmul.mubr.f32.gmra.mrb[0].mxu0 %v1183
    %v1256 = vpop.f32.mrb[0].mxu0
    %v1257 = vadd.f32 0.0, %v1256
    %v1258 = vpop.f32.mrb[0].mxu0
    %1259 = vdwg.mxu0
    %v1261 = vsel %vm219, %v1252, 0
    %v1264 = vsel %vm219, %v1257, 0
    %1266 = vmatprep.subr.mxu0 0.0
    %1267 = vmatpush1.msra.mxu0 %v212
    %1268 = vmatprep.subr.mxu0 0.0
    %1269 = vmatpush1.msra.mxu0 0.0
    %1270 = vmatprep.subr.mxu0 0.0
    %1271 = vmatpush1.msra.mxu0 0.0
    %1272 = vmatprep.subr.mxu0 0.0
    %1273 = vmatpush1.msra.mxu0 0.0
    %1274 = vmatprep.subr.mxu0 0.0
    %1275 = vmatpush1.msra.mxu0 0.0
    %1276 = vmatprep.subr.mxu0 0.0
    %1277 = vmatpush1.msra.mxu0 0.0
    %1278 = vmatprep.subr.mxu0 0.0
    %1279 = vmatpush1.msra.mxu0 0.0
    %1280 = vmatprep.subr.mxu0 0.0
    %1281 = vmatpush1.msra.mxu0 0.0
    %1282 = vmatprep.subr.mxu0 0.0
    %1283 = vmatpush1.msra.mxu0 0.0
    %1284 = vmatprep.subr.mxu0 0.0
    %1285 = vmatpush1.msra.mxu0 0.0
    %1286 = vmatprep.subr.mxu0 0.0
    %1287 = vmatpush1.msra.mxu0 0.0
    %1288 = vmatprep.subr.mxu0 0.0
    %1289 = vmatpush1.msra.mxu0 0.0
    %1290 = vmatprep.subr.mxu0 0.0
    %1291 = vmatpush1.msra.mxu0 0.0
    %1292 = vmatprep.subr.mxu0 0.0
    %1293 = vmatpush1.msra.mxu0 0.0
    %1294 = vmatprep.subr.mxu0 0.0
    %1295 = vmatpush1.msra.mxu0 0.0
    %1296 = vmatprep.subr.mxu0 0.0
    %1297 = vmatpush1.msra.mxu0 0.0
    %1298 = vmatprep.subr.mxu0 0.0
    %1299 = vmatpush1.msra.mxu0 0.0
    %1300 = vmatprep.subr.mxu0 0.0
    %1301 = vmatpush1.msra.mxu0 0.0
    %1302 = vmatprep.subr.mxu0 0.0
    %1303 = vmatpush1.msra.mxu0 0.0
    %1304 = vmatprep.subr.mxu0 0.0
    %1305 = vmatpush1.msra.mxu0 0.0
    %1306 = vmatprep.subr.mxu0 0.0
    %1307 = vmatpush1.msra.mxu0 0.0
    %1308 = vmatprep.subr.mxu0 0.0
    %1309 = vmatpush1.msra.mxu0 0.0
    %1310 = vmatprep.subr.mxu0 0.0
    %1311 = vmatpush1.msra.mxu0 0.0
    %1312 = vmatprep.subr.mxu0 0.0
    %1313 = vmatpush1.msra.mxu0 0.0
    %1314 = vmatprep.subr.mxu0 0.0
    %1315 = vmatpush1.msra.mxu0 0.0
    %1316 = vmatprep.subr.mxu0 0.0
    %1317 = vmatpush1.msra.mxu0 0.0
    %1318 = vmatprep.subr.mxu0 0.0
    %1319 = vmatpush1.msra.mxu0 0.0
    %1320 = vmatprep.subr.mxu0 0.0
    %1321 = vmatpush1.msra.mxu0 0.0
    %1322 = vmatprep.subr.mxu0 0.0
    %1323 = vmatpush1.msra.mxu0 0.0
    %1324 = vmatprep.subr.mxu0 0.0
    %1325 = vmatpush1.msra.mxu0 0.0
    %1326 = vmatprep.subr.mxu0 0.0
    %1327 = vmatpush1.msra.mxu0 0.0
    %1328 = vmatprep.subr.mxu0 0.0
    %1329 = vmatpush1.msra.mxu0 0.0
    %1330 = vmatprep.mubr.f32.mxu0 0.0
    %1331 = vmatmul.mubr.f32.gmra.mrb[0].mxu0 %v1261
    %v1332 = vpop.f32.mrb[0].mxu0
    %v1333 = vadd.f32 0.0, %v1332
    %v1334 = vpop.f32.mrb[0].mxu0
    %1335 = vmatprep.mubr.f32.mxu0 0.0
    %1336 = vmatmul.mubr.f32.gmra.mrb[0].mxu0 %v1264
    %v1337 = vpop.f32.mrb[0].mxu0
    %v1338 = vadd.f32 0.0, %v1337
    %v1339 = vpop.f32.mrb[0].mxu0
    %1340 = vdwg.mxu0
    %v1341 = vadd.f32 %v1058, %v1333
    %v1342 = vadd.f32 %v1059, %v1338
    %v1343 = vadd.f32 %v111, %v1341
    %v1344 = vadd.f32 %v112, %v1342
    %v1345 = vld [vmem:[%s8] sm:$0x1]
    %v1347 = vlaneseq
    %v1348 = vshrl.u32 %v1347, 7
    %v1349 = vsub.s32 0, %v1348
    %v1350 = vrot.slane %v1345, %v1349
    %v1352 = vadd.f32 %v1343, %v1350
    %v1353 = vadd.f32 %v1344, %v1350
    %v1354 = vld [vmem:[%s9] sm:$0x1]
    %v1355 = vld [vmem:[%s10] sm:$0x1]
    %v1356 = vsel %vm69, %v1352, 0.0
    %1357 = vadd.xlane.f32.xlu0 %v1356
    %v1358 = vpop.xlane.xlu0 %1357
    %v1359 = vsel %vm69, %v1353, 0.0
    %1360 = vadd.xlane.f32.xlu0 %v1359
    %v1361 = vpop.xlane.xlu0 %1360
    %v1362 = vmul.f32 %v1358, %v76
    %v1363 = vmul.f32 %v1361, %v76
    %v1364 = vsub.f32 %v1352, %v1362
    %v1365 = vsub.f32 %v1353, %v1363
    %v1366 = vmul.f32 %v1364, %v1364
    %v1367 = vmul.f32 %v1365, %v1365
    %v1368 = vsel %vm69, %v1366, 0.0
    %1369 = vadd.xlane.f32.xlu0 %v1368
    %v1370 = vpop.xlane.xlu0 %1369
    %v1371 = vsel %vm69, %v1367, 0.0
    %1372 = vadd.xlane.f32.xlu0 %v1371
    %v1373 = vpop.xlane.xlu0 %1372
    %v1374 = vmul.f32 %v1370, %v76
    %v1375 = vmul.f32 %v1373, %v76
    %v1376 = vadd.f32 %v1374, 1e-12
    %v1377 = vadd.f32 %v1375, 1e-12
    %v1378 = vrsqrt.pop %v1376
    %v1379 = vrsqrt.pop %v1377
    %v1380 = vmul.f32 %v1364, %v1378
    %v1381 = vmul.f32 %v1365, %v1379
    %v1383 = vlaneseq
    %v1384 = vshrl.u32 %v1383, 7
    %v1385 = vsub.s32 0, %v1384
    %v1386 = vrot.slane %v1354, %v1385
    %v1388 = vmul.f32 %v1380, %v1386
    %v1389 = vmul.f32 %v1381, %v1386
    %v1391 = vlaneseq
    %v1392 = vshrl.u32 %v1391, 7
    %v1393 = vsub.s32 0, %v1392
    %v1394 = vrot.slane %v1355, %v1393
    %v1396 = vadd.f32 %v1388, %v1394
    %v1397 = vadd.f32 %v1389, %v1394
    %v1398 = vld [vmem:[%s11] sm:$0xff]
    %v1399 = vld [vmem:[%s11 + $0x8] sm:$0xff]
    %v1400 = vld [vmem:[%s11 + $0x10] sm:$0xff]
    %v1401 = vld [vmem:[%s11 + $0x18] sm:$0xff]
    %v1402 = vld [vmem:[%s12] sm:$0x1]
    %v1404 = vlaneseq
    %v1405 = vshrl.u32 %v1404, 7
    %v1406 = vsub.s32 0, %v1405
    %v1407 = vrot.slane %v1402, %v1406
    %v1410 = vsel %vm69, %v1396, 0
    %v1413 = vsel %vm69, %v1397, 0
    %1415 = vmatprep.subr.mxu0 0.0
    %1416 = vmatpush1.msra.mxu0 %v1398
    %1417 = vmatprep.subr.mxu0 0.0
    %1418 = vmatpush1.msra.mxu0 %v1399
    %1419 = vmatprep.subr.mxu0 0.0
    %1420 = vmatpush1.msra.mxu0 %v1400
    %1421 = vmatprep.subr.mxu0 0.0
    %1422 = vmatpush1.msra.mxu0 %v1401
    %1423 = vmatprep.subr.mxu0 0.0
    %1424 = vmatpush1.msra.mxu0 0.0
    %1425 = vmatprep.subr.mxu0 0.0
    %1426 = vmatpush1.msra.mxu0 0.0
    %1427 = vmatprep.subr.mxu0 0.0
    %1428 = vmatpush1.msra.mxu0 0.0
    %1429 = vmatprep.subr.mxu0 0.0
    %1430 = vmatpush1.msra.mxu0 0.0
    %1431 = vmatprep.subr.mxu0 0.0
    %1432 = vmatpush1.msra.mxu0 0.0
    %1433 = vmatprep.subr.mxu0 0.0
    %1434 = vmatpush1.msra.mxu0 0.0
    %1435 = vmatprep.subr.mxu0 0.0
    %1436 = vmatpush1.msra.mxu0 0.0
    %1437 = vmatprep.subr.mxu0 0.0
    %1438 = vmatpush1.msra.mxu0 0.0
    %1439 = vmatprep.subr.mxu0 0.0
    %1440 = vmatpush1.msra.mxu0 0.0
    %1441 = vmatprep.subr.mxu0 0.0
    %1442 = vmatpush1.msra.mxu0 0.0
    %1443 = vmatprep.subr.mxu0 0.0
    %1444 = vmatpush1.msra.mxu0 0.0
    %1445 = vmatprep.subr.mxu0 0.0
    %1446 = vmatpush1.msra.mxu0 0.0
    %1447 = vmatprep.subr.mxu0 0.0
    %1448 = vmatpush1.msra.mxu0 0.0
    %1449 = vmatprep.subr.mxu0 0.0
    %1450 = vmatpush1.msra.mxu0 0.0
    %1451 = vmatprep.subr.mxu0 0.0
    %1452 = vmatpush1.msra.mxu0 0.0
    %1453 = vmatprep.subr.mxu0 0.0
    %1454 = vmatpush1.msra.mxu0 0.0
    %1455 = vmatprep.subr.mxu0 0.0
    %1456 = vmatpush1.msra.mxu0 0.0
    %1457 = vmatprep.subr.mxu0 0.0
    %1458 = vmatpush1.msra.mxu0 0.0
    %1459 = vmatprep.subr.mxu0 0.0
    %1460 = vmatpush1.msra.mxu0 0.0
    %1461 = vmatprep.subr.mxu0 0.0
    %1462 = vmatpush1.msra.mxu0 0.0
    %1463 = vmatprep.subr.mxu0 0.0
    %1464 = vmatpush1.msra.mxu0 0.0
    %1465 = vmatprep.subr.mxu0 0.0
    %1466 = vmatpush1.msra.mxu0 0.0
    %1467 = vmatprep.subr.mxu0 0.0
    %1468 = vmatpush1.msra.mxu0 0.0
    %1469 = vmatprep.subr.mxu0 0.0
    %1470 = vmatpush1.msra.mxu0 0.0
    %1471 = vmatprep.subr.mxu0 0.0
    %1472 = vmatpush1.msra.mxu0 0.0
    %1473 = vmatprep.subr.mxu0 0.0
    %1474 = vmatpush1.msra.mxu0 0.0
    %1475 = vmatprep.subr.mxu0 0.0
    %1476 = vmatpush1.msra.mxu0 0.0
    %1477 = vmatprep.subr.mxu0 0.0
    %1478 = vmatpush1.msra.mxu0 0.0
    %1479 = vmatprep.mubr.f32.mxu0 0.0
    %1480 = vmatmul.mubr.f32.gmra.mrb[0].mxu0 %v1410
    %v1481 = vpop.f32.mrb[0].mxu0
    %v1482 = vadd.f32 %v1407, %v1481
    %v1483 = vpop.f32.mrb[0].mxu0
    %1484 = vmatprep.mubr.f32.mxu0 0.0
    %1485 = vmatmul.mubr.f32.gmra.mrb[0].mxu0 %v1413
    %v1486 = vpop.f32.mrb[0].mxu0
    %v1487 = vadd.f32 %v1407, %v1486
    %v1488 = vpop.f32.mrb[0].mxu0
    %1489 = vdwg.mxu0
    %v1490 = vmul.f32 %v1482, %v1482
    %v1491 = vmul.f32 %v1487, %v1487
    %v1492 = vmul.f32 %v1482, %v1490
    %v1493 = vmul.f32 %v1487, %v1491
    %v1494 = vmul.f32 %v1492, 0.044715
    %v1495 = vmul.f32 %v1493, 0.044715
    %v1496 = vadd.f32 %v1482, %v1494
    %v1497 = vadd.f32 %v1487, %v1495
    %v1498 = vmul.f32 %v1496, 0.7978846
    %v1499 = vmul.f32 %v1497, 0.7978846
    %v1500 = vtanh.pop %v1498
    %v1501 = vtanh.pop %v1499
    %v1502 = vadd.f32 %v1500, 1.0
    %v1503 = vadd.f32 %v1501, 1.0
    %v1504 = vmul.f32 %v1502, 0.5
    %v1505 = vmul.f32 %v1503, 0.5
    %v1506 = vmul.f32 %v1482, %v1504
    %v1507 = vmul.f32 %v1487, %v1505
    %v1508 = vld [vmem:[%s13] sm:$0xff]
    %v1509 = vld [vmem:[%s13 + $0x8] sm:$0xff]
    %v1510 = vld [vmem:[%s13 + $0x10] sm:$0xff]
    %v1511 = vld [vmem:[%s13 + $0x18] sm:$0xff]
    %v1512 = vld [vmem:[%s13 + $0x20] sm:$0xff]
    %v1513 = vld [vmem:[%s13 + $0x28] sm:$0xff]
    %v1514 = vld [vmem:[%s13 + $0x30] sm:$0xff]
    %v1515 = vld [vmem:[%s13 + $0x38] sm:$0xff]
    %v1516 = vld [vmem:[%s14] sm:$0x1]
    %v1518 = vlaneseq
    %v1519 = vshrl.u32 %v1518, 7
    %v1520 = vsub.s32 0, %v1519
    %v1521 = vrot.slane %v1516, %v1520
    %vm1523 = vcmask 523264
    %v1525 = vsel %vm1523, %v1506, 0
    %v1528 = vsel %vm1523, %v1507, 0
    %1530 = vmatprep.subr.mxu0 0.0
    %1531 = vmatpush1.msra.mxu0 %v1508
    %1532 = vmatprep.subr.mxu0 0.0
    %1533 = vmatpush1.msra.mxu0 %v1509
    %1534 = vmatprep.subr.mxu0 0.0
    %1535 = vmatpush1.msra.mxu0 %v1510
    %1536 = vmatprep.subr.mxu0 0.0
    %1537 = vmatpush1.msra.mxu0 %v1511
    %1538 = vmatprep.subr.mxu0 0.0
    %1539 = vmatpush1.msra.mxu0 %v1512
    %1540 = vmatprep.subr.mxu0 0.0
    %1541 = vmatpush1.msra.mxu0 %v1513
    %1542 = vmatprep.subr.mxu0 0.0
    %1543 = vmatpush1.msra.mxu0 %v1514
    %1544 = vmatprep.subr.mxu0 0.0
    %1545 = vmatpush1.msra.mxu0 %v1515
    %1546 = vmatprep.subr.mxu0 0.0
    %1547 = vmatpush1.msra.mxu0 0.0
    %1548 = vmatprep.subr.mxu0 0.0
    %1549 = vmatpush1.msra.mxu0 0.0
    %1550 = vmatprep.subr.mxu0 0.0
    %1551 = vmatpush1.msra.mxu0 0.0
    %1552 = vmatprep.subr.mxu0 0.0
    %1553 = vmatpush1.msra.mxu0 0.0
    %1554 = vmatprep.subr.mxu0 0.0
    %1555 = vmatpush1.msra.mxu0 0.0
    %1556 = vmatprep.subr.mxu0 0.0
    %1557 = vmatpush1.msra.mxu0 0.0
    %1558 = vmatprep.subr.mxu0 0.0
    %1559 = vmatpush1.msra.mxu0 0.0
    %1560 = vmatprep.subr.mxu0 0.0
    %1561 = vmatpush1.msra.mxu0 0.0
    %1562 = vmatprep.subr.mxu0 0.0
    %1563 = vmatpush1.msra.mxu0 0.0
    %1564 = vmatprep.subr.mxu0 0.0
    %1565 = vmatpush1.msra.mxu0 0.0
    %1566 = vmatprep.subr.mxu0 0.0
    %1567 = vmatpush1.msra.mxu0 0.0
    %1568 = vmatprep.subr.mxu0 0.0
    %1569 = vmatpush1.msra.mxu0 0.0
    %1570 = vmatprep.subr.mxu0 0.0
    %1571 = vmatpush1.msra.mxu0 0.0
    %1572 = vmatprep.subr.mxu0 0.0
    %1573 = vmatpush1.msra.mxu0 0.0
    %1574 = vmatprep.subr.mxu0 0.0
    %1575 = vmatpush1.msra.mxu0 0.0
    %1576 = vmatprep.subr.mxu0 0.0
    %1577 = vmatpush1.msra.mxu0 0.0
    %1578 = vmatprep.subr.mxu0 0.0
    %1579 = vmatpush1.msra.mxu0 0.0
    %1580 = vmatprep.subr.mxu0 0.0
    %1581 = vmatpush1.msra.mxu0 0.0
    %1582 = vmatprep.subr.mxu0 0.0
    %1583 = vmatpush1.msra.mxu0 0.0
    %1584 = vmatprep.subr.mxu0 0.0
    %1585 = vmatpush1.msra.mxu0 0.0
    %1586 = vmatprep.subr.mxu0 0.0
    %1587 = vmatpush1.msra.mxu0 0.0
    %1588 = vmatprep.subr.mxu0 0.0
    %1589 = vmatpush1.msra.mxu0 0.0
    %1590 = vmatprep.subr.mxu0 0.0
    %1591 = vmatpush1.msra.mxu0 0.0
    %1592 = vmatprep.subr.mxu0 0.0
    %1593 = vmatpush1.msra.mxu0 0.0
    %1594 = vmatprep.mubr.f32.mxu0 0.0
    %1595 = vmatmul.mubr.f32.gmra.mrb[0].mxu0 %v1525
    %v1596 = vpop.f32.mrb[0].mxu0
    %v1597 = vadd.f32 %v1521, %v1596
    %v1598 = vpop.f32.mrb[0].mxu0
    %1599 = vmatprep.mubr.f32.mxu0 0.0
    %1600 = vmatmul.mubr.f32.gmra.mrb[0].mxu0 %v1528
    %v1601 = vpop.f32.mrb[0].mxu0
    %v1602 = vadd.f32 %v1521, %v1601
    %v1603 = vpop.f32.mrb[0].mxu0
    %1604 = vdwg.mxu0
    %v1605 = vadd.f32 %v1396, %v1597
    %v1606 = vadd.f32 %v1397, %v1602
    %v1607 = vld [vmem:[%s15] sm:$0x1]
    %v1608 = vld [vmem:[%s16] sm:$0x1]
    %v1609 = vsel %vm69, %v1605, 0.0
    %1610 = vadd.xlane.f32.xlu0 %v1609
    %v1611 = vpop.xlane.xlu0 %1610
    %v1612 = vsel %vm69, %v1606, 0.0
    %1613 = vadd.xlane.f32.xlu0 %v1612
    %v1614 = vpop.xlane.xlu0 %1613
    %v1615 = vmul.f32 %v1611, %v76
    %v1616 = vmul.f32 %v1614, %v76
    %v1617 = vsub.f32 %v1605, %v1615
    %v1618 = vsub.f32 %v1606, %v1616
    %v1619 = vmul.f32 %v1617, %v1617
    %v1620 = vmul.f32 %v1618, %v1618
    %v1621 = vsel %vm69, %v1619, 0.0
    %1622 = vadd.xlane.f32.xlu0 %v1621
    %v1623 = vpop.xlane.xlu0 %1622
    %v1624 = vsel %vm69, %v1620, 0.0
    %1625 = vadd.xlane.f32.xlu0 %v1624
    %v1626 = vpop.xlane.xlu0 %1625
    %v1627 = vmul.f32 %v1623, %v76
    %v1628 = vmul.f32 %v1626, %v76
    %v1629 = vadd.f32 %v1627, 1e-12
    %v1630 = vadd.f32 %v1628, 1e-12
    %v1631 = vrsqrt.pop %v1629
    %v1632 = vrsqrt.pop %v1630
    %v1633 = vmul.f32 %v1617, %v1631
    %v1634 = vmul.f32 %v1618, %v1632
    %v1636 = vlaneseq
    %v1637 = vshrl.u32 %v1636, 7
    %v1638 = vsub.s32 0, %v1637
    %v1639 = vrot.slane %v1607, %v1638
    %v1641 = vmul.f32 %v1633, %v1639
    %v1642 = vmul.f32 %v1634, %v1639
    %v1644 = vlaneseq
    %v1645 = vshrl.u32 %v1644, 7
    %v1646 = vsub.s32 0, %v1645
    %v1647 = vrot.slane %v1608, %v1646
    %v1649 = vadd.f32 %v1641, %v1647
    %v1650 = vadd.f32 %v1642, %v1647
    %s1651 = scalar_lea.vmem %s5, 32
    %v1652 = vld [vmem:[%s1651] sm:$0xff]
    %v1653 = vld [vmem:[%s1651 + $0x8] sm:$0xff]
    %v1654 = vld [vmem:[%s1651 + $0x10] sm:$0xff]
    %v1655 = vld [vmem:[%s1651 + $0x18] sm:$0xff]
    %s1656 = scalar_lea.vmem %s6, 1
    %v1657 = vld [vmem:[%s1656] sm:$0x1]
    %v1659 = vlaneseq
    %v1660 = vshrl.u32 %v1659, 7
    %v1661 = vsub.s32 0, %v1660
    %v1662 = vrot.slane %v1657, %v1661
    %v1665 = vsel %vm69, %v1649, 0
    %v1668 = vsel %vm69, %v1650, 0
    %1670 = vmatprep.subr.mxu0 0.0
    %1671 = vmatpush1.msra.mxu0 %v1652
    %1672 = vmatprep.subr.mxu0 0.0
    %1673 = vmatpush1.msra.mxu0 %v1653
    %1674 = vmatprep.subr.mxu0 0.0
    %1675 = vmatpush1.msra.mxu0 %v1654
    %1676 = vmatprep.subr.mxu0 0.0
    %1677 = vmatpush1.msra.mxu0 %v1655
    %1678 = vmatprep.subr.mxu0 0.0
    %1679 = vmatpush1.msra.mxu0 0.0
    %1680 = vmatprep.subr.mxu0 0.0
    %1681 = vmatpush1.msra.mxu0 0.0
    %1682 = vmatprep.subr.mxu0 0.0
    %1683 = vmatpush1.msra.mxu0 0.0
    %1684 = vmatprep.subr.mxu0 0.0
    %1685 = vmatpush1.msra.mxu0 0.0
    %1686 = vmatprep.subr.mxu0 0.0
    %1687 = vmatpush1.msra.mxu0 0.0
    %1688 = vmatprep.subr.mxu0 0.0
    %1689 = vmatpush1.msra.mxu0 0.0
    %1690 = vmatprep.subr.mxu0 0.0
    %1691 = vmatpush1.msra.mxu0 0.0
    %1692 = vmatprep.subr.mxu0 0.0
    %1693 = vmatpush1.msra.mxu0 0.0
    %1694 = vmatprep.subr.mxu0 0.0
    %1695 = vmatpush1.msra.mxu0 0.0
    %1696 = vmatprep.subr.mxu0 0.0
    %1697 = vmatpush1.msra.mxu0 0.0
    %1698 = vmatprep.subr.mxu0 0.0
    %1699 = vmatpush1.msra.mxu0 0.0
    %1700 = vmatprep.subr.mxu0 0.0
    %1701 = vmatpush1.msra.mxu0 0.0
    %1702 = vmatprep.subr.mxu0 0.0
    %1703 = vmatpush1.msra.mxu0 0.0
    %1704 = vmatprep.subr.mxu0 0.0
    %1705 = vmatpush1.msra.mxu0 0.0
    %1706 = vmatprep.subr.mxu0 0.0
    %1707 = vmatpush1.msra.mxu0 0.0
    %1708 = vmatprep.subr.mxu0 0.0
    %1709 = vmatpush1.msra.mxu0 0.0
    %1710 = vmatprep.subr.mxu0 0.0
    %1711 = vmatpush1.msra.mxu0 0.0
    %1712 = vmatprep.subr.mxu0 0.0
    %1713 = vmatpush1.msra.mxu0 0.0
    %1714 = vmatprep.subr.mxu0 0.0
    %1715 = vmatpush1.msra.mxu0 0.0
    %1716 = vmatprep.subr.mxu0 0.0
    %1717 = vmatpush1.msra.mxu0 0.0
    %1718 = vmatprep.subr.mxu0 0.0
    %1719 = vmatpush1.msra.mxu0 0.0
    %1720 = vmatprep.subr.mxu0 0.0
    %1721 = vmatpush1.msra.mxu0 0.0
    %1722 = vmatprep.subr.mxu0 0.0
    %1723 = vmatpush1.msra.mxu0 0.0
    %1724 = vmatprep.subr.mxu0 0.0
    %1725 = vmatpush1.msra.mxu0 0.0
    %1726 = vmatprep.subr.mxu0 0.0
    %1727 = vmatpush1.msra.mxu0 0.0
    %1728 = vmatprep.subr.mxu0 0.0
    %1729 = vmatpush1.msra.mxu0 0.0
    %1730 = vmatprep.subr.mxu0 0.0
    %1731 = vmatpush1.msra.mxu0 0.0
    %1732 = vmatprep.subr.mxu0 0.0
    %1733 = vmatpush1.msra.mxu0 0.0
    %1734 = vmatprep.mubr.f32.mxu0 0.0
    %1735 = vmatmul.mubr.f32.gmra.mrb[0].mxu0 %v1665
    %v1736 = vpop.f32.mrb[0].mxu0
    %v1737 = vadd.f32 %v1662, %v1736
    %v1738 = vpop.f32.mrb[0].mxu0
    %1739 = vmatprep.mubr.f32.mxu0 0.0
    %1740 = vmatmul.mubr.f32.gmra.mrb[0].mxu0 %v1668
    %v1741 = vpop.f32.mrb[0].mxu0
    %v1742 = vadd.f32 %v1662, %v1741
    %v1743 = vpop.f32.mrb[0].mxu0
    %1744 = vdwg.mxu0
    %v1745 = vmul.f32 %v1737, 0.35355338
    %v1746 = vmul.f32 %v1742, 0.35355338
    %s1747 = scalar_lea.vmem %s7, 32
    %v1748 = vld [vmem:[%s1747] sm:$0xff]
    %v1749 = vld [vmem:[%s1747 + $0x8] sm:$0xff]
    %v1750 = vld [vmem:[%s1747 + $0x10] sm:$0xff]
    %v1751 = vld [vmem:[%s1747 + $0x18] sm:$0xff]
    %1754 = vrot.lane.b32.xlu0 %v1737, 96
    %v1755 = vpop.permute.xlu0 %1754
    %1756 = vrot.lane.b32.xlu0 %v1742, 96
    %v1757 = vpop.permute.xlu0 %1756
    %v1759 = vsel %vm219, %v1745, 0
    %v1762 = vsel %vm219, %v1746, 0
    %v1764 = vsel %vm219, %v1755, 0
    %v1766 = vsel %vm219, %v1757, 0
    %1768 = vmatprep.subr.mxu0 0.0
    %1769 = vmatpush1.xpose.msra.mxu0 %v1764
    %1770 = vmatprep.subr.mxu0 0.0
    %1771 = vmatpush1.xpose.msra.mxu0 %v1766
    %1772 = vmatprep.subr.mxu0 0.0
    %1773 = vmatpush1.xpose.msra.mxu0 0.0
    %1774 = vmatprep.subr.mxu0 0.0
    %1775 = vmatpush1.xpose.msra.mxu0 0.0
    %1776 = vmatprep.subr.mxu0 0.0
    %1777 = vmatpush1.xpose.msra.mxu0 0.0
    %1778 = vmatprep.subr.mxu0 0.0
    %1779 = vmatpush1.xpose.msra.mxu0 0.0
    %1780 = vmatprep.subr.mxu0 0.0
    %1781 = vmatpush1.xpose.msra.mxu0 0.0
    %1782 = vmatprep.subr.mxu0 0.0
    %1783 = vmatpush1.xpose.msra.mxu0 0.0
    %1784 = vmatprep.subr.mxu0 0.0
    %1785 = vmatpush1.xpose.msra.mxu0 0.0
    %1786 = vmatprep.subr.mxu0 0.0
    %1787 = vmatpush1.xpose.msra.mxu0 0.0
    %1788 = vmatprep.subr.mxu0 0.0
    %1789 = vmatpush1.xpose.msra.mxu0 0.0
    %1790 = vmatprep.subr.mxu0 0.0
    %1791 = vmatpush1.xpose.msra.mxu0 0.0
    %1792 = vmatprep.subr.mxu0 0.0
    %1793 = vmatpush1.xpose.msra.mxu0 0.0
    %1794 = vmatprep.subr.mxu0 0.0
    %1795 = vmatpush1.xpose.msra.mxu0 0.0
    %1796 = vmatprep.subr.mxu0 0.0
    %1797 = vmatpush1.xpose.msra.mxu0 0.0
    %1798 = vmatprep.subr.mxu0 0.0
    %1799 = vmatpush1.xpose.msra.mxu0 0.0
    %1800 = vmatprep.subr.mxu0 0.0
    %1801 = vmatpush1.xpose.msra.mxu0 0.0
    %1802 = vmatprep.subr.mxu0 0.0
    %1803 = vmatpush1.xpose.msra.mxu0 0.0
    %1804 = vmatprep.subr.mxu0 0.0
    %1805 = vmatpush1.xpose.msra.mxu0 0.0
    %1806 = vmatprep.subr.mxu0 0.0
    %1807 = vmatpush1.xpose.msra.mxu0 0.0
    %1808 = vmatprep.subr.mxu0 0.0
    %1809 = vmatpush1.xpose.msra.mxu0 0.0
    %1810 = vmatprep.subr.mxu0 0.0
    %1811 = vmatpush1.xpose.msra.mxu0 0.0
    %1812 = vmatprep.subr.mxu0 0.0
    %1813 = vmatpush1.xpose.msra.mxu0 0.0
    %1814 = vmatprep.subr.mxu0 0.0
    %1815 = vmatpush1.xpose.msra.mxu0 0.0
    %1816 = vmatprep.subr.mxu0 0.0
    %1817 = vmatpush1.xpose.msra.mxu0 0.0
    %1818 = vmatprep.subr.mxu0 0.0
    %1819 = vmatpush1.xpose.msra.mxu0 0.0
    %1820 = vmatprep.subr.mxu0 0.0
    %1821 = vmatpush1.xpose.msra.mxu0 0.0
    %1822 = vmatprep.subr.mxu0 0.0
    %1823 = vmatpush1.xpose.msra.mxu0 0.0
    %1824 = vmatprep.subr.mxu0 0.0
    %1825 = vmatpush1.xpose.msra.mxu0 0.0
    %1826 = vmatprep.subr.mxu0 0.0
    %1827 = vmatpush1.xpose.msra.mxu0 0.0
    %1828 = vmatprep.subr.mxu0 0.0
    %1829 = vmatpush1.xpose.msra.mxu0 0.0
    %1830 = vmatprep.subr.mxu0 0.0
    %1831 = vmatpush1.xpose.msra.mxu0 0.0
    %1832 = vmatprep.mubr.f32.mxu0 0.0
    %1833 = vmatmul.mubr.f32.gmra.mrb[0].mxu0 %v1759
    %v1834 = vpop.f32.mrb[0].mxu0
    %v1835 = vadd.f32 %v113, %v1834
    %v1836 = vpop.f32.mrb[0].mxu0
    %1837 = vmatprep.mubr.f32.mxu0 0.0
    %1838 = vmatmul.mubr.f32.gmra.mrb[0].mxu0 %v1762
    %v1839 = vpop.f32.mrb[0].mxu0
    %v1840 = vadd.f32 %v114, %v1839
    %v1841 = vpop.f32.mrb[0].mxu0
    %1842 = vdwg.mxu0
    %v1843 = vsel %vm305, %v1835, -inf
    %1844 = vmax.xlane.f32.xlu0 %v1843
    %v1845 = vpop.xlane.xlu0 %1844
    %v1846 = vsel %vm305, %v1840, -inf
    %1847 = vmax.xlane.f32.xlu0 %v1846
    %v1848 = vpop.xlane.xlu0 %1847
    %v1849 = vsub.f32 %v1835, %v1845
    %v1850 = vsub.f32 %v1840, %v1848
    %v1851 = vmul.f32 %v1849, 1.442695
    %v1852 = vpow.pop %v1851
    %v1853 = vmul.f32 %v1850, 1.442695
    %v1854 = vpow.pop %v1853
    %v1855 = vsel %vm305, %v1852, 0.0
    %1856 = vadd.xlane.f32.xlu0 %v1855
    %v1857 = vpop.xlane.xlu0 %1856
    %v1858 = vsel %vm305, %v1854, 0.0
    %1859 = vadd.xlane.f32.xlu0 %v1858
    %v1860 = vpop.xlane.xlu0 %1859
    %v1861 = vrcp.pop %v1857
    %v1862 = vrcp.pop %v1860
    %v1863 = vmul.f32 %v1852, %v1861
    %v1864 = vmul.f32 %v1854, %v1862
    %1865 = vrot.lane.b32.xlu0 %v1737, 64
    %v1866 = vpop.permute.xlu0 %1865
    %1867 = vrot.lane.b32.xlu0 %v1742, 64
    %v1868 = vpop.permute.xlu0 %1867
    %v1872 = vsel %vm305, %v1863, 0
    %v1875 = vsel %vm305, %v1864, 0
    %1877 = vmatprep.subr.mxu0 0.0
    %1878 = vmatpush1.msra.mxu0 %v1866
    %1879 = vmatprep.subr.mxu0 0.0
    %1880 = vmatpush1.msra.mxu0 %v1868
    %1881 = vmatprep.subr.mxu0 0.0
    %1882 = vmatpush1.msra.mxu0 0.0
    %1883 = vmatprep.subr.mxu0 0.0
    %1884 = vmatpush1.msra.mxu0 0.0
    %1885 = vmatprep.subr.mxu0 0.0
    %1886 = vmatpush1.msra.mxu0 0.0
    %1887 = vmatprep.subr.mxu0 0.0
    %1888 = vmatpush1.msra.mxu0 0.0
    %1889 = vmatprep.subr.mxu0 0.0
    %1890 = vmatpush1.msra.mxu0 0.0
    %1891 = vmatprep.subr.mxu0 0.0
    %1892 = vmatpush1.msra.mxu0 0.0
    %1893 = vmatprep.subr.mxu0 0.0
    %1894 = vmatpush1.msra.mxu0 0.0
    %1895 = vmatprep.subr.mxu0 0.0
    %1896 = vmatpush1.msra.mxu0 0.0
    %1897 = vmatprep.subr.mxu0 0.0
    %1898 = vmatpush1.msra.mxu0 0.0
    %1899 = vmatprep.subr.mxu0 0.0
    %1900 = vmatpush1.msra.mxu0 0.0
    %1901 = vmatprep.subr.mxu0 0.0
    %1902 = vmatpush1.msra.mxu0 0.0
    %1903 = vmatprep.subr.mxu0 0.0
    %1904 = vmatpush1.msra.mxu0 0.0
    %1905 = vmatprep.subr.mxu0 0.0
    %1906 = vmatpush1.msra.mxu0 0.0
    %1907 = vmatprep.subr.mxu0 0.0
    %1908 = vmatpush1.msra.mxu0 0.0
    %1909 = vmatprep.subr.mxu0 0.0
    %1910 = vmatpush1.msra.mxu0 0.0
    %1911 = vmatprep.subr.mxu0 0.0
    %1912 = vmatpush1.msra.mxu0 0.0
    %1913 = vmatprep.subr.mxu0 0.0
    %1914 = vmatpush1.msra.mxu0 0.0
    %1915 = vmatprep.subr.mxu0 0.0
    %1916 = vmatpush1.msra.mxu0 0.0
    %1917 = vmatprep.subr.mxu0 0.0
    %1918 = vmatpush1.msra.mxu0 0.0
    %1919 = vmatprep.subr.mxu0 0.0
    %1920 = vmatpush1.msra.mxu0 0.0
    %1921 = vmatprep.subr.mxu0 0.0
    %1922 = vmatpush1.msra.mxu0 0.0
    %1923 = vmatprep.subr.mxu0 0.0
    %1924 = vmatpush1.msra.mxu0 0.0
    %1925 = vmatprep.subr.mxu0 0.0
    %1926 = vmatpush1.msra.mxu0 0.0
    %1927 = vmatprep.subr.mxu0 0.0
    %1928 = vmatpush1.msra.mxu0 0.0
    %1929 = vmatprep.subr.mxu0 0.0
    %1930 = vmatpush1.msra.mxu0 0.0
    %1931 = vmatprep.subr.mxu0 0.0
    %1932 = vmatpush1.msra.mxu0 0.0
    %1933 = vmatprep.subr.mxu0 0.0
    %1934 = vmatpush1.msra.mxu0 0.0
    %1935 = vmatprep.subr.mxu0 0.0
    %1936 = vmatpush1.msra.mxu0 0.0
    %1937 = vmatprep.subr.mxu0 0.0
    %1938 = vmatpush1.msra.mxu0 0.0
    %1939 = vmatprep.subr.mxu0 0.0
    %1940 = vmatpush1.msra.mxu0 0.0
    %1941 = vmatprep.mubr.f32.mxu0 0.0
    %1942 = vmatmul.mubr.f32.gmra.mrb[0].mxu0 %v1872
    %v1943 = vpop.f32.mrb[0].mxu0
    %v1944 = vadd.f32 0.0, %v1943
    %v1945 = vpop.f32.mrb[0].mxu0
    %1946 = vmatprep.mubr.f32.mxu0 0.0
    %1947 = vmatmul.mubr.f32.gmra.mrb[0].mxu0 %v1875
    %v1948 = vpop.f32.mrb[0].mxu0
    %v1949 = vadd.f32 0.0, %v1948
    %v1950 = vpop.f32.mrb[0].mxu0
    %1951 = vdwg.mxu0
    %1952 = vrot.lane.b32.xlu0 %v1745, 120
    %v1953 = vpop.permute.xlu0 %1952
    %1954 = vrot.lane.b32.xlu0 %v1746, 120
    %v1955 = vpop.permute.xlu0 %1954
    %1956 = vrot.lane.b32.xlu0 %v1737, 88
    %v1957 = vpop.permute.xlu0 %1956
    %1958 = vrot.lane.b32.xlu0 %v1742, 88
    %v1959 = vpop.permute.xlu0 %1958
    %v1960 = vsel %vm219, %v1953, 0
    %v1962 = vsel %vm219, %v1955, 0
    %v1964 = vsel %vm219, %v1957, 0
    %v1966 = vsel %vm219, %v1959, 0
    %1968 = vmatprep.subr.mxu0 0.0
    %1969 = vmatpush1.xpose.msra.mxu0 %v1964
    %1970 = vmatprep.subr.mxu0 0.0
    %1971 = vmatpush1.xpose.msra.mxu0 %v1966
    %1972 = vmatprep.subr.mxu0 0.0
    %1973 = vmatpush1.xpose.msra.mxu0 0.0
    %1974 = vmatprep.subr.mxu0 0.0
    %1975 = vmatpush1.xpose.msra.mxu0 0.0
    %1976 = vmatprep.subr.mxu0 0.0
    %1977 = vmatpush1.xpose.msra.mxu0 0.0
    %1978 = vmatprep.subr.mxu0 0.0
    %1979 = vmatpush1.xpose.msra.mxu0 0.0
    %1980 = vmatprep.subr.mxu0 0.0
    %1981 = vmatpush1.xpose.msra.mxu0 0.0
    %1982 = vmatprep.subr.mxu0 0.0
    %1983 = vmatpush1.xpose.msra.mxu0 0.0
    %1984 = vmatprep.subr.mxu0 0.0
    %1985 = vmatpush1.xpose.msra.mxu0 0.0
    %1986 = vmatprep.subr.mxu0 0.0
    %1987 = vmatpush1.xpose.msra.mxu0 0.0
    %1988 = vmatprep.subr.mxu0 0.0
    %1989 = vmatpush1.xpose.msra.mxu0 0.0
    %1990 = vmatprep.subr.mxu0 0.0
    %1991 = vmatpush1.xpose.msra.mxu0 0.0
    %1992 = vmatprep.subr.mxu0 0.0
    %1993 = vmatpush1.xpose.msra.mxu0 0.0
    %1994 = vmatprep.subr.mxu0 0.0
    %1995 = vmatpush1.xpose.msra.mxu0 0.0
    %1996 = vmatprep.subr.mxu0 0.0
    %1997 = vmatpush1.xpose.msra.mxu0 0.0
    %1998 = vmatprep.subr.mxu0 0.0
    %1999 = vmatpush1.xpose.msra.mxu0 0.0
    %2000 = vmatprep.subr.mxu0 0.0
    %2001 = vmatpush1.xpose.msra.mxu0 0.0
    %2002 = vmatprep.subr.mxu0 0.0
    %2003 = vmatpush1.xpose.msra.mxu0 0.0
    %2004 = vmatprep.subr.mxu0 0.0
    %2005 = vmatpush1.xpose.msra.mxu0 0.0
    %2006 = vmatprep.subr.mxu0 0.0
    %2007 = vmatpush1.xpose.msra.mxu0 0.0
    %2008 = vmatprep.subr.mxu0 0.0
    %2009 = vmatpush1.xpose.msra.mxu0 0.0
    %2010 = vmatprep.subr.mxu0 0.0
    %2011 = vmatpush1.xpose.msra.mxu0 0.0
    %2012 = vmatprep.subr.mxu0 0.0
    %2013 = vmatpush1.xpose.msra.mxu0 0.0
    %2014 = vmatprep.subr.mxu0 0.0
    %2015 = vmatpush1.xpose.msra.mxu0 0.0
    %2016 = vmatprep.subr.mxu0 0.0
    %2017 = vmatpush1.xpose.msra.mxu0 0.0
    %2018 = vmatprep.subr.mxu0 0.0
    %2019 = vmatpush1.xpose.msra.mxu0 0.0
    %2020 = vmatprep.subr.mxu0 0.0
    %2021 = vmatpush1.xpose.msra.mxu0 0.0
    %2022 = vmatprep.subr.mxu0 0.0
    %2023 = vmatpush1.xpose.msra.mxu0 0.0
    %2024 = vmatprep.subr.mxu0 0.0
    %2025 = vmatpush1.xpose.msra.mxu0 0.0
    %2026 = vmatprep.subr.mxu0 0.0
    %2027 = vmatpush1.xpose.msra.mxu0 0.0
    %2028 = vmatprep.subr.mxu0 0.0
    %2029 = vmatpush1.xpose.msra.mxu0 0.0
    %2030 = vmatprep.subr.mxu0 0.0
    %2031 = vmatpush1.xpose.msra.mxu0 0.0
    %2032 = vmatprep.mubr.f32.mxu0 0.0
    %2033 = vmatmul.mubr.f32.gmra.mrb[0].mxu0 %v1960
    %v2034 = vpop.f32.mrb[0].mxu0
    %v2035 = vadd.f32 %v113, %v2034
    %v2036 = vpop.f32.mrb[0].mxu0
    %2037 = vmatprep.mubr.f32.mxu0 0.0
    %2038 = vmatmul.mubr.f32.gmra.mrb[0].mxu0 %v1962
    %v2039 = vpop.f32.mrb[0].mxu0
    %v2040 = vadd.f32 %v114, %v2039
    %v2041 = vpop.f32.mrb[0].mxu0
    %2042 = vdwg.mxu0
    %v2043 = vsel %vm305, %v2035, -inf
    %2044 = vmax.xlane.f32.xlu0 %v2043
    %v2045 = vpop.xlane.xlu0 %2044
    %v2046 = vsel %vm305, %v2040, -inf
    %2047 = vmax.xlane.f32.xlu0 %v2046
    %v2048 = vpop.xlane.xlu0 %2047
    %v2049 = vsub.f32 %v2035, %v2045
    %v2050 = vsub.f32 %v2040, %v2048
    %v2051 = vmul.f32 %v2049, 1.442695
    %v2052 = vpow.pop %v2051
    %v2053 = vmul.f32 %v2050, 1.442695
    %v2054 = vpow.pop %v2053
    %v2055 = vsel %vm305, %v2052, 0.0
    %2056 = vadd.xlane.f32.xlu0 %v2055
    %v2057 = vpop.xlane.xlu0 %2056
    %v2058 = vsel %vm305, %v2054, 0.0
    %2059 = vadd.xlane.f32.xlu0 %v2058
    %v2060 = vpop.xlane.xlu0 %2059
    %v2061 = vrcp.pop %v2057
    %v2062 = vrcp.pop %v2060
    %v2063 = vmul.f32 %v2052, %v2061
    %v2064 = vmul.f32 %v2054, %v2062
    %2065 = vrot.lane.b32.xlu0 %v1737, 56
    %v2066 = vpop.permute.xlu0 %2065
    %2067 = vrot.lane.b32.xlu0 %v1742, 56
    %v2068 = vpop.permute.xlu0 %2067
    %v2072 = vsel %vm305, %v2063, 0
    %v2075 = vsel %vm305, %v2064, 0
    %2077 = vmatprep.subr.mxu0 0.0
    %2078 = vmatpush1.msra.mxu0 %v2066
    %2079 = vmatprep.subr.mxu0 0.0
    %2080 = vmatpush1.msra.mxu0 %v2068
    %2081 = vmatprep.subr.mxu0 0.0
    %2082 = vmatpush1.msra.mxu0 0.0
    %2083 = vmatprep.subr.mxu0 0.0
    %2084 = vmatpush1.msra.mxu0 0.0
    %2085 = vmatprep.subr.mxu0 0.0
    %2086 = vmatpush1.msra.mxu0 0.0
    %2087 = vmatprep.subr.mxu0 0.0
    %2088 = vmatpush1.msra.mxu0 0.0
    %2089 = vmatprep.subr.mxu0 0.0
    %2090 = vmatpush1.msra.mxu0 0.0
    %2091 = vmatprep.subr.mxu0 0.0
    %2092 = vmatpush1.msra.mxu0 0.0
    %2093 = vmatprep.subr.mxu0 0.0
    %2094 = vmatpush1.msra.mxu0 0.0
    %2095 = vmatprep.subr.mxu0 0.0
    %2096 = vmatpush1.msra.mxu0 0.0
    %2097 = vmatprep.subr.mxu0 0.0
    %2098 = vmatpush1.msra.mxu0 0.0
    %2099 = vmatprep.subr.mxu0 0.0
    %2100 = vmatpush1.msra.mxu0 0.0
    %2101 = vmatprep.subr.mxu0 0.0
    %2102 = vmatpush1.msra.mxu0 0.0
    %2103 = vmatprep.subr.mxu0 0.0
    %2104 = vmatpush1.msra.mxu0 0.0
    %2105 = vmatprep.subr.mxu0 0.0
    %2106 = vmatpush1.msra.mxu0 0.0
    %2107 = vmatprep.subr.mxu0 0.0
    %2108 = vmatpush1.msra.mxu0 0.0
    %2109 = vmatprep.subr.mxu0 0.0
    %2110 = vmatpush1.msra.mxu0 0.0
    %2111 = vmatprep.subr.mxu0 0.0
    %2112 = vmatpush1.msra.mxu0 0.0
    %2113 = vmatprep.subr.mxu0 0.0
    %2114 = vmatpush1.msra.mxu0 0.0
    %2115 = vmatprep.subr.mxu0 0.0
    %2116 = vmatpush1.msra.mxu0 0.0
    %2117 = vmatprep.subr.mxu0 0.0
    %2118 = vmatpush1.msra.mxu0 0.0
    %2119 = vmatprep.subr.mxu0 0.0
    %2120 = vmatpush1.msra.mxu0 0.0
    %2121 = vmatprep.subr.mxu0 0.0
    %2122 = vmatpush1.msra.mxu0 0.0
    %2123 = vmatprep.subr.mxu0 0.0
    %2124 = vmatpush1.msra.mxu0 0.0
    %2125 = vmatprep.subr.mxu0 0.0
    %2126 = vmatpush1.msra.mxu0 0.0
    %2127 = vmatprep.subr.mxu0 0.0
    %2128 = vmatpush1.msra.mxu0 0.0
    %2129 = vmatprep.subr.mxu0 0.0
    %2130 = vmatpush1.msra.mxu0 0.0
    %2131 = vmatprep.subr.mxu0 0.0
    %2132 = vmatpush1.msra.mxu0 0.0
    %2133 = vmatprep.subr.mxu0 0.0
    %2134 = vmatpush1.msra.mxu0 0.0
    %2135 = vmatprep.subr.mxu0 0.0
    %2136 = vmatpush1.msra.mxu0 0.0
    %2137 = vmatprep.subr.mxu0 0.0
    %2138 = vmatpush1.msra.mxu0 0.0
    %2139 = vmatprep.subr.mxu0 0.0
    %2140 = vmatpush1.msra.mxu0 0.0
    %2141 = vmatprep.mubr.f32.mxu0 0.0
    %2142 = vmatmul.mubr.f32.gmra.mrb[0].mxu0 %v2072
    %v2143 = vpop.f32.mrb[0].mxu0
    %v2144 = vadd.f32 0.0, %v2143
    %v2145 = vpop.f32.mrb[0].mxu0
    %2146 = vmatprep.mubr.f32.mxu0 0.0
    %2147 = vmatmul.mubr.f32.gmra.mrb[0].mxu0 %v2075
    %v2148 = vpop.f32.mrb[0].mxu0
    %v2149 = vadd.f32 0.0, %v2148
    %v2150 = vpop.f32.mrb[0].mxu0
    %2151 = vdwg.mxu0
    %v2153 = vsel %vm219, %v2144, 0
    %v2156 = vsel %vm219, %v2149, 0
    %2158 = vmatprep.subr.mxu0 0.0
    %2159 = vmatpush1.msra.mxu0 %v1749
    %2160 = vmatprep.subr.mxu0 0.0
    %2161 = vmatpush1.msra.mxu0 0.0
    %2162 = vmatprep.subr.mxu0 0.0
    %2163 = vmatpush1.msra.mxu0 0.0
    %2164 = vmatprep.subr.mxu0 0.0
    %2165 = vmatpush1.msra.mxu0 0.0
    %2166 = vmatprep.subr.mxu0 0.0
    %2167 = vmatpush1.msra.mxu0 0.0
    %2168 = vmatprep.subr.mxu0 0.0
    %2169 = vmatpush1.msra.mxu0 0.0
    %2170 = vmatprep.subr.mxu0 0.0
    %2171 = vmatpush1.msra.mxu0 0.0
    %2172 = vmatprep.subr.mxu0 0.0
    %2173 = vmatpush1.msra.mxu0 0.0
    %2174 = vmatprep.subr.mxu0 0.0
    %2175 = vmatpush1.msra.mxu0 0.0
    %2176 = vmatprep.subr.mxu0 0.0
    %2177 = vmatpush1.msra.mxu0 0.0
    %2178 = vmatprep.subr.mxu0 0.0
    %2179 = vmatpush1.msra.mxu0 0.0
    %2180 = vmatprep.subr.mxu0 0.0
    %2181 = vmatpush1.msra.mxu0 0.0
    %2182 = vmatprep.subr.mxu0 0.0
    %2183 = vmatpush1.msra.mxu0 0.0
    %2184 = vmatprep.subr.mxu0 0.0
    %2185 = vmatpush1.msra.mxu0 0.0
    %2186 = vmatprep.subr.mxu0 0.0
    %2187 = vmatpush1.msra.mxu0 0.0
    %2188 = vmatprep.subr.mxu0 0.0
    %2189 = vmatpush1.msra.mxu0 0.0
    %2190 = vmatprep.subr.mxu0 0.0
    %2191 = vmatpush1.msra.mxu0 0.0
    %2192 = vmatprep.subr.mxu0 0.0
    %2193 = vmatpush1.msra.mxu0 0.0
    %2194 = vmatprep.subr.mxu0 0.0
    %2195 = vmatpush1.msra.mxu0 0.0
    %2196 = vmatprep.subr.mxu0 0.0
    %2197 = vmatpush1.msra.mxu0 0.0
    %2198 = vmatprep.subr.mxu0 0.0
    %2199 = vmatpush1.msra.mxu0 0.0
    %2200 = vmatprep.subr.mxu0 0.0
    %2201 = vmatpush1.msra.mxu0 0.0
    %2202 = vmatprep.subr.mxu0 0.0
    %2203 = vmatpush1.msra.mxu0 0.0
    %2204 = vmatprep.subr.mxu0 0.0
    %2205 = vmatpush1.msra.mxu0 0.0
    %2206 = vmatprep.subr.mxu0 0.0
    %2207 = vmatpush1.msra.mxu0 0.0
    %2208 = vmatprep.subr.mxu0 0.0
    %2209 = vmatpush1.msra.mxu0 0.0
    %2210 = vmatprep.subr.mxu0 0.0
    %2211 = vmatpush1.msra.mxu0 0.0
    %2212 = vmatprep.subr.mxu0 0.0
    %2213 = vmatpush1.msra.mxu0 0.0
    %2214 = vmatprep.subr.mxu0 0.0
    %2215 = vmatpush1.msra.mxu0 0.0
    %2216 = vmatprep.subr.mxu0 0.0
    %2217 = vmatpush1.msra.mxu0 0.0
    %2218 = vmatprep.subr.mxu0 0.0
    %2219 = vmatpush1.msra.mxu0 0.0
    %2220 = vmatprep.subr.mxu0 0.0
    %2221 = vmatpush1.msra.mxu0 0.0
    %2222 = vmatprep.mubr.f32.mxu0 0.0
    %2223 = vmatmul.mubr.f32.gmra.mrb[0].mxu0 %v2153
    %v2224 = vpop.f32.mrb[0].mxu0
    %v2225 = vadd.f32 0.0, %v2224
    %v2226 = vpop.f32.mrb[0].mxu0
    %2227 = vmatprep.mubr.f32.mxu0 0.0
    %2228 = vmatmul.mubr.f32.gmra.mrb[0].mxu0 %v2156
    %v2229 = vpop.f32.mrb[0].mxu0
    %v2230 = vadd.f32 0.0, %v2229
    %v2231 = vpop.f32.mrb[0].mxu0
    %2232 = vdwg.mxu0
    %v2234 = vsel %vm219, %v1944, 0
    %v2237 = vsel %vm219, %v1949, 0
    %2239 = vmatprep.subr.mxu0 0.0
    %2240 = vmatpush1.msra.mxu0 %v1748
    %2241 = vmatprep.subr.mxu0 0.0
    %2242 = vmatpush1.msra.mxu0 0.0
    %2243 = vmatprep.subr.mxu0 0.0
    %2244 = vmatpush1.msra.mxu0 0.0
    %2245 = vmatprep.subr.mxu0 0.0
    %2246 = vmatpush1.msra.mxu0 0.0
    %2247 = vmatprep.subr.mxu0 0.0
    %2248 = vmatpush1.msra.mxu0 0.0
    %2249 = vmatprep.subr.mxu0 0.0
    %2250 = vmatpush1.msra.mxu0 0.0
    %2251 = vmatprep.subr.mxu0 0.0
    %2252 = vmatpush1.msra.mxu0 0.0
    %2253 = vmatprep.subr.mxu0 0.0
    %2254 = vmatpush1.msra.mxu0 0.0
    %2255 = vmatprep.subr.mxu0 0.0
    %2256 = vmatpush1.msra.mxu0 0.0
    %2257 = vmatprep.subr.mxu0 0.0
    %2258 = vmatpush1.msra.mxu0 0.0
    %2259 = vmatprep.subr.mxu0 0.0
    %2260 = vmatpush1.msra.mxu0 0.0
    %2261 = vmatprep.subr.mxu0 0.0
    %2262 = vmatpush1.msra.mxu0 0.0
    %2263 = vmatprep.subr.mxu0 0.0
    %2264 = vmatpush1.msra.mxu0 0.0
    %2265 = vmatprep.subr.mxu0 0.0
    %2266 = vmatpush1.msra.mxu0 0.0
    %2267 = vmatprep.subr.mxu0 0.0
    %2268 = vmatpush1.msra.mxu0 0.0
    %2269 = vmatprep.subr.mxu0 0.0
    %2270 = vmatpush1.msra.mxu0 0.0
    %2271 = vmatprep.subr.mxu0 0.0
    %2272 = vmatpush1.msra.mxu0 0.0
    %2273 = vmatprep.subr.mxu0 0.0
    %2274 = vmatpush1.msra.mxu0 0.0
    %2275 = vmatprep.subr.mxu0 0.0
    %2276 = vmatpush1.msra.mxu0 0.0
    %2277 = vmatprep.subr.mxu0 0.0
    %2278 = vmatpush1.msra.mxu0 0.0
    %2279 = vmatprep.subr.mxu0 0.0
    %2280 = vmatpush1.msra.mxu0 0.0
    %2281 = vmatprep.subr.mxu0 0.0
    %2282 = vmatpush1.msra.mxu0 0.0
    %2283 = vmatprep.subr.mxu0 0.0
    %2284 = vmatpush1.msra.mxu0 0.0
    %2285 = vmatprep.subr.mxu0 0.0
    %2286 = vmatpush1.msra.mxu0 0.0
    %2287 = vmatprep.subr.mxu0 0.0
    %2288 = vmatpush1.msra.mxu0 0.0
    %2289 = vmatprep.subr.mxu0 0.0
    %2290 = vmatpush1.msra.mxu0 0.0
    %2291 = vmatprep.subr.mxu0 0.0
    %2292 = vmatpush1.msra.mxu0 0.0
    %2293 = vmatprep.subr.mxu0 0.0
    %2294 = vmatpush1.msra.mxu0 0.0
    %2295 = vmatprep.subr.mxu0 0.0
    %2296 = vmatpush1.msra.mxu0 0.0
    %2297 = vmatprep.subr.mxu0 0.0
    %2298 = vmatpush1.msra.mxu0 0.0
    %2299 = vmatprep.subr.mxu0 0.0
    %2300 = vmatpush1.msra.mxu0 0.0
    %2301 = vmatprep.subr.mxu0 0.0
    %2302 = vmatpush1.msra.mxu0 0.0
    %2303 = vmatprep.mubr.f32.mxu0 0.0
    %2304 = vmatmul.mubr.f32.gmra.mrb[0].mxu0 %v2234
    %v2305 = vpop.f32.mrb[0].mxu0
    %v2306 = vadd.f32 %v2225, %v2305
    %v2307 = vpop.f32.mrb[0].mxu0
    %2308 = vmatprep.mubr.f32.mxu0 0.0
    %2309 = vmatmul.mubr.f32.gmra.mrb[0].mxu0 %v2237
    %v2310 = vpop.f32.mrb[0].mxu0
    %v2311 = vadd.f32 %v2230, %v2310
    %v2312 = vpop.f32.mrb[0].mxu0
    %2313 = vdwg.mxu0
    %2314 = vrot.lane.b32.xlu0 %v1745, 112
    %v2315 = vpop.permute.xlu0 %2314
    %2316 = vrot.lane.b32.xlu0 %v1746, 112
    %v2317 = vpop.permute.xlu0 %2316
    %2318 = vrot.lane.b32.xlu0 %v1737, 80
    %v2319 = vpop.permute.xlu0 %2318
    %2320 = vrot.lane.b32.xlu0 %v1742, 80
    %v2321 = vpop.permute.xlu0 %2320
    %v2322 = vsel %vm219, %v2315, 0
    %v2324 = vsel %vm219, %v2317, 0
    %v2326 = vsel %vm219, %v2319, 0
    %v2328 = vsel %vm219, %v2321, 0
    %2330 = vmatprep.subr.mxu0 0.0
    %2331 = vmatpush1.xpose.msra.mxu0 %v2326
    %2332 = vmatprep.subr.mxu0 0.0
    %2333 = vmatpush1.xpose.msra.mxu0 %v2328
    %2334 = vmatprep.subr.mxu0 0.0
    %2335 = vmatpush1.xpose.msra.mxu0 0.0
    %2336 = vmatprep.subr.mxu0 0.0
    %2337 = vmatpush1.xpose.msra.mxu0 0.0
    %2338 = vmatprep.subr.mxu0 0.0
    %2339 = vmatpush1.xpose.msra.mxu0 0.0
    %2340 = vmatprep.subr.mxu0 0.0
    %2341 = vmatpush1.xpose.msra.mxu0 0.0
    %2342 = vmatprep.subr.mxu0 0.0
    %2343 = vmatpush1.xpose.msra.mxu0 0.0
    %2344 = vmatprep.subr.mxu0 0.0
    %2345 = vmatpush1.xpose.msra.mxu0 0.0
    %2346 = vmatprep.subr.mxu0 0.0
    %2347 = vmatpush1.xpose.msra.mxu0 0.0
    %2348 = vmatprep.subr.mxu0 0.0
    %2349 = vmatpush1.xpose.msra.mxu0 0.0
    %2350 = vmatprep.subr.mxu0 0.0
    %2351 = vmatpush1.xpose.msra.mxu0 0.0
    %2352 = vmatprep.subr.mxu0 0.0
    %2353 = vmatpush1.xpose.msra.mxu0 0.0
    %2354 = vmatprep.subr.mxu0 0.0
    %2355 = vmatpush1.xpose.msra.mxu0 0.0
    %2356 = vmatprep.subr.mxu0 0.0
    %2357 = vmatpush1.xpose.msra.mxu0 0.0
    %2358 = vmatprep.subr.mxu0 0.0
    %2359 = vmatpush1.xpose.msra.mxu0 0.0
    %2360 = vmatprep.subr.mxu0 0.0
    %2361 = vmatpush1.xpose.msra.mxu0 0.0
    %2362 = vmatprep.subr.mxu0 0.0
    %2363 = vmatpush1.xpose.msra.mxu0 0.0
    %2364 = vmatprep.subr.mxu0 0.0
    %2365 = vmatpush1.xpose.msra.mxu0 0.0
    %2366 = vmatprep.subr.mxu0 0.0
    %2367 = vmatpush1.xpose.msra.mxu0 0.0
    %2368 = vmatprep.subr.mxu0 0.0
    %2369 = vmatpush1.xpose.msra.mxu0 0.0
    %2370 = vmatprep.subr.mxu0 0.0
    %2371 = vmatpush1.xpose.msra.mxu0 0.0
    %2372 = vmatprep.subr.mxu0 0.0
    %2373 = vmatpush1.xpose.msra.mxu0 0.0
    %2374 = vmatprep.subr.mxu0 0.0
    %2375 = vmatpush1.xpose.msra.mxu0 0.0
    %2376 = vmatprep.subr.mxu0 0.0
    %2377 = vmatpush1.xpose.msra.mxu0 0.0
    %2378 = vmatprep.subr.mxu0 0.0
    %2379 = vmatpush1.xpose.msra.mxu0 0.0
    %2380 = vmatprep.subr.mxu0 0.0
    %2381 = vmatpush1.xpose.msra.mxu0 0.0
    %2382 = vmatprep.subr.mxu0 0.0
    %2383 = vmatpush1.xpose.msra.mxu0 0.0
    %2384 = vmatprep.subr.mxu0 0.0
    %2385 = vmatpush1.xpose.msra.mxu0 0.0
    %2386 = vmatprep.subr.mxu0 0.0
    %2387 = vmatpush1.xpose.msra.mxu0 0.0
    %2388 = vmatprep.subr.mxu0 0.0
    %2389 = vmatpush1.xpose.msra.mxu0 0.0
    %2390 = vmatprep.subr.mxu0 0.0
    %2391 = vmatpush1.xpose.msra.mxu0 0.0
    %2392 = vmatprep.subr.mxu0 0.0
    %2393 = vmatpush1.xpose.msra.mxu0 0.0
    %2394 = vmatprep.mubr.f32.mxu0 0.0
    %2395 = vmatmul.mubr.f32.gmra.mrb[0].mxu0 %v2322
    %v2396 = vpop.f32.mrb[0].mxu0
    %v2397 = vadd.f32 %v113, %v2396
    %v2398 = vpop.f32.mrb[0].mxu0
    %2399 = vmatprep.mubr.f32.mxu0 0.0
    %2400 = vmatmul.mubr.f32.gmra.mrb[0].mxu0 %v2324
    %v2401 = vpop.f32.mrb[0].mxu0
    %v2402 = vadd.f32 %v114, %v2401
    %v2403 = vpop.f32.mrb[0].mxu0
    %2404 = vdwg.mxu0
    %v2405 = vsel %vm305, %v2397, -inf
    %2406 = vmax.xlane.f32.xlu0 %v2405
    %v2407 = vpop.xlane.xlu0 %2406
    %v2408 = vsel %vm305, %v2402, -inf
    %2409 = vmax.xlane.f32.xlu0 %v2408
    %v2410 = vpop.xlane.xlu0 %2409
    %v2411 = vsub.f32 %v2397, %v2407
    %v2412 = vsub.f32 %v2402, %v2410
    %v2413 = vmul.f32 %v2411, 1.442695
    %v2414 = vpow.pop %v2413
    %v2415 = vmul.f32 %v2412, 1.442695
    %v2416 = vpow.pop %v2415
    %v2417 = vsel %vm305, %v2414, 0.0
    %2418 = vadd.xlane.f32.xlu0 %v2417
    %v2419 = vpop.xlane.xlu0 %2418
    %v2420 = vsel %vm305, %v2416, 0.0
    %2421 = vadd.xlane.f32.xlu0 %v2420
    %v2422 = vpop.xlane.xlu0 %2421
    %v2423 = vrcp.pop %v2419
    %v2424 = vrcp.pop %v2422
    %v2425 = vmul.f32 %v2414, %v2423
    %v2426 = vmul.f32 %v2416, %v2424
    %2427 = vrot.lane.b32.xlu0 %v1737, 48
    %v2428 = vpop.permute.xlu0 %2427
    %2429 = vrot.lane.b32.xlu0 %v1742, 48
    %v2430 = vpop.permute.xlu0 %2429
    %v2434 = vsel %vm305, %v2425, 0
    %v2437 = vsel %vm305, %v2426, 0
    %2439 = vmatprep.subr.mxu0 0.0
    %2440 = vmatpush1.msra.mxu0 %v2428
    %2441 = vmatprep.subr.mxu0 0.0
    %2442 = vmatpush1.msra.mxu0 %v2430
    %2443 = vmatprep.subr.mxu0 0.0
    %2444 = vmatpush1.msra.mxu0 0.0
    %2445 = vmatprep.subr.mxu0 0.0
    %2446 = vmatpush1.msra.mxu0 0.0
    %2447 = vmatprep.subr.mxu0 0.0
    %2448 = vmatpush1.msra.mxu0 0.0
    %2449 = vmatprep.subr.mxu0 0.0
    %2450 = vmatpush1.msra.mxu0 0.0
    %2451 = vmatprep.subr.mxu0 0.0
    %2452 = vmatpush1.msra.mxu0 0.0
    %2453 = vmatprep.subr.mxu0 0.0
    %2454 = vmatpush1.msra.mxu0 0.0
    %2455 = vmatprep.subr.mxu0 0.0
    %2456 = vmatpush1.msra.mxu0 0.0
    %2457 = vmatprep.subr.mxu0 0.0
    %2458 = vmatpush1.msra.mxu0 0.0
    %2459 = vmatprep.subr.mxu0 0.0
    %2460 = vmatpush1.msra.mxu0 0.0
    %2461 = vmatprep.subr.mxu0 0.0
    %2462 = vmatpush1.msra.mxu0 0.0
    %2463 = vmatprep.subr.mxu0 0.0
    %2464 = vmatpush1.msra.mxu0 0.0
    %2465 = vmatprep.subr.mxu0 0.0
    %2466 = vmatpush1.msra.mxu0 0.0
    %2467 = vmatprep.subr.mxu0 0.0
    %2468 = vmatpush1.msra.mxu0 0.0
    %2469 = vmatprep.subr.mxu0 0.0
    %2470 = vmatpush1.msra.mxu0 0.0
    %2471 = vmatprep.subr.mxu0 0.0
    %2472 = vmatpush1.msra.mxu0 0.0
    %2473 = vmatprep.subr.mxu0 0.0
    %2474 = vmatpush1.msra.mxu0 0.0
    %2475 = vmatprep.subr.mxu0 0.0
    %2476 = vmatpush1.msra.mxu0 0.0
    %2477 = vmatprep.subr.mxu0 0.0
    %2478 = vmatpush1.msra.mxu0 0.0
    %2479 = vmatprep.subr.mxu0 0.0
    %2480 = vmatpush1.msra.mxu0 0.0
    %2481 = vmatprep.subr.mxu0 0.0
    %2482 = vmatpush1.msra.mxu0 0.0
    %2483 = vmatprep.subr.mxu0 0.0
    %2484 = vmatpush1.msra.mxu0 0.0
    %2485 = vmatprep.subr.mxu0 0.0
    %2486 = vmatpush1.msra.mxu0 0.0
    %2487 = vmatprep.subr.mxu0 0.0
    %2488 = vmatpush1.msra.mxu0 0.0
    %2489 = vmatprep.subr.mxu0 0.0
    %2490 = vmatpush1.msra.mxu0 0.0
    %2491 = vmatprep.subr.mxu0 0.0
    %2492 = vmatpush1.msra.mxu0 0.0
    %2493 = vmatprep.subr.mxu0 0.0
    %2494 = vmatpush1.msra.mxu0 0.0
    %2495 = vmatprep.subr.mxu0 0.0
    %2496 = vmatpush1.msra.mxu0 0.0
    %2497 = vmatprep.subr.mxu0 0.0
    %2498 = vmatpush1.msra.mxu0 0.0
    %2499 = vmatprep.subr.mxu0 0.0
    %2500 = vmatpush1.msra.mxu0 0.0
    %2501 = vmatprep.subr.mxu0 0.0
    %2502 = vmatpush1.msra.mxu0 0.0
    %2503 = vmatprep.mubr.f32.mxu0 0.0
    %2504 = vmatmul.mubr.f32.gmra.mrb[0].mxu0 %v2434
    %v2505 = vpop.f32.mrb[0].mxu0
    %v2506 = vadd.f32 0.0, %v2505
    %v2507 = vpop.f32.mrb[0].mxu0
    %2508 = vmatprep.mubr.f32.mxu0 0.0
    %2509 = vmatmul.mubr.f32.gmra.mrb[0].mxu0 %v2437
    %v2510 = vpop.f32.mrb[0].mxu0
    %v2511 = vadd.f32 0.0, %v2510
    %v2512 = vpop.f32.mrb[0].mxu0
    %2513 = vdwg.mxu0
    %v2515 = vsel %vm219, %v2506, 0
    %v2518 = vsel %vm219, %v2511, 0
    %2520 = vmatprep.subr.mxu0 0.0
    %2521 = vmatpush1.msra.mxu0 %v1750
    %2522 = vmatprep.subr.mxu0 0.0
    %2523 = vmatpush1.msra.mxu0 0.0
    %2524 = vmatprep.subr.mxu0 0.0
    %2525 = vmatpush1.msra.mxu0 0.0
    %2526 = vmatprep.subr.mxu0 0.0
    %2527 = vmatpush1.msra.mxu0 0.0
    %2528 = vmatprep.subr.mxu0 0.0
    %2529 = vmatpush1.msra.mxu0 0.0
    %2530 = vmatprep.subr.mxu0 0.0
    %2531 = vmatpush1.msra.mxu0 0.0
    %2532 = vmatprep.subr.mxu0 0.0
    %2533 = vmatpush1.msra.mxu0 0.0
    %2534 = vmatprep.subr.mxu0 0.0
    %2535 = vmatpush1.msra.mxu0 0.0
    %2536 = vmatprep.subr.mxu0 0.0
    %2537 = vmatpush1.msra.mxu0 0.0
    %2538 = vmatprep.subr.mxu0 0.0
    %2539 = vmatpush1.msra.mxu0 0.0
    %2540 = vmatprep.subr.mxu0 0.0
    %2541 = vmatpush1.msra.mxu0 0.0
    %2542 = vmatprep.subr.mxu0 0.0
    %2543 = vmatpush1.msra.mxu0 0.0
    %2544 = vmatprep.subr.mxu0 0.0
    %2545 = vmatpush1.msra.mxu0 0.0
    %2546 = vmatprep.subr.mxu0 0.0
    %2547 = vmatpush1.msra.mxu0 0.0
    %2548 = vmatprep.subr.mxu0 0.0
    %2549 = vmatpush1.msra.mxu0 0.0
    %2550 = vmatprep.subr.mxu0 0.0
    %2551 = vmatpush1.msra.mxu0 0.0
    %2552 = vmatprep.subr.mxu0 0.0
    %2553 = vmatpush1.msra.mxu0 0.0
    %2554 = vmatprep.subr.mxu0 0.0
    %2555 = vmatpush1.msra.mxu0 0.0
    %2556 = vmatprep.subr.mxu0 0.0
    %2557 = vmatpush1.msra.mxu0 0.0
    %2558 = vmatprep.subr.mxu0 0.0
    %2559 = vmatpush1.msra.mxu0 0.0
    %2560 = vmatprep.subr.mxu0 0.0
    %2561 = vmatpush1.msra.mxu0 0.0
    %2562 = vmatprep.subr.mxu0 0.0
    %2563 = vmatpush1.msra.mxu0 0.0
    %2564 = vmatprep.subr.mxu0 0.0
    %2565 = vmatpush1.msra.mxu0 0.0
    %2566 = vmatprep.subr.mxu0 0.0
    %2567 = vmatpush1.msra.mxu0 0.0
    %2568 = vmatprep.subr.mxu0 0.0
    %2569 = vmatpush1.msra.mxu0 0.0
    %2570 = vmatprep.subr.mxu0 0.0
    %2571 = vmatpush1.msra.mxu0 0.0
    %2572 = vmatprep.subr.mxu0 0.0
    %2573 = vmatpush1.msra.mxu0 0.0
    %2574 = vmatprep.subr.mxu0 0.0
    %2575 = vmatpush1.msra.mxu0 0.0
    %2576 = vmatprep.subr.mxu0 0.0
    %2577 = vmatpush1.msra.mxu0 0.0
    %2578 = vmatprep.subr.mxu0 0.0
    %2579 = vmatpush1.msra.mxu0 0.0
    %2580 = vmatprep.subr.mxu0 0.0
    %2581 = vmatpush1.msra.mxu0 0.0
    %2582 = vmatprep.subr.mxu0 0.0
    %2583 = vmatpush1.msra.mxu0 0.0
    %2584 = vmatprep.mubr.f32.mxu0 0.0
    %2585 = vmatmul.mubr.f32.gmra.mrb[0].mxu0 %v2515
    %v2586 = vpop.f32.mrb[0].mxu0
    %v2587 = vadd.f32 0.0, %v2586
    %v2588 = vpop.f32.mrb[0].mxu0
    %2589 = vmatprep.mubr.f32.mxu0 0.0
    %2590 = vmatmul.mubr.f32.gmra.mrb[0].mxu0 %v2518
    %v2591 = vpop.f32.mrb[0].mxu0
    %v2592 = vadd.f32 0.0, %v2591
    %v2593 = vpop.f32.mrb[0].mxu0
    %2594 = vdwg.mxu0
    %v2595 = vadd.f32 %v2306, %v2587
    %v2596 = vadd.f32 %v2311, %v2592
    %2597 = vrot.lane.b32.xlu0 %v1745, 104
    %v2598 = vpop.permute.xlu0 %2597
    %2599 = vrot.lane.b32.xlu0 %v1746, 104
    %v2600 = vpop.permute.xlu0 %2599
    %2601 = vrot.lane.b32.xlu0 %v1737, 72
    %v2602 = vpop.permute.xlu0 %2601
    %2603 = vrot.lane.b32.xlu0 %v1742, 72
    %v2604 = vpop.permute.xlu0 %2603
    %v2605 = vsel %vm219, %v2598, 0
    %v2607 = vsel %vm219, %v2600, 0
    %v2609 = vsel %vm219, %v2602, 0
    %v2611 = vsel %vm219, %v2604, 0
    %2613 = vmatprep.subr.mxu0 0.0
    %2614 = vmatpush1.xpose.msra.mxu0 %v2609
    %2615 = vmatprep.subr.mxu0 0.0
    %2616 = vmatpush1.xpose.msra.mxu0 %v2611
    %2617 = vmatprep.subr.mxu0 0.0
    %2618 = vmatpush1.xpose.msra.mxu0 0.0
    %2619 = vmatprep.subr.mxu0 0.0
    %2620 = vmatpush1.xpose.msra.mxu0 0.0
    %2621 = vmatprep.subr.mxu0 0.0
    %2622 = vmatpush1.xpose.msra.mxu0 0.0
    %2623 = vmatprep.subr.mxu0 0.0
    %2624 = vmatpush1.xpose.msra.mxu0 0.0
    %2625 = vmatprep.subr.mxu0 0.0
    %2626 = vmatpush1.xpose.msra.mxu0 0.0
    %2627 = vmatprep.subr.mxu0 0.0
    %2628 = vmatpush1.xpose.msra.mxu0 0.0
    %2629 = vmatprep.subr.mxu0 0.0
    %2630 = vmatpush1.xpose.msra.mxu0 0.0
    %2631 = vmatprep.subr.mxu0 0.0
    %2632 = vmatpush1.xpose.msra.mxu0 0.0
    %2633 = vmatprep.subr.mxu0 0.0
    %2634 = vmatpush1.xpose.msra.mxu0 0.0
    %2635 = vmatprep.subr.mxu0 0.0
    %2636 = vmatpush1.xpose.msra.mxu0 0.0
    %2637 = vmatprep.subr.mxu0 0.0
    %2638 = vmatpush1.xpose.msra.mxu0 0.0
    %2639 = vmatprep.subr.mxu0 0.0
    %2640 = vmatpush1.xpose.msra.mxu0 0.0
    %2641 = vmatprep.subr.mxu0 0.0
    %2642 = vmatpush1.xpose.msra.mxu0 0.0
    %2643 = vmatprep.subr.mxu0 0.0
    %2644 = vmatpush1.xpose.msra.mxu0 0.0
    %2645 = vmatprep.subr.mxu0 0.0
    %2646 = vmatpush1.xpose.msra.mxu0 0.0
    %2647 = vmatprep.subr.mxu0 0.0
    %2648 = vmatpush1.xpose.msra.mxu0 0.0
    %2649 = vmatprep.subr.mxu0 0.0
    %2650 = vmatpush1.xpose.msra.mxu0 0.0
    %2651 = vmatprep.subr.mxu0 0.0
    %2652 = vmatpush1.xpose.msra.mxu0 0.0
    %2653 = vmatprep.subr.mxu0 0.0
    %2654 = vmatpush1.xpose.msra.mxu0 0.0
    %2655 = vmatprep.subr.mxu0 0.0
    %2656 = vmatpush1.xpose.msra.mxu0 0.0
    %2657 = vmatprep.subr.mxu0 0.0
    %2658 = vmatpush1.xpose.msra.mxu0 0.0
    %2659 = vmatprep.subr.mxu0 0.0
    %2660 = vmatpush1.xpose.msra.mxu0 0.0
    %2661 = vmatprep.subr.mxu0 0.0
    %2662 = vmatpush1.xpose.msra.mxu0 0.0
    %2663 = vmatprep.subr.mxu0 0.0
    %2664 = vmatpush1.xpose.msra.mxu0 0.0
    %2665 = vmatprep.subr.mxu0 0.0
    %2666 = vmatpush1.xpose.msra.mxu0 0.0
    %2667 = vmatprep.subr.mxu0 0.0
    %2668 = vmatpush1.xpose.msra.mxu0 0.0
    %2669 = vmatprep.subr.mxu0 0.0
    %2670 = vmatpush1.xpose.msra.mxu0 0.0
    %2671 = vmatprep.subr.mxu0 0.0
    %2672 = vmatpush1.xpose.msra.mxu0 0.0
    %2673 = vmatprep.subr.mxu0 0.0
    %2674 = vmatpush1.xpose.msra.mxu0 0.0
    %2675 = vmatprep.subr.mxu0 0.0
    %2676 = vmatpush1.xpose.msra.mxu0 0.0
    %2677 = vmatprep.mubr.f32.mxu0 0.0
    %2678 = vmatmul.mubr.f32.gmra.mrb[0].mxu0 %v2605
    %v2679 = vpop.f32.mrb[0].mxu0
    %v2680 = vadd.f32 %v113, %v2679
    %v2681 = vpop.f32.mrb[0].mxu0
    %2682 = vmatprep.mubr.f32.mxu0 0.0
    %2683 = vmatmul.mubr.f32.gmra.mrb[0].mxu0 %v2607
    %v2684 = vpop.f32.mrb[0].mxu0
    %v2685 = vadd.f32 %v114, %v2684
    %v2686 = vpop.f32.mrb[0].mxu0
    %2687 = vdwg.mxu0
    %v2688 = vsel %vm305, %v2680, -inf
    %2689 = vmax.xlane.f32.xlu0 %v2688
    %v2690 = vpop.xlane.xlu0 %2689
    %v2691 = vsel %vm305, %v2685, -inf
    %2692 = vmax.xlane.f32.xlu0 %v2691
    %v2693 = vpop.xlane.xlu0 %2692
    %v2694 = vsub.f32 %v2680, %v2690
    %v2695 = vsub.f32 %v2685, %v2693
    %v2696 = vmul.f32 %v2694, 1.442695
    %v2697 = vpow.pop %v2696
    %v2698 = vmul.f32 %v2695, 1.442695
    %v2699 = vpow.pop %v2698
    %v2700 = vsel %vm305, %v2697, 0.0
    %2701 = vadd.xlane.f32.xlu0 %v2700
    %v2702 = vpop.xlane.xlu0 %2701
    %v2703 = vsel %vm305, %v2699, 0.0
    %2704 = vadd.xlane.f32.xlu0 %v2703
    %v2705 = vpop.xlane.xlu0 %2704
    %v2706 = vrcp.pop %v2702
    %v2707 = vrcp.pop %v2705
    %v2708 = vmul.f32 %v2697, %v2706
    %v2709 = vmul.f32 %v2699, %v2707
    %2710 = vrot.lane.b32.xlu0 %v1737, 40
    %v2711 = vpop.permute.xlu0 %2710
    %2712 = vrot.lane.b32.xlu0 %v1742, 40
    %v2713 = vpop.permute.xlu0 %2712
    %v2717 = vsel %vm305, %v2708, 0
    %v2720 = vsel %vm305, %v2709, 0
    %2722 = vmatprep.subr.mxu0 0.0
    %2723 = vmatpush1.msra.mxu0 %v2711
    %2724 = vmatprep.subr.mxu0 0.0
    %2725 = vmatpush1.msra.mxu0 %v2713
    %2726 = vmatprep.subr.mxu0 0.0
    %2727 = vmatpush1.msra.mxu0 0.0
    %2728 = vmatprep.subr.mxu0 0.0
    %2729 = vmatpush1.msra.mxu0 0.0
    %2730 = vmatprep.subr.mxu0 0.0
    %2731 = vmatpush1.msra.mxu0 0.0
    %2732 = vmatprep.subr.mxu0 0.0
    %2733 = vmatpush1.msra.mxu0 0.0
    %2734 = vmatprep.subr.mxu0 0.0
    %2735 = vmatpush1.msra.mxu0 0.0
    %2736 = vmatprep.subr.mxu0 0.0
    %2737 = vmatpush1.msra.mxu0 0.0
    %2738 = vmatprep.subr.mxu0 0.0
    %2739 = vmatpush1.msra.mxu0 0.0
    %2740 = vmatprep.subr.mxu0 0.0
    %2741 = vmatpush1.msra.mxu0 0.0
    %2742 = vmatprep.subr.mxu0 0.0
    %2743 = vmatpush1.msra.mxu0 0.0
    %2744 = vmatprep.subr.mxu0 0.0
    %2745 = vmatpush1.msra.mxu0 0.0
    %2746 = vmatprep.subr.mxu0 0.0
    %2747 = vmatpush1.msra.mxu0 0.0
    %2748 = vmatprep.subr.mxu0 0.0
    %2749 = vmatpush1.msra.mxu0 0.0
    %2750 = vmatprep.subr.mxu0 0.0
    %2751 = vmatpush1.msra.mxu0 0.0
    %2752 = vmatprep.subr.mxu0 0.0
    %2753 = vmatpush1.msra.mxu0 0.0
    %2754 = vmatprep.subr.mxu0 0.0
    %2755 = vmatpush1.msra.mxu0 0.0
    %2756 = vmatprep.subr.mxu0 0.0
    %2757 = vmatpush1.msra.mxu0 0.0
    %2758 = vmatprep.subr.mxu0 0.0
    %2759 = vmatpush1.msra.mxu0 0.0
    %2760 = vmatprep.subr.mxu0 0.0
    %2761 = vmatpush1.msra.mxu0 0.0
    %2762 = vmatprep.subr.mxu0 0.0
    %2763 = vmatpush1.msra.mxu0 0.0
    %2764 = vmatprep.subr.mxu0 0.0
    %2765 = vmatpush1.msra.mxu0 0.0
    %2766 = vmatprep.subr.mxu0 0.0
    %2767 = vmatpush1.msra.mxu0 0.0
    %2768 = vmatprep.subr.mxu0 0.0
    %2769 = vmatpush1.msra.mxu0 0.0
    %2770 = vmatprep.subr.mxu0 0.0
    %2771 = vmatpush1.msra.mxu0 0.0
    %2772 = vmatprep.subr.mxu0 0.0
    %2773 = vmatpush1.msra.mxu0 0.0
    %2774 = vmatprep.subr.mxu0 0.0
    %2775 = vmatpush1.msra.mxu0 0.0
    %2776 = vmatprep.subr.mxu0 0.0
    %2777 = vmatpush1.msra.mxu0 0.0
    %2778 = vmatprep.subr.mxu0 0.0
    %2779 = vmatpush1.msra.mxu0 0.0
    %2780 = vmatprep.subr.mxu0 0.0
    %2781 = vmatpush1.msra.mxu0 0.0
    %2782 = vmatprep.subr.mxu0 0.0
    %2783 = vmatpush1.msra.mxu0 0.0
    %2784 = vmatprep.subr.mxu0 0.0
    %2785 = vmatpush1.msra.mxu0 0.0
    %2786 = vmatprep.mubr.f32.mxu0 0.0
    %2787 = vmatmul.mubr.f32.gmra.mrb[0].mxu0 %v2717
    %v2788 = vpop.f32.mrb[0].mxu0
    %v2789 = vadd.f32 0.0, %v2788
    %v2790 = vpop.f32.mrb[0].mxu0
    %2791 = vmatprep.mubr.f32.mxu0 0.0
    %2792 = vmatmul.mubr.f32.gmra.mrb[0].mxu0 %v2720
    %v2793 = vpop.f32.mrb[0].mxu0
    %v2794 = vadd.f32 0.0, %v2793
    %v2795 = vpop.f32.mrb[0].mxu0
    %2796 = vdwg.mxu0
    %v2798 = vsel %vm219, %v2789, 0
    %v2801 = vsel %vm219, %v2794, 0
    %2803 = vmatprep.subr.mxu0 0.0
    %2804 = vmatpush1.msra.mxu0 %v1751
    %2805 = vmatprep.subr.mxu0 0.0
    %2806 = vmatpush1.msra.mxu0 0.0
    %2807 = vmatprep.subr.mxu0 0.0
    %2808 = vmatpush1.msra.mxu0 0.0
    %2809 = vmatprep.subr.mxu0 0.0
    %2810 = vmatpush1.msra.mxu0 0.0
    %2811 = vmatprep.subr.mxu0 0.0
    %2812 = vmatpush1.msra.mxu0 0.0
    %2813 = vmatprep.subr.mxu0 0.0
    %2814 = vmatpush1.msra.mxu0 0.0
    %2815 = vmatprep.subr.mxu0 0.0
    %2816 = vmatpush1.msra.mxu0 0.0
    %2817 = vmatprep.subr.mxu0 0.0
    %2818 = vmatpush1.msra.mxu0 0.0
    %2819 = vmatprep.subr.mxu0 0.0
    %2820 = vmatpush1.msra.mxu0 0.0
    %2821 = vmatprep.subr.mxu0 0.0
    %2822 = vmatpush1.msra.mxu0 0.0
    %2823 = vmatprep.subr.mxu0 0.0
    %2824 = vmatpush1.msra.mxu0 0.0
    %2825 = vmatprep.subr.mxu0 0.0
    %2826 = vmatpush1.msra.mxu0 0.0
    %2827 = vmatprep.subr.mxu0 0.0
    %2828 = vmatpush1.msra.mxu0 0.0
    %2829 = vmatprep.subr.mxu0 0.0
    %2830 = vmatpush1.msra.mxu0 0.0
    %2831 = vmatprep.subr.mxu0 0.0
    %2832 = vmatpush1.msra.mxu0 0.0
    %2833 = vmatprep.subr.mxu0 0.0
    %2834 = vmatpush1.msra.mxu0 0.0
    %2835 = vmatprep.subr.mxu0 0.0
    %2836 = vmatpush1.msra.mxu0 0.0
    %2837 = vmatprep.subr.mxu0 0.0
    %2838 = vmatpush1.msra.mxu0 0.0
    %2839 = vmatprep.subr.mxu0 0.0
    %2840 = vmatpush1.msra.mxu0 0.0
    %2841 = vmatprep.subr.mxu0 0.0
    %2842 = vmatpush1.msra.mxu0 0.0
    %2843 = vmatprep.subr.mxu0 0.0
    %2844 = vmatpush1.msra.mxu0 0.0
    %2845 = vmatprep.subr.mxu0 0.0
    %2846 = vmatpush1.msra.mxu0 0.0
    %2847 = vmatprep.subr.mxu0 0.0
    %2848 = vmatpush1.msra.mxu0 0.0
    %2849 = vmatprep.subr.mxu0 0.0
    %2850 = vmatpush1.msra.mxu0 0.0
    %2851 = vmatprep.subr.mxu0 0.0
    %2852 = vmatpush1.msra.mxu0 0.0
    %2853 = vmatprep.subr.mxu0 0.0
    %2854 = vmatpush1.msra.mxu0 0.0
    %2855 = vmatprep.subr.mxu0 0.0
    %2856 = vmatpush1.msra.mxu0 0.0
    %2857 = vmatprep.subr.mxu0 0.0
    %2858 = vmatpush1.msra.mxu0 0.0
    %2859 = vmatprep.subr.mxu0 0.0
    %2860 = vmatpush1.msra.mxu0 0.0
    %2861 = vmatprep.subr.mxu0 0.0
    %2862 = vmatpush1.msra.mxu0 0.0
    %2863 = vmatprep.subr.mxu0 0.0
    %2864 = vmatpush1.msra.mxu0 0.0
    %2865 = vmatprep.subr.mxu0 0.0
    %2866 = vmatpush1.msra.mxu0 0.0
    %2867 = vmatprep.mubr.f32.mxu0 0.0
    %2868 = vmatmul.mubr.f32.gmra.mrb[0].mxu0 %v2798
    %v2869 = vpop.f32.mrb[0].mxu0
    %v2870 = vadd.f32 0.0, %v2869
    %v2871 = vpop.f32.mrb[0].mxu0
    %2872 = vmatprep.mubr.f32.mxu0 0.0
    %2873 = vmatmul.mubr.f32.gmra.mrb[0].mxu0 %v2801
    %v2874 = vpop.f32.mrb[0].mxu0
    %v2875 = vadd.f32 0.0, %v2874
    %v2876 = vpop.f32.mrb[0].mxu0
    %2877 = vdwg.mxu0
    %v2878 = vadd.f32 %v2595, %v2870
    %v2879 = vadd.f32 %v2596, %v2875
    %v2880 = vadd.f32 %v1649, %v2878
    %v2881 = vadd.f32 %v1650, %v2879
    %s2882 = scalar_lea.vmem %s8, 1
    %v2883 = vld [vmem:[%s2882] sm:$0x1]
    %v2885 = vlaneseq
    %v2886 = vshrl.u32 %v2885, 7
    %v2887 = vsub.s32 0, %v2886
    %v2888 = vrot.slane %v2883, %v2887
    %v2890 = vadd.f32 %v2880, %v2888
    %v2891 = vadd.f32 %v2881, %v2888
    %s2892 = scalar_lea.vmem %s9, 1
    %v2893 = vld [vmem:[%s2892] sm:$0x1]
    %s2894 = scalar_lea.vmem %s10, 1
    %v2895 = vld [vmem:[%s2894] sm:$0x1]
    %v2896 = vsel %vm69, %v2890, 0.0
    %2897 = vadd.xlane.f32.xlu0 %v2896
    %v2898 = vpop.xlane.xlu0 %2897
    %v2899 = vsel %vm69, %v2891, 0.0
    %2900 = vadd.xlane.f32.xlu0 %v2899
    %v2901 = vpop.xlane.xlu0 %2900
    %v2902 = vmul.f32 %v2898, %v76
    %v2903 = vmul.f32 %v2901, %v76
    %v2904 = vsub.f32 %v2890, %v2902
    %v2905 = vsub.f32 %v2891, %v2903
    %v2906 = vmul.f32 %v2904, %v2904
    %v2907 = vmul.f32 %v2905, %v2905
    %v2908 = vsel %vm69, %v2906, 0.0
    %2909 = vadd.xlane.f32.xlu0 %v2908
    %v2910 = vpop.xlane.xlu0 %2909
    %v2911 = vsel %vm69, %v2907, 0.0
    %2912 = vadd.xlane.f32.xlu0 %v2911
    %v2913 = vpop.xlane.xlu0 %2912
    %v2914 = vmul.f32 %v2910, %v76
    %v2915 = vmul.f32 %v2913, %v76
    %v2916 = vadd.f32 %v2914, 1e-12
    %v2917 = vadd.f32 %v2915, 1e-12
    %v2918 = vrsqrt.pop %v2916
    %v2919 = vrsqrt.pop %v2917
    %v2920 = vmul.f32 %v2904, %v2918
    %v2921 = vmul.f32 %v2905, %v2919
    %v2923 = vlaneseq
    %v2924 = vshrl.u32 %v2923, 7
    %v2925 = vsub.s32 0, %v2924
    %v2926 = vrot.slane %v2893, %v2925
    %v2928 = vmul.f32 %v2920, %v2926
    %v2929 = vmul.f32 %v2921, %v2926
    %v2931 = vlaneseq
    %v2932 = vshrl.u32 %v2931, 7
    %v2933 = vsub.s32 0, %v2932
    %v2934 = vrot.slane %v2895, %v2933
    %v2936 = vadd.f32 %v2928, %v2934
    %v2937 = vadd.f32 %v2929, %v2934
    %s2938 = scalar_lea.vmem %s11, 32
    %v2939 = vld [vmem:[%s2938] sm:$0xff]
    %v2940 = vld [vmem:[%s2938 + $0x8] sm:$0xff]
    %v2941 = vld [vmem:[%s2938 + $0x10] sm:$0xff]
    %v2942 = vld [vmem:[%s2938 + $0x18] sm:$0xff]
    %s2943 = scalar_lea.vmem %s12, 1
    %v2944 = vld [vmem:[%s2943] sm:$0x1]
    %v2946 = vlaneseq
    %v2947 = vshrl.u32 %v2946, 7
    %v2948 = vsub.s32 0, %v2947
    %v2949 = vrot.slane %v2944, %v2948
    %v2952 = vsel %vm69, %v2936, 0
    %v2955 = vsel %vm69, %v2937, 0
    %2957 = vmatprep.subr.mxu0 0.0
    %2958 = vmatpush1.msra.mxu0 %v2939
    %2959 = vmatprep.subr.mxu0 0.0
    %2960 = vmatpush1.msra.mxu0 %v2940
    %2961 = vmatprep.subr.mxu0 0.0
    %2962 = vmatpush1.msra.mxu0 %v2941
    %2963 = vmatprep.subr.mxu0 0.0
    %2964 = vmatpush1.msra.mxu0 %v2942
    %2965 = vmatprep.subr.mxu0 0.0
    %2966 = vmatpush1.msra.mxu0 0.0
    %2967 = vmatprep.subr.mxu0 0.0
    %2968 = vmatpush1.msra.mxu0 0.0
    %2969 = vmatprep.subr.mxu0 0.0
    %2970 = vmatpush1.msra.mxu0 0.0
    %2971 = vmatprep.subr.mxu0 0.0
    %2972 = vmatpush1.msra.mxu0 0.0
    %2973 = vmatprep.subr.mxu0 0.0
    %2974 = vmatpush1.msra.mxu0 0.0
    %2975 = vmatprep.subr.mxu0 0.0
    %2976 = vmatpush1.msra.mxu0 0.0
    %2977 = vmatprep.subr.mxu0 0.0
    %2978 = vmatpush1.msra.mxu0 0.0
    %2979 = vmatprep.subr.mxu0 0.0
    %2980 = vmatpush1.msra.mxu0 0.0
    %2981 = vmatprep.subr.mxu0 0.0
    %2982 = vmatpush1.msra.mxu0 0.0
    %2983 = vmatprep.subr.mxu0 0.0
    %2984 = vmatpush1.msra.mxu0 0.0
    %2985 = vmatprep.subr.mxu0 0.0
    %2986 = vmatpush1.msra.mxu0 0.0
    %2987 = vmatprep.subr.mxu0 0.0
    %2988 = vmatpush1.msra.mxu0 0.0
    %2989 = vmatprep.subr.mxu0 0.0
    %2990 = vmatpush1.msra.mxu0 0.0
    %2991 = vmatprep.subr.mxu0 0.0
    %2992 = vmatpush1.msra.mxu0 0.0
    %2993 = vmatprep.subr.mxu0 0.0
    %2994 = vmatpush1.msra.mxu0 0.0
    %2995 = vmatprep.subr.mxu0 0.0
    %2996 = vmatpush1.msra.mxu0 0.0
    %2997 = vmatprep.subr.mxu0 0.0
    %2998 = vmatpush1.msra.mxu0 0.0
    %2999 = vmatprep.subr.mxu0 0.0
    %3000 = vmatpush1.msra.mxu0 0.0
    %3001 = vmatprep.subr.mxu0 0.0
    %3002 = vmatpush1.msra.mxu0 0.0
    %3003 = vmatprep.subr.mxu0 0.0
    %3004 = vmatpush1.msra.mxu0 0.0
    %3005 = vmatprep.subr.mxu0 0.0
    %3006 = vmatpush1.msra.mxu0 0.0
    %3007 = vmatprep.subr.mxu0 0.0
    %3008 = vmatpush1.msra.mxu0 0.0
    %3009 = vmatprep.subr.mxu0 0.0
    %3010 = vmatpush1.msra.mxu0 0.0
    %3011 = vmatprep.subr.mxu0 0.0
    %3012 = vmatpush1.msra.mxu0 0.0
    %3013 = vmatprep.subr.mxu0 0.0
    %3014 = vmatpush1.msra.mxu0 0.0
    %3015 = vmatprep.subr.mxu0 0.0
    %3016 = vmatpush1.msra.mxu0 0.0
    %3017 = vmatprep.subr.mxu0 0.0
    %3018 = vmatpush1.msra.mxu0 0.0
    %3019 = vmatprep.subr.mxu0 0.0
    %3020 = vmatpush1.msra.mxu0 0.0
    %3021 = vmatprep.mubr.f32.mxu0 0.0
    %3022 = vmatmul.mubr.f32.gmra.mrb[0].mxu0 %v2952
    %v3023 = vpop.f32.mrb[0].mxu0
    %v3024 = vadd.f32 %v2949, %v3023
    %v3025 = vpop.f32.mrb[0].mxu0
    %3026 = vmatprep.mubr.f32.mxu0 0.0
    %3027 = vmatmul.mubr.f32.gmra.mrb[0].mxu0 %v2955
    %v3028 = vpop.f32.mrb[0].mxu0
    %v3029 = vadd.f32 %v2949, %v3028
    %v3030 = vpop.f32.mrb[0].mxu0
    %3031 = vdwg.mxu0
    %v3032 = vmul.f32 %v3024, %v3024
    %v3033 = vmul.f32 %v3029, %v3029
    %v3034 = vmul.f32 %v3024, %v3032
    %v3035 = vmul.f32 %v3029, %v3033
    %v3036 = vmul.f32 %v3034, 0.044715
    %v3037 = vmul.f32 %v3035, 0.044715
    %v3038 = vadd.f32 %v3024, %v3036
    %v3039 = vadd.f32 %v3029, %v3037
    %v3040 = vmul.f32 %v3038, 0.7978846
    %v3041 = vmul.f32 %v3039, 0.7978846
    %v3042 = vtanh.pop %v3040
    %v3043 = vtanh.pop %v3041
    %v3044 = vadd.f32 %v3042, 1.0
    %v3045 = vadd.f32 %v3043, 1.0
    %v3046 = vmul.f32 %v3044, 0.5
    %v3047 = vmul.f32 %v3045, 0.5
    %v3048 = vmul.f32 %v3024, %v3046
    %v3049 = vmul.f32 %v3029, %v3047
    %s3050 = scalar_lea.vmem %s13, 64
    %v3051 = vld [vmem:[%s3050] sm:$0xff]
    %v3052 = vld [vmem:[%s3050 + $0x8] sm:$0xff]
    %v3053 = vld [vmem:[%s3050 + $0x10] sm:$0xff]
    %v3054 = vld [vmem:[%s3050 + $0x18] sm:$0xff]
    %v3055 = vld [vmem:[%s3050 + $0x20] sm:$0xff]
    %v3056 = vld [vmem:[%s3050 + $0x28] sm:$0xff]
    %v3057 = vld [vmem:[%s3050 + $0x30] sm:$0xff]
    %v3058 = vld [vmem:[%s3050 + $0x38] sm:$0xff]
    %s3059 = scalar_lea.vmem %s14, 1
    %v3060 = vld [vmem:[%s3059] sm:$0x1]
    %v3062 = vlaneseq
    %v3063 = vshrl.u32 %v3062, 7
    %v3064 = vsub.s32 0, %v3063
    %v3065 = vrot.slane %v3060, %v3064
    %v3068 = vsel %vm1523, %v3048, 0
    %v3071 = vsel %vm1523, %v3049, 0
    %3073 = vmatprep.subr.mxu0 0.0
    %3074 = vmatpush1.msra.mxu0 %v3051
    %3075 = vmatprep.subr.mxu0 0.0
    %3076 = vmatpush1.msra.mxu0 %v3052
    %3077 = vmatprep.subr.mxu0 0.0
    %3078 = vmatpush1.msra.mxu0 %v3053
    %3079 = vmatprep.subr.mxu0 0.0
    %3080 = vmatpush1.msra.mxu0 %v3054
    %3081 = vmatprep.subr.mxu0 0.0
    %3082 = vmatpush1.msra.mxu0 %v3055
    %3083 = vmatprep.subr.mxu0 0.0
    %3084 = vmatpush1.msra.mxu0 %v3056
    %3085 = vmatprep.subr.mxu0 0.0
    %3086 = vmatpush1.msra.mxu0 %v3057
    %3087 = vmatprep.subr.mxu0 0.0
    %3088 = vmatpush1.msra.mxu0 %v3058
    %3089 = vmatprep.subr.mxu0 0.0
    %3090 = vmatpush1.msra.mxu0 0.0
    %3091 = vmatprep.subr.mxu0 0.0
    %3092 = vmatpush1.msra.mxu0 0.0
    %3093 = vmatprep.subr.mxu0 0.0
    %3094 = vmatpush1.msra.mxu0 0.0
    %3095 = vmatprep.subr.mxu0 0.0
    %3096 = vmatpush1.msra.mxu0 0.0
    %3097 = vmatprep.subr.mxu0 0.0
    %3098 = vmatpush1.msra.mxu0 0.0
    %3099 = vmatprep.subr.mxu0 0.0
    %3100 = vmatpush1.msra.mxu0 0.0
    %3101 = vmatprep.subr.mxu0 0.0
    %3102 = vmatpush1.msra.mxu0 0.0
    %3103 = vmatprep.subr.mxu0 0.0
    %3104 = vmatpush1.msra.mxu0 0.0
    %3105 = vmatprep.subr.mxu0 0.0
    %3106 = vmatpush1.msra.mxu0 0.0
    %3107 = vmatprep.subr.mxu0 0.0
    %3108 = vmatpush1.msra.mxu0 0.0
    %3109 = vmatprep.subr.mxu0 0.0
    %3110 = vmatpush1.msra.mxu0 0.0
    %3111 = vmatprep.subr.mxu0 0.0
    %3112 = vmatpush1.msra.mxu0 0.0
    %3113 = vmatprep.subr.mxu0 0.0
    %3114 = vmatpush1.msra.mxu0 0.0
    %3115 = vmatprep.subr.mxu0 0.0
    %3116 = vmatpush1.msra.mxu0 0.0
    %3117 = vmatprep.subr.mxu0 0.0
    %3118 = vmatpush1.msra.mxu0 0.0
    %3119 = vmatprep.subr.mxu0 0.0
    %3120 = vmatpush1.msra.mxu0 0.0
    %3121 = vmatprep.subr.mxu0 0.0
    %3122 = vmatpush1.msra.mxu0 0.0
    %3123 = vmatprep.subr.mxu0 0.0
    %3124 = vmatpush1.msra.mxu0 0.0
    %3125 = vmatprep.subr.mxu0 0.0
    %3126 = vmatpush1.msra.mxu0 0.0
    %3127 = vmatprep.subr.mxu0 0.0
    %3128 = vmatpush1.msra.mxu0 0.0
    %3129 = vmatprep.subr.mxu0 0.0
    %3130 = vmatpush1.msra.mxu0 0.0
    %3131 = vmatprep.subr.mxu0 0.0
    %3132 = vmatpush1.msra.mxu0 0.0
    %3133 = vmatprep.subr.mxu0 0.0
    %3134 = vmatpush1.msra.mxu0 0.0
    %3135 = vmatprep.subr.mxu0 0.0
    %3136 = vmatpush1.msra.mxu0 0.0
    %3137 = vmatprep.mubr.f32.mxu0 0.0
    %3138 = vmatmul.mubr.f32.gmra.mrb[0].mxu0 %v3068
    %v3139 = vpop.f32.mrb[0].mxu0
    %v3140 = vadd.f32 %v3065, %v3139
    %v3141 = vpop.f32.mrb[0].mxu0
    %3142 = vmatprep.mubr.f32.mxu0 0.0
    %3143 = vmatmul.mubr.f32.gmra.mrb[0].mxu0 %v3071
    %v3144 = vpop.f32.mrb[0].mxu0
    %v3145 = vadd.f32 %v3065, %v3144
    %v3146 = vpop.f32.mrb[0].mxu0
    %3147 = vdwg.mxu0
    %v3148 = vadd.f32 %v2936, %v3140
    %v3149 = vadd.f32 %v2937, %v3145
    %s3150 = scalar_lea.vmem %s15, 1
    %v3151 = vld [vmem:[%s3150] sm:$0x1]
    %s3152 = scalar_lea.vmem %s16, 1
    %v3153 = vld [vmem:[%s3152] sm:$0x1]
    %v3154 = vsel %vm69, %v3148, 0.0
    %3155 = vadd.xlane.f32.xlu0 %v3154
    %v3156 = vpop.xlane.xlu0 %3155
    %v3157 = vsel %vm69, %v3149, 0.0
    %3158 = vadd.xlane.f32.xlu0 %v3157
    %v3159 = vpop.xlane.xlu0 %3158
    %v3160 = vmul.f32 %v3156, %v76
    %v3161 = vmul.f32 %v3159, %v76
    %v3162 = vsub.f32 %v3148, %v3160
    %v3163 = vsub.f32 %v3149, %v3161
    %v3164 = vmul.f32 %v3162, %v3162
    %v3165 = vmul.f32 %v3163, %v3163
    %v3166 = vsel %vm69, %v3164, 0.0
    %3167 = vadd.xlane.f32.xlu0 %v3166
    %v3168 = vpop.xlane.xlu0 %3167
    %v3169 = vsel %vm69, %v3165, 0.0
    %3170 = vadd.xlane.f32.xlu0 %v3169
    %v3171 = vpop.xlane.xlu0 %3170
    %v3172 = vmul.f32 %v3168, %v76
    %v3173 = vmul.f32 %v3171, %v76
    %v3174 = vadd.f32 %v3172, 1e-12
    %v3175 = vadd.f32 %v3173, 1e-12
    %v3176 = vrsqrt.pop %v3174
    %v3177 = vrsqrt.pop %v3175
    %v3178 = vmul.f32 %v3162, %v3176
    %v3179 = vmul.f32 %v3163, %v3177
    %v3181 = vlaneseq
    %v3182 = vshrl.u32 %v3181, 7
    %v3183 = vsub.s32 0, %v3182
    %v3184 = vrot.slane %v3151, %v3183
    %v3186 = vmul.f32 %v3178, %v3184
    %v3187 = vmul.f32 %v3179, %v3184
    %v3189 = vlaneseq
    %v3190 = vshrl.u32 %v3189, 7
    %v3191 = vsub.s32 0, %v3190
    %v3192 = vrot.slane %v3153, %v3191
    %v3194 = vadd.f32 %v3186, %v3192
    %v3195 = vadd.f32 %v3187, %v3192
    %v3196 = vld [vmem:[%s17] sm:$0xff]
    %v3197 = vld [vmem:[%s17 + $0x8] sm:$0xff]
    %v3198 = vld [vmem:[%s17 + $0x10] sm:$0xff]
    %v3199 = vld [vmem:[%s17 + $0x18] sm:$0xff]
    %v3200 = vld [vmem:[%s18] sm:$0x1]
    %v3202 = vlaneseq
    %v3203 = vshrl.u32 %v3202, 7
    %v3204 = vsub.s32 0, %v3203
    %v3205 = vrot.slane %v3200, %v3204
    %v3208 = vsel %vm69, %v3194, 0
    %v3211 = vsel %vm69, %v3195, 0
    %3213 = vmatprep.subr.mxu0 0.0
    %3214 = vmatpush1.msra.mxu0 %v3196
    %3215 = vmatprep.subr.mxu0 0.0
    %3216 = vmatpush1.msra.mxu0 %v3197
    %3217 = vmatprep.subr.mxu0 0.0
    %3218 = vmatpush1.msra.mxu0 %v3198
    %3219 = vmatprep.subr.mxu0 0.0
    %3220 = vmatpush1.msra.mxu0 %v3199
    %3221 = vmatprep.subr.mxu0 0.0
    %3222 = vmatpush1.msra.mxu0 0.0
    %3223 = vmatprep.subr.mxu0 0.0
    %3224 = vmatpush1.msra.mxu0 0.0
    %3225 = vmatprep.subr.mxu0 0.0
    %3226 = vmatpush1.msra.mxu0 0.0
    %3227 = vmatprep.subr.mxu0 0.0
    %3228 = vmatpush1.msra.mxu0 0.0
    %3229 = vmatprep.subr.mxu0 0.0
    %3230 = vmatpush1.msra.mxu0 0.0
    %3231 = vmatprep.subr.mxu0 0.0
    %3232 = vmatpush1.msra.mxu0 0.0
    %3233 = vmatprep.subr.mxu0 0.0
    %3234 = vmatpush1.msra.mxu0 0.0
    %3235 = vmatprep.subr.mxu0 0.0
    %3236 = vmatpush1.msra.mxu0 0.0
    %3237 = vmatprep.subr.mxu0 0.0
    %3238 = vmatpush1.msra.mxu0 0.0
    %3239 = vmatprep.subr.mxu0 0.0
    %3240 = vmatpush1.msra.mxu0 0.0
    %3241 = vmatprep.subr.mxu0 0.0
    %3242 = vmatpush1.msra.mxu0 0.0
    %3243 = vmatprep.subr.mxu0 0.0
    %3244 = vmatpush1.msra.mxu0 0.0
    %3245 = vmatprep.subr.mxu0 0.0
    %3246 = vmatpush1.msra.mxu0 0.0
    %3247 = vmatprep.subr.mxu0 0.0
    %3248 = vmatpush1.msra.mxu0 0.0
    %3249 = vmatprep.subr.mxu0 0.0
    %3250 = vmatpush1.msra.mxu0 0.0
    %3251 = vmatprep.subr.mxu0 0.0
    %3252 = vmatpush1.msra.mxu0 0.0
    %3253 = vmatprep.subr.mxu0 0.0
    %3254 = vmatpush1.msra.mxu0 0.0
    %3255 = vmatprep.subr.mxu0 0.0
    %3256 = vmatpush1.msra.mxu0 0.0
    %3257 = vmatprep.subr.mxu0 0.0
    %3258 = vmatpush1.msra.mxu0 0.0
    %3259 = vmatprep.subr.mxu0 0.0
    %3260 = vmatpush1.msra.mxu0 0.0
    %3261 = vmatprep.subr.mxu0 0.0
    %3262 = vmatpush1.msra.mxu0 0.0
    %3263 = vmatprep.subr.mxu0 0.0
    %3264 = vmatpush1.msra.mxu0 0.0
    %3265 = vmatprep.subr.mxu0 0.0
    %3266 = vmatpush1.msra.mxu0 0.0
    %3267 = vmatprep.subr.mxu0 0.0
    %3268 = vmatpush1.msra.mxu0 0.0
    %3269 = vmatprep.subr.mxu0 0.0
    %3270 = vmatpush1.msra.mxu0 0.0
    %3271 = vmatprep.subr.mxu0 0.0
    %3272 = vmatpush1.msra.mxu0 0.0
    %3273 = vmatprep.subr.mxu0 0.0
    %3274 = vmatpush1.msra.mxu0 0.0
    %3275 = vmatprep.subr.mxu0 0.0
    %3276 = vmatpush1.msra.mxu0 0.0
    %3277 = vmatprep.mubr.f32.mxu0 0.0
    %3278 = vmatmul.mubr.f32.gmra.mrb[0].mxu0 %v3208
    %v3279 = vpop.f32.mrb[0].mxu0
    %v3280 = vadd.f32 %v3205, %v3279
    %v3281 = vpop.f32.mrb[0].mxu0
    %3282 = vmatprep.mubr.f32.mxu0 0.0
    %3283 = vmatmul.mubr.f32.gmra.mrb[0].mxu0 %v3211
    %v3284 = vpop.f32.mrb[0].mxu0
    %v3285 = vadd.f32 %v3205, %v3284
    %v3286 = vpop.f32.mrb[0].mxu0
    %3287 = vdwg.mxu0
    %vm3288 = vcmask 31744
    %3289 = vst.msk [vmem:[%s19] sm:$0xff] %vm3288, %v3280
    %3290 = vst.msk [vmem:[%s19 + $0x8] sm:$0xff] %vm3288, %v3285
    %v3291 = vsel %vm3288, %v3280, -inf
    %3292 = vmax.xlane.f32.xlu0 %v3291
    %v3293 = vpop.xlane.xlu0 %3292
    %v3294 = vsel %vm3288, %v3285, -inf
    %3295 = vmax.xlane.f32.xlu0 %v3294
    %v3296 = vpop.xlane.xlu0 %3295
    %v3297 = vsub.f32 %v3280, %v3293
    %v3298 = vsub.f32 %v3285, %v3296
    %v3299 = vmul.f32 %v3297, 1.442695
    %v3300 = vpow.pop %v3299
    %v3301 = vmul.f32 %v3298, 1.442695
    %v3302 = vpow.pop %v3301
    %v3303 = vsel %vm3288, %v3300, 0.0
    %3304 = vadd.xlane.f32.xlu0 %v3303
    %v3305 = vpop.xlane.xlu0 %3304
    %v3306 = vsel %vm3288, %v3302, 0.0
    %3307 = vadd.xlane.f32.xlu0 %v3306
    %v3308 = vpop.xlane.xlu0 %3307
    %v3309 = vlog2.pop %v3305
    %v3310 = vmul.f32 %v3309, 0.6931472
    %v3311 = vlog2.pop %v3308
    %v3312 = vmul.f32 %v3311, 0.6931472
    %v3313 = vsub.f32 %v3297, %v3310
    %v3314 = vsub.f32 %v3298, %v3312
    %v3315 = vld [vmem:[%s2] sm:$0xff]
    %v3316 = vld [vmem:[%s2 + $0x8] sm:$0xff]
    %v3317 = vmul.f32 %v3313, %v3315
    %v3318 = vmul.f32 %v3314, %v3316
    %v3319 = vsel %vm3288, %v3317, 0.0
    %3320 = vadd.xlane.f32.xlu0 %v3319
    %v3321 = vpop.xlane.xlu0 %3320
    %v3322 = vsel %vm3288, %v3318, 0.0
    %3323 = vadd.xlane.f32.xlu0 %v3322
    %v3324 = vpop.xlane.xlu0 %3323
    %v3325 = vadd.f32 %v3321, %v3324
    %v3326 = vrot.slane %v3325, 4
    %v3327 = vadd.f32 %v3325, %v3326
    %v3328 = vrot.slane %v3327, 2
    %v3329 = vadd.f32 %v3327, %v3328
    %v3330 = vrot.slane %v3329, 1
    %v3331 = vadd.f32 %v3329, %v3330
    %v3332 = vmul.f32 %v3331, 0.0625
    %v3333 = vsub.f32 0.0, %v3332
    %vm3334 = vcmask 0
    %3335 = vst.msk [vmem:[#allocation2] sm:$0x1] %vm3334, %v3333
    // Predicated region
    $region78: #{bert_for_cut_forward.1} parent=1 // pred_check
      _
    $region79: #{bert_for_cut_forward.1} parent=1 // pred_check_branch
      %3337 = sbr.rel (0) target = $region81
    $region80: #{bert_for_cut_forward.1} parent=1 // pred_region
      _
    $region81: #{bert_for_cut_forward.1} parent=1 // pred_fallthru
      _
    // Predicated region
    $region82: #{bert_for_cut_forward.1} parent=1 // pred_check
      _
    $region83: #{bert_for_cut_forward.1} parent=1 // pred_check_branch
      %3339 = sbr.rel (0) target = $region85
    $region84: #{bert_for_cut_forward.1} parent=1 // pred_region
      %s3341 = ssub.s32 16, 16
      %3342 = vsyncadd [#allocation3], %s3341
      %s3344 = sshll.u32 [#allocation2], 4
      %s3345 = int_to_ptr.vmem [resolvable:$true] %s3344
      %3347 = dma.vmem_to_hbm [thread:$0]  %s3345, 16, %s20, [#allocation3]
    $region85: #{bert_for_cut_forward.1} parent=1 // pred_fallthru
      _
    // Predicated region
    $region86: #{bert_for_cut_forward.1} parent=1 // pred_check
      _
    $region87: #{bert_for_cut_forward.1} parent=1 // pred_check_branch
      %3349 = sbr.rel (0) target = $region89
    $region88: #{bert_for_cut_forward.1} parent=1 // pred_region
      _
    $region89: #{bert_for_cut_forward.1} parent=1 // pred_fallthru
      _
    // Predicated region
    $region90: #{bert_for_cut_forward.1} parent=1 // pred_check
      _
    $region91: #{bert_for_cut_forward.1} parent=1 // pred_check_branch
      %3351 = sbr.rel (0) target = $region93
    $region92: #{bert_for_cut_forward.1} parent=1 // pred_region
      %3352 = dma.done [#allocation3], 16
    $region93: #{bert_for_cut_forward.1} parent=1 // pred_fallthru
      _
    %3353 = vsyncpa [#allocation3], 1

</llo_original>
